<compile_context>
chip_gen: v7x
topology: tpu7x:2x2x1
jax: 0.10.0
libtpu: 0.0.40
codegen_flags: <defaults>
</compile_context>

<pallas_src>
import functools

import jax
import jax.numpy as jnp
from jax import lax
from jax.experimental import pallas as pl
from jax.experimental.pallas import tpu as pltpu

EPS = 1e-5  # torch BatchNorm2d default


def _round_up(v, m):
    return -(-v // m) * m


def _pick_pixel_tile(hw, target):
    """Largest multiple-of-128 divisor of hw that is <= target (else full hw)."""
    # TODO(synk): if H*W is not a multiple of 128 we fall back to a full-row
    # tile (legal full-dim block); for very large non-aligned H*W a 4D (H-tiled)
    # layout would be needed to bound VMEM.
    if hw % 128 != 0 or target >= hw:
        return hw
    t = max(128, (target // 128) * 128)
    while hw % t != 0:
        t -= 128
    return t


def _default_vmem_limit():
    try:
        cap = int(pltpu.get_tpu_info().vmem_capacity_bytes)
    except Exception:
        cap = 64 * 1024 * 1024
    return max(32 * 1024 * 1024, min(cap * 3 // 4, 100 * 1024 * 1024))


# ----------------------------- kernel bodies ---------------------------------


def _bn_fold(sum_ref, ssq_ref, g_ref, b_ref, inv_m):
    """Per-channel BN(train) scale/shift from per-batch partial sums.

    sum_ref/ssq_ref: (N, Co, 1) f32 partials; g_ref/b_ref: (Co, 1) f32.
    Tiny (few hundred flops, rsqrt on EUP) -> recomputed every grid step, which
    is megacore-safe (no scratch init race on 'parallel' axes).
    """
    total = jnp.sum(sum_ref[...], axis=0)       # (Co, 1)
    total_sq = jnp.sum(ssq_ref[...], axis=0)    # (Co, 1)
    mean = total * inv_m
    # Note: E[x^2]-E[x]^2 in f32; clamp guards tiny negative round-off.
    var = jnp.maximum(total_sq * inv_m - mean * mean, 0.0)
    scale = g_ref[...] * lax.rsqrt(var + EPS)
    shift = b_ref[...] - mean * scale
    return scale, shift


def _stats1_kernel(cf_ref, w1_ref, sum_ref, ssq_ref):
    """Pass A: y1 = W1 @ cf ; accumulate per-channel sum / sum-of-squares."""
    @pl.when(pl.program_id(1) == 0)
    def _():
        sum_ref[...] = jnp.zeros_like(sum_ref)
        ssq_ref[...] = jnp.zeros_like(ssq_ref)

    cf_t = cf_ref[0].astype(jnp.bfloat16)                       # (Ci, tp)
    y1 = jnp.dot(w1_ref[...], cf_t, preferred_element_type=jnp.float32)
    sum_ref[0] += jnp.sum(y1, axis=1, keepdims=True)
    ssq_ref[0] += jnp.sum(y1 * y1, axis=1, keepdims=True)


def _stats2_kernel(cf_ref, w1_ref, g1_ref, b1_ref, sum1_ref, ssq1_ref, w2_ref,
                   sum_ref, ssq_ref, *, inv_m):
    """Pass B: y2 = W2 @ relu(bn1(W1 @ cf)); accumulate per-channel sum / ssq."""
    @pl.when(pl.program_id(1) == 0)
    def _():
        sum_ref[...] = jnp.zeros_like(sum_ref)
        ssq_ref[...] = jnp.zeros_like(ssq_ref)

    s1, t1 = _bn_fold(sum1_ref, ssq1_ref, g1_ref, b1_ref, inv_m)
    cf_t = cf_ref[0].astype(jnp.bfloat16)                       # (Ci, tp)
    y1 = jnp.dot(w1_ref[...], cf_t, preferred_element_type=jnp.float32)
    h1 = jnp.maximum(y1 * s1 + t1, 0.0)
    y2 = jnp.dot(w2_ref[...], h1.astype(jnp.bfloat16),
                 preferred_element_type=jnp.float32)
    sum_ref[0] += jnp.sum(y2, axis=1, keepdims=True)
    ssq_ref[0] += jnp.sum(y2 * y2, axis=1, keepdims=True)


def _final_kernel(cf_ref, x_ref, w1_ref, g1_ref, b1_ref, sum1_ref, ssq1_ref,
                  w2_ref, g2_ref, b2_ref, sum2_ref, ssq2_ref,
                  w3_ref, b3_ref, w4_ref, b4_ref, o_ref, *, inv_m, co):
    """Pass C: fused mlp (conv-bn-relu x2) -> excite (conv+relu, conv+sigmoid) -> x*gate."""
    s1, t1 = _bn_fold(sum1_ref, ssq1_ref, g1_ref, b1_ref, inv_m)
    s2, t2 = _bn_fold(sum2_ref, ssq2_ref, g2_ref, b2_ref, inv_m)

    cf_t = cf_ref[0].astype(jnp.bfloat16)                       # (Ci, tp)
    y1 = jnp.dot(w1_ref[...], cf_t, preferred_element_type=jnp.float32)
    h1 = jnp.maximum(y1 * s1 + t1, 0.0)
    y2 = jnp.dot(w2_ref[...], h1.astype(jnp.bfloat16),
                 preferred_element_type=jnp.float32)
    h2 = jnp.maximum(y2 * s2 + t2, 0.0)
    e1 = jnp.maximum(
        jnp.dot(w3_ref[...], h2.astype(jnp.bfloat16),
                preferred_element_type=jnp.float32) + b3_ref[...], 0.0)
    e2 = jnp.dot(w4_ref[...], e1.astype(jnp.bfloat16),
                 preferred_element_type=jnp.float32) + b4_ref[...]
    # sigmoid: exp + approx reciprocal both on the EUP slot (free next to MXU/VPU)
    gate = pl.reciprocal(1.0 + jnp.exp(-e2), approx=True)       # (Co8, tp)

    x_t = x_ref[0].astype(jnp.float32)                          # (Co, tp)
    o_ref[0] = (x_t * gate[:co, :]).astype(o_ref.dtype)


# ----------------------------- wrapper ---------------------------------------


def camera_aware_forward(x, camera_features, w1, g1, b1, w2, g2, b2, w3, b3c,
                         w4, b4c, *, pixel_tile=1024):
    """x: (N, Cout, H, W); camera_features: (N, Cin, H, W). Returns x * excite(mlp(cf))."""
    n, co, h, w_ = x.shape
    cin = camera_features.shape[1]
    assert camera_features.shape == (n, cin, h, w_)
    hw = h * w_
    co8 = _round_up(co, 8)            # sublane-pad the compute chain only (weights)
    inv_m = 1.0 / float(n * hw)
    tp = _pick_pixel_tile(hw, pixel_tile)
    n_ptiles = hw // tp
    vmem_limit = _default_vmem_limit()

    # --- free reshapes (no HBM copies): NCHW -> (N, C, H*W), channels on sublanes
    cf3 = camera_features.reshape(n, cin, hw)
    x3 = x.reshape(n, co, hw)

    # --- tiny parameter repacks: torch (O, I, 1, 1) -> bf16 (Co8, Ipad) matrices
    def wmat(wz, i_pad):
        o, i = wz.shape[0], wz.shape[1]
        mtx = wz.reshape(o, i).astype(jnp.bfloat16)
        return jnp.pad(mtx, ((0, co8 - o), (0, i_pad - i)))

    def cvec(v):
        return jnp.pad(v.astype(jnp.float32), (0, co8 - v.shape[0])).reshape(co8, 1)

    w1m = wmat(w1, cin)
    w2m, w3m, w4m = wmat(w2, co8), wmat(w3, co8), wmat(w4, co8)
    g1v, b1v, g2v, b2v = cvec(g1), cvec(b1), cvec(g2), cvec(b2)
    b3v, b4v = cvec(b3c), cvec(b4c)

    # --- BlockSpecs
    cf_spec = pl.BlockSpec((1, cin, tp), lambda nn, pp: (nn, 0, pp))
    x_spec = pl.BlockSpec((1, co, tp), lambda nn, pp: (nn, 0, pp))
    out_spec = pl.BlockSpec((1, co, tp), lambda nn, pp: (nn, 0, pp))
    acc_spec = pl.BlockSpec((1, co8, 1), lambda nn, pp: (nn, 0, 0))   # resident per batch row
    vspec = pl.BlockSpec((co8, 1), lambda nn, pp: (0, 0))
    sums_spec = pl.BlockSpec((n, co8, 1), lambda nn, pp: (0, 0, 0))

    def wspec(rows, cols):
        return pl.BlockSpec((rows, cols), lambda nn, pp: (0, 0))

    acc_shape = jax.ShapeDtypeStruct((n, co8, 1), jnp.float32)
    grid = (n, n_ptiles)

    stats_params = pltpu.CompilerParams(
        dimension_semantics=("parallel", "arbitrary"),   # batch axis -> megacore on v7x
        vmem_limit_bytes=vmem_limit)
    final_params = pltpu.CompilerParams(
        dimension_semantics=("parallel", "parallel"),
        vmem_limit_bytes=vmem_limit)

    # ---- Pass A: BN1 batch statistics of conv1(cf) ----
    sum1, ssq1 = pl.pallas_call(
        _stats1_kernel,
        grid=grid,
        in_specs=[cf_spec, wspec(co8, cin)],
        out_specs=(acc_spec, acc_spec),
        out_shape=(acc_shape, acc_shape),
        compiler_params=stats_params,
    )(cf3, w1m)

    # ---- Pass B: BN2 batch statistics of conv2(relu(bn1(conv1(cf)))) ----
    sum2, ssq2 = pl.pallas_call(
        functools.partial(_stats2_kernel, inv_m=inv_m),
        grid=grid,
        in_specs=[cf_spec, wspec(co8, cin), vspec, vspec, sums_spec, sums_spec,
                  wspec(co8, co8)],
        out_specs=(acc_spec, acc_spec),
        out_shape=(acc_shape, acc_shape),
        compiler_params=stats_params,
    )(cf3, w1m, g1v, b1v, sum1, ssq1, w2m)

    # ---- Pass C: fused mlp + excite + sigmoid gating; output aliased onto x ----
    out3 = pl.pallas_call(
        functools.partial(_final_kernel, inv_m=inv_m, co=co),
        grid=grid,
        in_specs=[cf_spec, x_spec,
                  wspec(co8, cin), vspec, vspec, sums_spec, sums_spec,
                  wspec(co8, co8), vspec, vspec, sums_spec, sums_spec,
                  wspec(co8, co8), vspec,
                  wspec(co8, co8), vspec],
        out_specs=out_spec,
        out_shape=jax.ShapeDtypeStruct((n, co, hw), x.dtype),
        input_output_aliases={1: 0},     # out reuses x's buffer when donated
        compiler_params=final_params,
    )(cf3, x3, w1m, g1v, b1v, sum1, ssq1, w2m, g2v, b2v, sum2, ssq2,
      w3m, b3v, w4m, b4v)

    return out3.reshape(n, co, h, w_)    # free reshape back to NCHW


# ----------------------------- reference -------------------------------------


def camera_aware_reference(x, cf, w1, g1, b1, w2, g2, b2, w3, b3c, w4, b4c,
                           matmul_dtype=jnp.float32):
    """Pure-JAX NCHW reference mirroring the torch forward in training mode.

    With matmul_dtype=bfloat16 it mirrors the kernel's bf16-operand / f32-accum
    matmuls for a tight parity check."""
    def conv1x1(z, wz, bias=None):
        y = jnp.einsum("oi,nihw->nohw",
                       wz[:, :, 0, 0].astype(matmul_dtype),
                       z.astype(matmul_dtype),
                       preferred_element_type=jnp.float32)
        if bias is not None:
            y = y + bias.reshape(1, -1, 1, 1)
        return y

    def bn(y, g, b):
        mean = jnp.mean(y, axis=(0, 2, 3), keepdims=True)
        var = jnp.mean(jnp.square(y - mean), axis=(0, 2, 3), keepdims=True)
        return (y - mean) * lax.rsqrt(var + EPS) * g.reshape(1, -1, 1, 1) \
            + b.reshape(1, -1, 1, 1)

    hdn = jax.nn.relu(bn(conv1x1(cf, w1), g1, b1))
    hdn = jax.nn.relu(bn(conv1x1(hdn, w2), g2, b2))
    e = jax.nn.relu(conv1x1(hdn, w3, b3c))
    gate = jax.nn.sigmoid(conv1x1(e, w4, b4c))
    return x * gate


if __name__ == "__main__":
    # Small shapes consistent with CameraAware: a handful of camera-parameter
    # channels in, a moderate feature width out.
    N, CIN, COUT, H, W = 2, 16, 32, 16, 16

    key = jax.random.PRNGKey(0)
    ks = jax.random.split(key, 12)

    x = jax.random.normal(ks[0], (N, COUT, H, W), dtype=jnp.float32)
    cf = jax.random.normal(ks[1], (N, CIN, H, W), dtype=jnp.float32)
    w1 = 0.3 * jax.random.normal(ks[2], (COUT, CIN, 1, 1), dtype=jnp.float32)
    g1 = 1.0 + 0.1 * jax.random.normal(ks[3], (COUT,), dtype=jnp.float32)
    b1 = 0.1 * jax.random.normal(ks[4], (COUT,), dtype=jnp.float32)
    w2 = 0.3 * jax.random.normal(ks[5], (COUT, COUT, 1, 1), dtype=jnp.float32)
    g2 = 1.0 + 0.1 * jax.random.normal(ks[6], (COUT,), dtype=jnp.float32)
    b2 = 0.1 * jax.random.normal(ks[7], (COUT,), dtype=jnp.float32)
    w3 = 0.3 * jax.random.normal(ks[8], (COUT, COUT, 1, 1), dtype=jnp.float32)
    b3c = 0.1 * jax.random.normal(ks[9], (COUT,), dtype=jnp.float32)
    w4 = 0.3 * jax.random.normal(ks[10], (COUT, COUT, 1, 1), dtype=jnp.float32)
    b4c = 0.1 * jax.random.normal(ks[11], (COUT,), dtype=jnp.float32)

    # pixel_tile=128 at this toy size -> 2 pixel tiles per image, exercising the
    # resident-accumulator path; keep the default (1024) for real shapes.
    fwd = jax.jit(functools.partial(camera_aware_forward, pixel_tile=128))
    out = jax.block_until_ready(
        fwd(x, cf, w1, g1, b1, w2, g2, b2, w3, b3c, w4, b4c))

    ref_bf16 = camera_aware_reference(x, cf, w1, g1, b1, w2, g2, b2, w3, b3c,
                                      w4, b4c, matmul_dtype=jnp.bfloat16)
    ref_f32 = camera_aware_reference(x, cf, w1, g1, b1, w2, g2, b2, w3, b3c,
                                     w4, b4c, matmul_dtype=jnp.float32)

    assert out.shape == x.shape and out.dtype == x.dtype
    err_bf16 = float(jnp.max(jnp.abs(out - ref_bf16)))
    err_f32 = float(jnp.max(jnp.abs(out - ref_f32)))
    assert jnp.allclose(out, ref_bf16, atol=2e-2, rtol=2e-2), (err_bf16, err_f32)

    print("KERNEL_OK")
</pallas_src>

<mosaic_0001>
module attributes {stable_mosaic.version = 11 : i64} {
  func.func @_stats1_kernel(%arg0: i32, %arg1: i32, %arg2: memref<1x16x128xf32, #tpu.memory_space<vmem>>, %arg3: memref<32x16xbf16, #tpu.memory_space<vmem>>, %arg4: memref<1x32x1xf32, #tpu.memory_space<vmem>>, %arg5: memref<1x32x1xf32, #tpu.memory_space<vmem>>) attributes {dimension_semantics = [#tpu.dimension_semantics<parallel>, #tpu.dimension_semantics<arbitrary>], iteration_bounds = array<i64: 2, 2>, scalar_prefetch = 0 : i64, scratch_operands = 0 : i64, tpu.core_type = #tpu.core_type<tc>, window_params = [{transform_indices = @transform_0, window_bounds = array<i64: 1, 16, 128>}, {pipeline_mode = #tpu.pipeline_mode<synchronous>, transform_indices = @transform_1, window_bounds = array<i64: 32, 16>}, {transform_indices = @transform_2, window_bounds = array<i64: 1, 32, 1>}, {transform_indices = @transform_3, window_bounds = array<i64: 1, 32, 1>}]} {
    %c0_i32 = arith.constant 0 : i32
    %0 = arith.cmpi eq, %arg1, %c0_i32 : i32
    %1 = arith.extui %0 : i1 to i32
    %c0_i32_0 = arith.constant 0 : i32
    %2 = arith.cmpi ne, %1, %c0_i32_0 : i32
    scf.if %2 {
      %cst_19 = arith.constant 0.000000e+00 : f32
      %25 = vector.broadcast %cst_19 : f32 to vector<1x32x1xf32>
      %c0_20 = arith.constant 0 : index
      %c0_21 = arith.constant 0 : index
      %c0_22 = arith.constant 0 : index
      %26 = vector.load %arg4[%c0_20, %c0_21, %c0_22] : memref<1x32x1xf32, #tpu.memory_space<vmem>>, vector<1x32x1xf32>
      tpu.vector_store %arg4[%c0_20, %c0_21, %c0_22], %25 {strides = array<i32>} : memref<1x32x1xf32, #tpu.memory_space<vmem>>, vector<1x32x1xf32>,
      %cst_23 = arith.constant 0.000000e+00 : f32
      %27 = vector.broadcast %cst_23 : f32 to vector<1x32x1xf32>
      %c0_24 = arith.constant 0 : index
      %c0_25 = arith.constant 0 : index
      %c0_26 = arith.constant 0 : index
      %28 = vector.load %arg5[%c0_24, %c0_25, %c0_26] : memref<1x32x1xf32, #tpu.memory_space<vmem>>, vector<1x32x1xf32>
      tpu.vector_store %arg5[%c0_24, %c0_25, %c0_26], %27 {strides = array<i32>} : memref<1x32x1xf32, #tpu.memory_space<vmem>>, vector<1x32x1xf32>,
    } else {
    }
    %c0 = arith.constant 0 : index
    %c0_1 = arith.constant 0 : index
    %c0_2 = arith.constant 0 : index
    %3 = vector.load %arg2[%c0, %c0_1, %c0_2] : memref<1x16x128xf32, #tpu.memory_space<vmem>>, vector<1x16x128xf32>
    %4 = vector.shape_cast %3 : vector<1x16x128xf32> to vector<16x128xf32>
    %5 = arith.truncf %4 : vector<16x128xf32> to vector<16x128xbf16>
    %c0_3 = arith.constant 0 : index
    %c0_4 = arith.constant 0 : index
    %6 = vector.load %arg3[%c0_3, %c0_4] : memref<32x16xbf16, #tpu.memory_space<vmem>>, vector<32x16xbf16>
    %cst = arith.constant dense<0.000000e+00> : vector<32x128xf32>
    %7 = tpu.matmul %6, %5, %cst {dimension_numbers = #tpu.dot_dimension_numbers<[1], [0], [0], [1], [0, 0, 1, 1], [], []>} : vector<32x16xbf16>, vector<16x128xbf16>, vector<32x128xf32> -> vector<32x128xf32>
    %c0_5 = arith.constant 0 : index
    %c0_6 = arith.constant 0 : index
    %c0_7 = arith.constant 0 : index
    %8 = vector.load %arg4[%c0_5, %c0_6, %c0_7] : memref<1x32x1xf32, #tpu.memory_space<vmem>>, vector<1x32x1xf32>
    %9 = vector.shape_cast %8 : vector<1x32x1xf32> to vector<32x1xf32>
    %cst_8 = arith.constant dense<0.000000e+00> : vector<32xf32>
    %10 = vector.multi_reduction <add>, %7, %cst_8 [1] : vector<32x128xf32> to vector<32xf32>
    %11 = vector.shape_cast %10 : vector<32xf32> to vector<32x1xf32>
    %12 = arith.addf %9, %11 : vector<32x1xf32>
    %c0_9 = arith.constant 0 : index
    %c0_10 = arith.constant 0 : index
    %c0_11 = arith.constant 0 : index
    %13 = vector.load %arg4[%c0_9, %c0_10, %c0_11] : memref<1x32x1xf32, #tpu.memory_space<vmem>>, vector<1x32x1xf32>
    %14 = vector.shape_cast %13 : vector<1x32x1xf32> to vector<32x1xf32>
    %15 = vector.shape_cast %12 : vector<32x1xf32> to vector<1x32x1xf32>
    tpu.vector_store %arg4[%c0_9, %c0_10, %c0_11], %15 {strides = array<i32>} : memref<1x32x1xf32, #tpu.memory_space<vmem>>, vector<1x32x1xf32>,
    %c0_12 = arith.constant 0 : index
    %c0_13 = arith.constant 0 : index
    %c0_14 = arith.constant 0 : index
    %16 = vector.load %arg5[%c0_12, %c0_13, %c0_14] : memref<1x32x1xf32, #tpu.memory_space<vmem>>, vector<1x32x1xf32>
    %17 = vector.shape_cast %16 : vector<1x32x1xf32> to vector<32x1xf32>
    %18 = arith.mulf %7, %7 : vector<32x128xf32>
    %cst_15 = arith.constant dense<0.000000e+00> : vector<32xf32>
    %19 = vector.multi_reduction <add>, %18, %cst_15 [1] : vector<32x128xf32> to vector<32xf32>
    %20 = vector.shape_cast %19 : vector<32xf32> to vector<32x1xf32>
    %21 = arith.addf %17, %20 : vector<32x1xf32>
    %c0_16 = arith.constant 0 : index
    %c0_17 = arith.constant 0 : index
    %c0_18 = arith.constant 0 : index
    %22 = vector.load %arg5[%c0_16, %c0_17, %c0_18] : memref<1x32x1xf32, #tpu.memory_space<vmem>>, vector<1x32x1xf32>
    %23 = vector.shape_cast %22 : vector<1x32x1xf32> to vector<32x1xf32>
    %24 = vector.shape_cast %21 : vector<32x1xf32> to vector<1x32x1xf32>
    tpu.vector_store %arg5[%c0_16, %c0_17, %c0_18], %24 {strides = array<i32>} : memref<1x32x1xf32, #tpu.memory_space<vmem>>, vector<1x32x1xf32>,
    return
  }
  func.func @transform_0(%arg0: i32, %arg1: i32) -> (i32, i32, i32) {
    %c0_i32 = arith.constant 0 : i32
    %c0_i32_0 = arith.constant 0 : i32
    return %arg0, %c0_i32, %arg1 : i32, i32, i32
  }
  func.func @transform_1(%arg0: i32, %arg1: i32) -> (i32, i32) {
    %c0_i32 = arith.constant 0 : i32
    %c0_i32_0 = arith.constant 0 : i32
    %c0_i32_1 = arith.constant 0 : i32
    return %c0_i32, %c0_i32_0 : i32, i32
  }
  func.func @transform_2(%arg0: i32, %arg1: i32) -> (i32, i32, i32) {
    %c0_i32 = arith.constant 0 : i32
    %c0_i32_0 = arith.constant 0 : i32
    %c0_i32_1 = arith.constant 0 : i32
    return %arg0, %c0_i32, %c0_i32_0 : i32, i32, i32
  }
  func.func @transform_3(%arg0: i32, %arg1: i32) -> (i32, i32, i32) {
    %c0_i32 = arith.constant 0 : i32
    %c0_i32_0 = arith.constant 0 : i32
    %c0_i32_1 = arith.constant 0 : i32
    return %arg0, %c0_i32, %c0_i32_0 : i32, i32, i32
  }
}

module attributes {stable_mosaic.version = 11 : i64} {
  func.func @_stats2_kernel(%arg0: i32, %arg1: i32, %arg2: memref<1x16x128xf32, #tpu.memory_space<vmem>>, %arg3: memref<32x16xbf16, #tpu.memory_space<vmem>>, %arg4: memref<32x1xf32, #tpu.memory_space<vmem>>, %arg5: memref<32x1xf32, #tpu.memory_space<vmem>>, %arg6: memref<2x32x1xf32, #tpu.memory_space<vmem>>, %arg7: memref<2x32x1xf32, #tpu.memory_space<vmem>>, %arg8: memref<32x32xbf16, #tpu.memory_space<vmem>>, %arg9: memref<1x32x1xf32, #tpu.memory_space<vmem>>, %arg10: memref<1x32x1xf32, #tpu.memory_space<vmem>>) attributes {dimension_semantics = [#tpu.dimension_semantics<parallel>, #tpu.dimension_semantics<arbitrary>], iteration_bounds = array<i64: 2, 2>, scalar_prefetch = 0 : i64, scratch_operands = 0 : i64, tpu.core_type = #tpu.core_type<tc>, window_params = [{transform_indices = @transform_0, window_bounds = array<i64: 1, 16, 128>}, {pipeline_mode = #tpu.pipeline_mode<synchronous>, transform_indices = @transform_1, window_bounds = array<i64: 32, 16>}, {pipeline_mode = #tpu.pipeline_mode<synchronous>, transform_indices = @transform_2, window_bounds = array<i64: 32, 1>}, {pipeline_mode = #tpu.pipeline_mode<synchronous>, transform_indices = @transform_3, window_bounds = array<i64: 32, 1>}, {pipeline_mode = #tpu.pipeline_mode<synchronous>, transform_indices = @transform_4, window_bounds = array<i64: 2, 32, 1>}, {pipeline_mode = #tpu.pipeline_mode<synchronous>, transform_indices = @transform_5, window_bounds = array<i64: 2, 32, 1>}, {pipeline_mode = #tpu.pipeline_mode<synchronous>, transform_indices = @transform_6, window_bounds = array<i64: 32, 32>}, {transform_indices = @transform_7, window_bounds = array<i64: 1, 32, 1>}, {transform_indices = @transform_8, window_bounds = array<i64: 1, 32, 1>}]} {
    %c0_i32 = arith.constant 0 : i32
    %0 = arith.cmpi eq, %arg1, %c0_i32 : i32
    %1 = arith.extui %0 : i1 to i32
    %c0_i32_0 = arith.constant 0 : i32
    %2 = arith.cmpi ne, %1, %c0_i32_0 : i32
    scf.if %2 {
      %cst_39 = arith.constant 0.000000e+00 : f32
      %54 = vector.broadcast %cst_39 : f32 to vector<1x32x1xf32>
      %c0_40 = arith.constant 0 : index
      %c0_41 = arith.constant 0 : index
      %c0_42 = arith.constant 0 : index
      %55 = vector.load %arg9[%c0_40, %c0_41, %c0_42] : memref<1x32x1xf32, #tpu.memory_space<vmem>>, vector<1x32x1xf32>
      tpu.vector_store %arg9[%c0_40, %c0_41, %c0_42], %54 {strides = array<i32>} : memref<1x32x1xf32, #tpu.memory_space<vmem>>, vector<1x32x1xf32>,
      %cst_43 = arith.constant 0.000000e+00 : f32
      %56 = vector.broadcast %cst_43 : f32 to vector<1x32x1xf32>
      %c0_44 = arith.constant 0 : index
      %c0_45 = arith.constant 0 : index
      %c0_46 = arith.constant 0 : index
      %57 = vector.load %arg10[%c0_44, %c0_45, %c0_46] : memref<1x32x1xf32, #tpu.memory_space<vmem>>, vector<1x32x1xf32>
      tpu.vector_store %arg10[%c0_44, %c0_45, %c0_46], %56 {strides = array<i32>} : memref<1x32x1xf32, #tpu.memory_space<vmem>>, vector<1x32x1xf32>,
    } else {
    }
    %c0 = arith.constant 0 : index
    %c0_1 = arith.constant 0 : index
    %c0_2 = arith.constant 0 : index
    %3 = vector.load %arg6[%c0, %c0_1, %c0_2] : memref<2x32x1xf32, #tpu.memory_space<vmem>>, vector<2x32x1xf32>
    %cst = arith.constant dense<0.000000e+00> : vector<32x1xf32>
    %4 = vector.multi_reduction <add>, %3, %cst [0] : vector<2x32x1xf32> to vector<32x1xf32>
    %c0_3 = arith.constant 0 : index
    %c0_4 = arith.constant 0 : index
    %c0_5 = arith.constant 0 : index
    %5 = vector.load %arg7[%c0_3, %c0_4, %c0_5] : memref<2x32x1xf32, #tpu.memory_space<vmem>>, vector<2x32x1xf32>
    %cst_6 = arith.constant dense<0.000000e+00> : vector<32x1xf32>
    %6 = vector.multi_reduction <add>, %5, %cst_6 [0] : vector<2x32x1xf32> to vector<32x1xf32>
    %cst_7 = arith.constant 0.001953125 : f32
    %7 = vector.broadcast %cst_7 : f32 to vector<32x1xf32>
    %8 = arith.mulf %4, %7 : vector<32x1xf32>
    %cst_8 = arith.constant 0.001953125 : f32
    %9 = vector.broadcast %cst_8 : f32 to vector<32x1xf32>
    %10 = arith.mulf %6, %9 : vector<32x1xf32>
    %11 = arith.mulf %8, %8 : vector<32x1xf32>
    %12 = arith.subf %10, %11 : vector<32x1xf32>
    %cst_9 = arith.constant 0.000000e+00 : f32
    %13 = vector.broadcast %cst_9 : f32 to vector<32x1xf32>
    %14 = arith.maximumf %12, %13 : vector<32x1xf32>
    %c0_10 = arith.constant 0 : index
    %c0_11 = arith.constant 0 : index
    %15 = vector.load %arg4[%c0_10, %c0_11] : memref<32x1xf32, #tpu.memory_space<vmem>>, vector<32x1xf32>
    %cst_12 = arith.constant 9.99999974E-6 : f32
    %16 = vector.broadcast %cst_12 : f32 to vector<32x1xf32>
    %17 = arith.addf %14, %16 : vector<32x1xf32>
    %18 = math.rsqrt %17 : vector<32x1xf32>
    %19 = arith.mulf %15, %18 : vector<32x1xf32>
    %c0_13 = arith.constant 0 : index
    %c0_14 = arith.constant 0 : index
    %20 = vector.load %arg5[%c0_13, %c0_14] : memref<32x1xf32, #tpu.memory_space<vmem>>, vector<32x1xf32>
    %21 = arith.mulf %8, %19 : vector<32x1xf32>
    %22 = arith.subf %20, %21 : vector<32x1xf32>
    %c0_15 = arith.constant 0 : index
    %c0_16 = arith.constant 0 : index
    %c0_17 = arith.constant 0 : index
    %23 = vector.load %arg2[%c0_15, %c0_16, %c0_17] : memref<1x16x128xf32, #tpu.memory_space<vmem>>, vector<1x16x128xf32>
    %24 = vector.shape_cast %23 : vector<1x16x128xf32> to vector<16x128xf32>
    %25 = arith.truncf %24 : vector<16x128xf32> to vector<16x128xbf16>
    %c0_18 = arith.constant 0 : index
    %c0_19 = arith.constant 0 : index
    %26 = vector.load %arg3[%c0_18, %c0_19] : memref<32x16xbf16, #tpu.memory_space<vmem>>, vector<32x16xbf16>
    %cst_20 = arith.constant dense<0.000000e+00> : vector<32x128xf32>
    %27 = tpu.matmul %26, %25, %cst_20 {dimension_numbers = #tpu.dot_dimension_numbers<[1], [0], [0], [1], [0, 0, 1, 1], [], []>} : vector<32x16xbf16>, vector<16x128xbf16>, vector<32x128xf32> -> vector<32x128xf32>
    %28 = vector.broadcast %19 : vector<32x1xf32> to vector<32x128xf32>
    %29 = arith.mulf %27, %28 : vector<32x128xf32>
    %30 = vector.broadcast %22 : vector<32x1xf32> to vector<32x128xf32>
    %31 = arith.addf %29, %30 : vector<32x128xf32>
    %cst_21 = arith.constant 0.000000e+00 : f32
    %32 = vector.broadcast %cst_21 : f32 to vector<32x128xf32>
    %33 = arith.maximumf %31, %32 : vector<32x128xf32>
    %c0_22 = arith.constant 0 : index
    %c0_23 = arith.constant 0 : index
    %34 = vector.load %arg8[%c0_22, %c0_23] : memref<32x32xbf16, #tpu.memory_space<vmem>>, vector<32x32xbf16>
    %35 = arith.truncf %33 : vector<32x128xf32> to vector<32x128xbf16>
    %cst_24 = arith.constant dense<0.000000e+00> : vector<32x128xf32>
    %36 = tpu.matmul %34, %35, %cst_24 {dimension_numbers = #tpu.dot_dimension_numbers<[1], [0], [0], [1], [0, 0, 1, 1], [], []>} : vector<32x32xbf16>, vector<32x128xbf16>, vector<32x128xf32> -> vector<32x128xf32>
    %c0_25 = arith.constant 0 : index
    %c0_26 = arith.constant 0 : index
    %c0_27 = arith.constant 0 : index
    %37 = vector.load %arg9[%c0_25, %c0_26, %c0_27] : memref<1x32x1xf32, #tpu.memory_space<vmem>>, vector<1x32x1xf32>
    %38 = vector.shape_cast %37 : vector<1x32x1xf32> to vector<32x1xf32>
    %cst_28 = arith.constant dense<0.000000e+00> : vector<32xf32>
    %39 = vector.multi_reduction <add>, %36, %cst_28 [1] : vector<32x128xf32> to vector<32xf32>
    %40 = vector.shape_cast %39 : vector<32xf32> to vector<32x1xf32>
    %41 = arith.addf %38, %40 : vector<32x1xf32>
    %c0_29 = arith.constant 0 : index
    %c0_30 = arith.constant 0 : index
    %c0_31 = arith.constant 0 : index
    %42 = vector.load %arg9[%c0_29, %c0_30, %c0_31] : memref<1x32x1xf32, #tpu.memory_space<vmem>>, vector<1x32x1xf32>
    %43 = vector.shape_cast %42 : vector<1x32x1xf32> to vector<32x1xf32>
    %44 = vector.shape_cast %41 : vector<32x1xf32> to vector<1x32x1xf32>
    tpu.vector_store %arg9[%c0_29, %c0_30, %c0_31], %44 {strides = array<i32>} : memref<1x32x1xf32, #tpu.memory_space<vmem>>, vector<1x32x1xf32>,
    %c0_32 = arith.constant 0 : index
    %c0_33 = arith.constant 0 : index
    %c0_34 = arith.constant 0 : index
    %45 = vector.load %arg10[%c0_32, %c0_33, %c0_34] : memref<1x32x1xf32, #tpu.memory_space<vmem>>, vector<1x32x1xf32>
    %46 = vector.shape_cast %45 : vector<1x32x1xf32> to vector<32x1xf32>
    %47 = arith.mulf %36, %36 : vector<32x128xf32>
    %cst_35 = arith.constant dense<0.000000e+00> : vector<32xf32>
    %48 = vector.multi_reduction <add>, %47, %cst_35 [1] : vector<32x128xf32> to vector<32xf32>
    %49 = vector.shape_cast %48 : vector<32xf32> to vector<32x1xf32>
    %50 = arith.addf %46, %49 : vector<32x1xf32>
    %c0_36 = arith.constant 0 : index
    %c0_37 = arith.constant 0 : index
    %c0_38 = arith.constant 0 : index
    %51 = vector.load %arg10[%c0_36, %c0_37, %c0_38] : memref<1x32x1xf32, #tpu.memory_space<vmem>>, vector<1x32x1xf32>
    %52 = vector.shape_cast %51 : vector<1x32x1xf32> to vector<32x1xf32>
    %53 = vector.shape_cast %50 : vector<32x1xf32> to vector<1x32x1xf32>
    tpu.vector_store %arg10[%c0_36, %c0_37, %c0_38], %53 {strides = array<i32>} : memref<1x32x1xf32, #tpu.memory_space<vmem>>, vector<1x32x1xf32>,
    return
  }
  func.func @transform_0(%arg0: i32, %arg1: i32) -> (i32, i32, i32) {
    %c0_i32 = arith.constant 0 : i32
    %c0_i32_0 = arith.constant 0 : i32
    return %arg0, %c0_i32, %arg1 : i32, i32, i32
  }
  func.func @transform_1(%arg0: i32, %arg1: i32) -> (i32, i32) {
    %c0_i32 = arith.constant 0 : i32
    %c0_i32_0 = arith.constant 0 : i32
    %c0_i32_1 = arith.constant 0 : i32
    return %c0_i32, %c0_i32_0 : i32, i32
  }
  func.func @transform_2(%arg0: i32, %arg1: i32) -> (i32, i32) {
    %c0_i32 = arith.constant 0 : i32
    %c0_i32_0 = arith.constant 0 : i32
    %c0_i32_1 = arith.constant 0 : i32
    return %c0_i32, %c0_i32_0 : i32, i32
  }
  func.func @transform_3(%arg0: i32, %arg1: i32) -> (i32, i32) {
    %c0_i32 = arith.constant 0 : i32
    %c0_i32_0 = arith.constant 0 : i32
    %c0_i32_1 = arith.constant 0 : i32
    return %c0_i32, %c0_i32_0 : i32, i32
  }
  func.func @transform_4(%arg0: i32, %arg1: i32) -> (i32, i32, i32) {
    %c0_i32 = arith.constant 0 : i32
    %c0_i32_0 = arith.constant 0 : i32
    %c0_i32_1 = arith.constant 0 : i32
    %c0_i32_2 = arith.constant 0 : i32
    return %c0_i32, %c0_i32_0, %c0_i32_1 : i32, i32, i32
  }
  func.func @transform_5(%arg0: i32, %arg1: i32) -> (i32, i32, i32) {
    %c0_i32 = arith.constant 0 : i32
    %c0_i32_0 = arith.constant 0 : i32
    %c0_i32_1 = arith.constant 0 : i32
    %c0_i32_2 = arith.constant 0 : i32
    return %c0_i32, %c0_i32_0, %c0_i32_1 : i32, i32, i32
  }
  func.func @transform_6(%arg0: i32, %arg1: i32) -> (i32, i32) {
    %c0_i32 = arith.constant 0 : i32
    %c0_i32_0 = arith.constant 0 : i32
    %c0_i32_1 = arith.constant 0 : i32
    return %c0_i32, %c0_i32_0 : i32, i32
  }
  func.func @transform_7(%arg0: i32, %arg1: i32) -> (i32, i32, i32) {
    %c0_i32 = arith.constant 0 : i32
    %c0_i32_0 = arith.constant 0 : i32
    %c0_i32_1 = arith.constant 0 : i32
    return %arg0, %c0_i32, %c0_i32_0 : i32, i32, i32
  }
  func.func @transform_8(%arg0: i32, %arg1: i32) -> (i32, i32, i32) {
    %c0_i32 = arith.constant 0 : i32
    %c0_i32_0 = arith.constant 0 : i32
    %c0_i32_1 = arith.constant 0 : i32
    return %arg0, %c0_i32, %c0_i32_0 : i32, i32, i32
  }
}

module attributes {stable_mosaic.version = 11 : i64} {
  func.func @_final_kernel(%arg0: i32, %arg1: i32, %arg2: memref<1x16x128xf32, #tpu.memory_space<vmem>>, %arg3: memref<1x32x128xf32, #tpu.memory_space<vmem>>, %arg4: memref<32x16xbf16, #tpu.memory_space<vmem>>, %arg5: memref<32x1xf32, #tpu.memory_space<vmem>>, %arg6: memref<32x1xf32, #tpu.memory_space<vmem>>, %arg7: memref<2x32x1xf32, #tpu.memory_space<vmem>>, %arg8: memref<2x32x1xf32, #tpu.memory_space<vmem>>, %arg9: memref<32x32xbf16, #tpu.memory_space<vmem>>, %arg10: memref<32x1xf32, #tpu.memory_space<vmem>>, %arg11: memref<32x1xf32, #tpu.memory_space<vmem>>, %arg12: memref<2x32x1xf32, #tpu.memory_space<vmem>>, %arg13: memref<2x32x1xf32, #tpu.memory_space<vmem>>, %arg14: memref<32x32xbf16, #tpu.memory_space<vmem>>, %arg15: memref<32x1xf32, #tpu.memory_space<vmem>>, %arg16: memref<32x32xbf16, #tpu.memory_space<vmem>>, %arg17: memref<32x1xf32, #tpu.memory_space<vmem>>, %arg18: memref<1x32x128xf32, #tpu.memory_space<vmem>>) attributes {dimension_semantics = [#tpu.dimension_semantics<parallel>, #tpu.dimension_semantics<parallel>], iteration_bounds = array<i64: 2, 2>, scalar_prefetch = 0 : i64, scratch_operands = 0 : i64, tpu.core_type = #tpu.core_type<tc>, window_params = [{transform_indices = @transform_0, window_bounds = array<i64: 1, 16, 128>}, {transform_indices = @transform_1, window_bounds = array<i64: 1, 32, 128>}, {pipeline_mode = #tpu.pipeline_mode<synchronous>, transform_indices = @transform_2, window_bounds = array<i64: 32, 16>}, {pipeline_mode = #tpu.pipeline_mode<synchronous>, transform_indices = @transform_3, window_bounds = array<i64: 32, 1>}, {pipeline_mode = #tpu.pipeline_mode<synchronous>, transform_indices = @transform_4, window_bounds = array<i64: 32, 1>}, {pipeline_mode = #tpu.pipeline_mode<synchronous>, transform_indices = @transform_5, window_bounds = array<i64: 2, 32, 1>}, {pipeline_mode = #tpu.pipeline_mode<synchronous>, transform_indices = @transform_6, window_bounds = array<i64: 2, 32, 1>}, {pipeline_mode = #tpu.pipeline_mode<synchronous>, transform_indices = @transform_7, window_bounds = array<i64: 32, 32>}, {pipeline_mode = #tpu.pipeline_mode<synchronous>, transform_indices = @transform_8, window_bounds = array<i64: 32, 1>}, {pipeline_mode = #tpu.pipeline_mode<synchronous>, transform_indices = @transform_9, window_bounds = array<i64: 32, 1>}, {pipeline_mode = #tpu.pipeline_mode<synchronous>, transform_indices = @transform_10, window_bounds = array<i64: 2, 32, 1>}, {pipeline_mode = #tpu.pipeline_mode<synchronous>, transform_indices = @transform_11, window_bounds = array<i64: 2, 32, 1>}, {pipeline_mode = #tpu.pipeline_mode<synchronous>, transform_indices = @transform_12, window_bounds = array<i64: 32, 32>}, {pipeline_mode = #tpu.pipeline_mode<synchronous>, transform_indices = @transform_13, window_bounds = array<i64: 32, 1>}, {pipeline_mode = #tpu.pipeline_mode<synchronous>, transform_indices = @transform_14, window_bounds = array<i64: 32, 32>}, {pipeline_mode = #tpu.pipeline_mode<synchronous>, transform_indices = @transform_15, window_bounds = array<i64: 32, 1>}, {transform_indices = @transform_16, window_bounds = array<i64: 1, 32, 128>}]} {
    %c0 = arith.constant 0 : index
    %c0_0 = arith.constant 0 : index
    %c0_1 = arith.constant 0 : index
    %0 = vector.load %arg7[%c0, %c0_0, %c0_1] : memref<2x32x1xf32, #tpu.memory_space<vmem>>, vector<2x32x1xf32>
    %cst = arith.constant dense<0.000000e+00> : vector<32x1xf32>
    %1 = vector.multi_reduction <add>, %0, %cst [0] : vector<2x32x1xf32> to vector<32x1xf32>
    %c0_2 = arith.constant 0 : index
    %c0_3 = arith.constant 0 : index
    %c0_4 = arith.constant 0 : index
    %2 = vector.load %arg8[%c0_2, %c0_3, %c0_4] : memref<2x32x1xf32, #tpu.memory_space<vmem>>, vector<2x32x1xf32>
    %cst_5 = arith.constant dense<0.000000e+00> : vector<32x1xf32>
    %3 = vector.multi_reduction <add>, %2, %cst_5 [0] : vector<2x32x1xf32> to vector<32x1xf32>
    %cst_6 = arith.constant 0.001953125 : f32
    %4 = vector.broadcast %cst_6 : f32 to vector<32x1xf32>
    %5 = arith.mulf %1, %4 : vector<32x1xf32>
    %cst_7 = arith.constant 0.001953125 : f32
    %6 = vector.broadcast %cst_7 : f32 to vector<32x1xf32>
    %7 = arith.mulf %3, %6 : vector<32x1xf32>
    %8 = arith.mulf %5, %5 : vector<32x1xf32>
    %9 = arith.subf %7, %8 : vector<32x1xf32>
    %cst_8 = arith.constant 0.000000e+00 : f32
    %10 = vector.broadcast %cst_8 : f32 to vector<32x1xf32>
    %11 = arith.maximumf %9, %10 : vector<32x1xf32>
    %c0_9 = arith.constant 0 : index
    %c0_10 = arith.constant 0 : index
    %12 = vector.load %arg5[%c0_9, %c0_10] : memref<32x1xf32, #tpu.memory_space<vmem>>, vector<32x1xf32>
    %cst_11 = arith.constant 9.99999974E-6 : f32
    %13 = vector.broadcast %cst_11 : f32 to vector<32x1xf32>
    %14 = arith.addf %11, %13 : vector<32x1xf32>
    %15 = math.rsqrt %14 : vector<32x1xf32>
    %16 = arith.mulf %12, %15 : vector<32x1xf32>
    %c0_12 = arith.constant 0 : index
    %c0_13 = arith.constant 0 : index
    %17 = vector.load %arg6[%c0_12, %c0_13] : memref<32x1xf32, #tpu.memory_space<vmem>>, vector<32x1xf32>
    %18 = arith.mulf %5, %16 : vector<32x1xf32>
    %19 = arith.subf %17, %18 : vector<32x1xf32>
    %c0_14 = arith.constant 0 : index
    %c0_15 = arith.constant 0 : index
    %c0_16 = arith.constant 0 : index
    %20 = vector.load %arg12[%c0_14, %c0_15, %c0_16] : memref<2x32x1xf32, #tpu.memory_space<vmem>>, vector<2x32x1xf32>
    %cst_17 = arith.constant dense<0.000000e+00> : vector<32x1xf32>
    %21 = vector.multi_reduction <add>, %20, %cst_17 [0] : vector<2x32x1xf32> to vector<32x1xf32>
    %c0_18 = arith.constant 0 : index
    %c0_19 = arith.constant 0 : index
    %c0_20 = arith.constant 0 : index
    %22 = vector.load %arg13[%c0_18, %c0_19, %c0_20] : memref<2x32x1xf32, #tpu.memory_space<vmem>>, vector<2x32x1xf32>
    %cst_21 = arith.constant dense<0.000000e+00> : vector<32x1xf32>
    %23 = vector.multi_reduction <add>, %22, %cst_21 [0] : vector<2x32x1xf32> to vector<32x1xf32>
    %cst_22 = arith.constant 0.001953125 : f32
    %24 = vector.broadcast %cst_22 : f32 to vector<32x1xf32>
    %25 = arith.mulf %21, %24 : vector<32x1xf32>
    %cst_23 = arith.constant 0.001953125 : f32
    %26 = vector.broadcast %cst_23 : f32 to vector<32x1xf32>
    %27 = arith.mulf %23, %26 : vector<32x1xf32>
    %28 = arith.mulf %25, %25 : vector<32x1xf32>
    %29 = arith.subf %27, %28 : vector<32x1xf32>
    %cst_24 = arith.constant 0.000000e+00 : f32
    %30 = vector.broadcast %cst_24 : f32 to vector<32x1xf32>
    %31 = arith.maximumf %29, %30 : vector<32x1xf32>
    %c0_25 = arith.constant 0 : index
    %c0_26 = arith.constant 0 : index
    %32 = vector.load %arg10[%c0_25, %c0_26] : memref<32x1xf32, #tpu.memory_space<vmem>>, vector<32x1xf32>
    %cst_27 = arith.constant 9.99999974E-6 : f32
    %33 = vector.broadcast %cst_27 : f32 to vector<32x1xf32>
    %34 = arith.addf %31, %33 : vector<32x1xf32>
    %35 = math.rsqrt %34 : vector<32x1xf32>
    %36 = arith.mulf %32, %35 : vector<32x1xf32>
    %c0_28 = arith.constant 0 : index
    %c0_29 = arith.constant 0 : index
    %37 = vector.load %arg11[%c0_28, %c0_29] : memref<32x1xf32, #tpu.memory_space<vmem>>, vector<32x1xf32>
    %38 = arith.mulf %25, %36 : vector<32x1xf32>
    %39 = arith.subf %37, %38 : vector<32x1xf32>
    %c0_30 = arith.constant 0 : index
    %c0_31 = arith.constant 0 : index
    %c0_32 = arith.constant 0 : index
    %40 = vector.load %arg2[%c0_30, %c0_31, %c0_32] : memref<1x16x128xf32, #tpu.memory_space<vmem>>, vector<1x16x128xf32>
    %41 = vector.shape_cast %40 : vector<1x16x128xf32> to vector<16x128xf32>
    %42 = arith.truncf %41 : vector<16x128xf32> to vector<16x128xbf16>
    %c0_33 = arith.constant 0 : index
    %c0_34 = arith.constant 0 : index
    %43 = vector.load %arg4[%c0_33, %c0_34] : memref<32x16xbf16, #tpu.memory_space<vmem>>, vector<32x16xbf16>
    %cst_35 = arith.constant dense<0.000000e+00> : vector<32x128xf32>
    %44 = tpu.matmul %43, %42, %cst_35 {dimension_numbers = #tpu.dot_dimension_numbers<[1], [0], [0], [1], [0, 0, 1, 1], [], []>} : vector<32x16xbf16>, vector<16x128xbf16>, vector<32x128xf32> -> vector<32x128xf32>
    %45 = vector.broadcast %16 : vector<32x1xf32> to vector<32x128xf32>
    %46 = arith.mulf %44, %45 : vector<32x128xf32>
    %47 = vector.broadcast %19 : vector<32x1xf32> to vector<32x128xf32>
    %48 = arith.addf %46, %47 : vector<32x128xf32>
    %cst_36 = arith.constant 0.000000e+00 : f32
    %49 = vector.broadcast %cst_36 : f32 to vector<32x128xf32>
    %50 = arith.maximumf %48, %49 : vector<32x128xf32>
    %c0_37 = arith.constant 0 : index
    %c0_38 = arith.constant 0 : index
    %51 = vector.load %arg9[%c0_37, %c0_38] : memref<32x32xbf16, #tpu.memory_space<vmem>>, vector<32x32xbf16>
    %52 = arith.truncf %50 : vector<32x128xf32> to vector<32x128xbf16>
    %cst_39 = arith.constant dense<0.000000e+00> : vector<32x128xf32>
    %53 = tpu.matmul %51, %52, %cst_39 {dimension_numbers = #tpu.dot_dimension_numbers<[1], [0], [0], [1], [0, 0, 1, 1], [], []>} : vector<32x32xbf16>, vector<32x128xbf16>, vector<32x128xf32> -> vector<32x128xf32>
    %54 = vector.broadcast %36 : vector<32x1xf32> to vector<32x128xf32>
    %55 = arith.mulf %53, %54 : vector<32x128xf32>
    %56 = vector.broadcast %39 : vector<32x1xf32> to vector<32x128xf32>
    %57 = arith.addf %55, %56 : vector<32x128xf32>
    %cst_40 = arith.constant 0.000000e+00 : f32
    %58 = vector.broadcast %cst_40 : f32 to vector<32x128xf32>
    %59 = arith.maximumf %57, %58 : vector<32x128xf32>
    %c0_41 = arith.constant 0 : index
    %c0_42 = arith.constant 0 : index
    %60 = vector.load %arg14[%c0_41, %c0_42] : memref<32x32xbf16, #tpu.memory_space<vmem>>, vector<32x32xbf16>
    %61 = arith.truncf %59 : vector<32x128xf32> to vector<32x128xbf16>
    %cst_43 = arith.constant dense<0.000000e+00> : vector<32x128xf32>
    %62 = tpu.matmul %60, %61, %cst_43 {dimension_numbers = #tpu.dot_dimension_numbers<[1], [0], [0], [1], [0, 0, 1, 1], [], []>} : vector<32x32xbf16>, vector<32x128xbf16>, vector<32x128xf32> -> vector<32x128xf32>
    %c0_44 = arith.constant 0 : index
    %c0_45 = arith.constant 0 : index
    %63 = vector.load %arg15[%c0_44, %c0_45] : memref<32x1xf32, #tpu.memory_space<vmem>>, vector<32x1xf32>
    %64 = vector.broadcast %63 : vector<32x1xf32> to vector<32x128xf32>
    %65 = arith.addf %62, %64 : vector<32x128xf32>
    %cst_46 = arith.constant 0.000000e+00 : f32
    %66 = vector.broadcast %cst_46 : f32 to vector<32x128xf32>
    %67 = arith.maximumf %65, %66 : vector<32x128xf32>
    %c0_47 = arith.constant 0 : index
    %c0_48 = arith.constant 0 : index
    %68 = vector.load %arg16[%c0_47, %c0_48] : memref<32x32xbf16, #tpu.memory_space<vmem>>, vector<32x32xbf16>
    %69 = arith.truncf %67 : vector<32x128xf32> to vector<32x128xbf16>
    %cst_49 = arith.constant dense<0.000000e+00> : vector<32x128xf32>
    %70 = tpu.matmul %68, %69, %cst_49 {dimension_numbers = #tpu.dot_dimension_numbers<[1], [0], [0], [1], [0, 0, 1, 1], [], []>} : vector<32x32xbf16>, vector<32x128xbf16>, vector<32x128xf32> -> vector<32x128xf32>
    %c0_50 = arith.constant 0 : index
    %c0_51 = arith.constant 0 : index
    %71 = vector.load %arg17[%c0_50, %c0_51] : memref<32x1xf32, #tpu.memory_space<vmem>>, vector<32x1xf32>
    %72 = vector.broadcast %71 : vector<32x1xf32> to vector<32x128xf32>
    %73 = arith.addf %70, %72 : vector<32x128xf32>
    %cst_52 = arith.constant 0.000000e+00 : f32
    %74 = vector.broadcast %cst_52 : f32 to vector<32x128xf32>
    %75 = arith.subf %74, %73 : vector<32x128xf32>
    %76 = math.exp %75 : vector<32x128xf32>
    %cst_53 = arith.constant 1.000000e+00 : f32
    %77 = vector.broadcast %cst_53 : f32 to vector<32x128xf32>
    %78 = arith.addf %77, %76 : vector<32x128xf32>
    %79 = tpu.reciprocal %78 {approx = true} : vector<32x128xf32> -> vector<32x128xf32>
    %c0_54 = arith.constant 0 : index
    %c0_55 = arith.constant 0 : index
    %c0_56 = arith.constant 0 : index
    %80 = vector.load %arg3[%c0_54, %c0_55, %c0_56] : memref<1x32x128xf32, #tpu.memory_space<vmem>>, vector<1x32x128xf32>
    %81 = vector.shape_cast %80 : vector<1x32x128xf32> to vector<32x128xf32>
    %82 = arith.mulf %81, %79 : vector<32x128xf32>
    %c0_57 = arith.constant 0 : index
    %c0_58 = arith.constant 0 : index
    %c0_59 = arith.constant 0 : index
    %83 = vector.load %arg18[%c0_57, %c0_58, %c0_59] : memref<1x32x128xf32, #tpu.memory_space<vmem>>, vector<1x32x128xf32>
    %84 = vector.shape_cast %83 : vector<1x32x128xf32> to vector<32x128xf32>
    %85 = vector.shape_cast %82 : vector<32x128xf32> to vector<1x32x128xf32>
    tpu.vector_store %arg18[%c0_57, %c0_58, %c0_59], %85 {strides = array<i32>} : memref<1x32x128xf32, #tpu.memory_space<vmem>>, vector<1x32x128xf32>,
    return
  }
  func.func @transform_0(%arg0: i32, %arg1: i32) -> (i32, i32, i32) {
    %c0_i32 = arith.constant 0 : i32
    %c0_i32_0 = arith.constant 0 : i32
    return %arg0, %c0_i32, %arg1 : i32, i32, i32
  }
  func.func @transform_1(%arg0: i32, %arg1: i32) -> (i32, i32, i32) {
    %c0_i32 = arith.constant 0 : i32
    %c0_i32_0 = arith.constant 0 : i32
    return %arg0, %c0_i32, %arg1 : i32, i32, i32
  }
  func.func @transform_2(%arg0: i32, %arg1: i32) -> (i32, i32) {
    %c0_i32 = arith.constant 0 : i32
    %c0_i32_0 = arith.constant 0 : i32
    %c0_i32_1 = arith.constant 0 : i32
    return %c0_i32, %c0_i32_0 : i32, i32
  }
  func.func @transform_3(%arg0: i32, %arg1: i32) -> (i32, i32) {
    %c0_i32 = arith.constant 0 : i32
    %c0_i32_0 = arith.constant 0 : i32
    %c0_i32_1 = arith.constant 0 : i32
    return %c0_i32, %c0_i32_0 : i32, i32
  }
  func.func @transform_4(%arg0: i32, %arg1: i32) -> (i32, i32) {
    %c0_i32 = arith.constant 0 : i32
    %c0_i32_0 = arith.constant 0 : i32
    %c0_i32_1 = arith.constant 0 : i32
    return %c0_i32, %c0_i32_0 : i32, i32
  }
  func.func @transform_5(%arg0: i32, %arg1: i32) -> (i32, i32, i32) {
    %c0_i32 = arith.constant 0 : i32
    %c0_i32_0 = arith.constant 0 : i32
    %c0_i32_1 = arith.constant 0 : i32
    %c0_i32_2 = arith.constant 0 : i32
    return %c0_i32, %c0_i32_0, %c0_i32_1 : i32, i32, i32
  }
  func.func @transform_6(%arg0: i32, %arg1: i32) -> (i32, i32, i32) {
    %c0_i32 = arith.constant 0 : i32
    %c0_i32_0 = arith.constant 0 : i32
    %c0_i32_1 = arith.constant 0 : i32
    %c0_i32_2 = arith.constant 0 : i32
    return %c0_i32, %c0_i32_0, %c0_i32_1 : i32, i32, i32
  }
  func.func @transform_7(%arg0: i32, %arg1: i32) -> (i32, i32) {
    %c0_i32 = arith.constant 0 : i32
    %c0_i32_0 = arith.constant 0 : i32
    %c0_i32_1 = arith.constant 0 : i32
    return %c0_i32, %c0_i32_0 : i32, i32
  }
  func.func @transform_8(%arg0: i32, %arg1: i32) -> (i32, i32) {
    %c0_i32 = arith.constant 0 : i32
    %c0_i32_0 = arith.constant 0 : i32
    %c0_i32_1 = arith.constant 0 : i32
    return %c0_i32, %c0_i32_0 : i32, i32
  }
  func.func @transform_9(%arg0: i32, %arg1: i32) -> (i32, i32) {
    %c0_i32 = arith.constant 0 : i32
    %c0_i32_0 = arith.constant 0 : i32
    %c0_i32_1 = arith.constant 0 : i32
    return %c0_i32, %c0_i32_0 : i32, i32
  }
  func.func @transform_10(%arg0: i32, %arg1: i32) -> (i32, i32, i32) {
    %c0_i32 = arith.constant 0 : i32
    %c0_i32_0 = arith.constant 0 : i32
    %c0_i32_1 = arith.constant 0 : i32
    %c0_i32_2 = arith.constant 0 : i32
    return %c0_i32, %c0_i32_0, %c0_i32_1 : i32, i32, i32
  }
  func.func @transform_11(%arg0: i32, %arg1: i32) -> (i32, i32, i32) {
    %c0_i32 = arith.constant 0 : i32
    %c0_i32_0 = arith.constant 0 : i32
    %c0_i32_1 = arith.constant 0 : i32
    %c0_i32_2 = arith.constant 0 : i32
    return %c0_i32, %c0_i32_0, %c0_i32_1 : i32, i32, i32
  }
  func.func @transform_12(%arg0: i32, %arg1: i32) -> (i32, i32) {
    %c0_i32 = arith.constant 0 : i32
    %c0_i32_0 = arith.constant 0 : i32
    %c0_i32_1 = arith.constant 0 : i32
    return %c0_i32, %c0_i32_0 : i32, i32
  }
  func.func @transform_13(%arg0: i32, %arg1: i32) -> (i32, i32) {
    %c0_i32 = arith.constant 0 : i32
    %c0_i32_0 = arith.constant 0 : i32
    %c0_i32_1 = arith.constant 0 : i32
    return %c0_i32, %c0_i32_0 : i32, i32
  }
  func.func @transform_14(%arg0: i32, %arg1: i32) -> (i32, i32) {
    %c0_i32 = arith.constant 0 : i32
    %c0_i32_0 = arith.constant 0 : i32
    %c0_i32_1 = arith.constant 0 : i32
    return %c0_i32, %c0_i32_0 : i32, i32
  }
  func.func @transform_15(%arg0: i32, %arg1: i32) -> (i32, i32) {
    %c0_i32 = arith.constant 0 : i32
    %c0_i32_0 = arith.constant 0 : i32
    %c0_i32_1 = arith.constant 0 : i32
    return %c0_i32, %c0_i32_0 : i32, i32
  }
  func.func @transform_16(%arg0: i32, %arg1: i32) -> (i32, i32, i32) {
    %c0_i32 = arith.constant 0 : i32
    %c0_i32_0 = arith.constant 0 : i32
    return %arg0, %c0_i32, %arg1 : i32, i32, i32
  }
}

</mosaic_0001>

<llo_original>
// kernel: camera_aware_forward.3
$region0: #{camera_aware_forward.3}
  #allocation0 [shape = 'u32[]', space=smem, size = 0x4, offset = 0x4, fixed_abs, tag = 'smem constant byte address 0x4 - core index']
  #allocation1 [shape = 'u32[144,128]{1,0:T(1,128)}', space=vmem, size = 0x12000, scoped, tag = 'internal scratch']
  %s0 = inlined_call_operand.vmem [shape: f32[2,16,256], index: 0, kind: input, shape index: {}]
  %s1 = inlined_call_operand.vmem [shape: bf16[32,16], index: 1, kind: input, shape index: {}]
  %s2 = inlined_call_operand.vmem [shape: f32[2,32,1], index: 2, kind: output, shape index: {0}]
  %s3 = inlined_call_operand.vmem [shape: f32[2,32,1], index: 3, kind: output, shape index: {1}]
  %4 = xla_tuple %s2, %s3
  %s5 = sld [smem:[#allocation0]]
  $region91: #{camera_aware_forward.3} parent=0
    _
  %s7 = ssub.s32 1, %s5
  %s8 = scalar_select 0, %s7, %s5
  $region1: #{camera_aware_forward.3} parent=0
    #allocation2 [shape = 'u8[16384]{0}', space=vmem, size = 0x4000, scoped, tag = 'input window, operand 0']
    loop: start=0, step=1, limit=6
    $region2: #{camera_aware_forward.3} parent=1 // loop_pre_header
      _
    $region3: #{camera_aware_forward.3} parent=1 // loop_header
      %s10 = sphi 0, %s14
      %p11 = scmp.ge.s32.totalorder %s10, 6
      %s17 = sphi 0, %s29
      %s18 = sphi 0, %s25
      %s19 = sphi 0, %s17
      %s20 = sphi 0, %s18
      %s21 = sphi 0, %s19
      %s22 = sphi 0, %s20
      %s34 = sphi 0, %s36
      %s37 = sphi 0, %s34
      %s38 = sphi 0, %s37
      %s54 = sphi 0, %s38
      %s58 = sphi 0, %s58
      %s60 = sphi 0, %s58
      %s61 = sphi 0, %s60
      %s75 = sphi 0, %s61
      %s81 = sphi 0, %s83
      %s84 = sphi 0, %s81
      %s85 = sphi 0, %s84
      %s101 = sphi 0, %s85
      %s107 = sphi 0, %s109
      %s110 = sphi 0, %s107
      %s111 = sphi 0, %s110
      %s127 = sphi 0, %s111
    $region4: #{camera_aware_forward.3} parent=1 // loop_header_branch
      %13 = sbr.rel (%p11) target = $region8
    $region5: #{camera_aware_forward.3} parent=1 // loop_body
      %s15 = ssub.s32 %s10, 1
      %s16 = ssub.s32 %s10, 2
      %s23 = sadd.s32 1, %s18
      %p24 = scmp.ge.s32.totalorder %s23, 2
      %s25 = scalar_select %p24, 0, %s23
      %s26 = sadd.s32 1, %s17
      %s27 = scalar_select %p24, %s26, %s17
      %p28 = scmp.ge.s32.totalorder %s27, 2
      %s29 = scalar_select %p28, 0, %s27
      %s30 = ssub.s32 %s17, %s29
      %s31 = ssub.s32 %s18, %s25
      %s32 = sor.u32 %s30, %s31
      %p33 = scmp.eq.s32.totalorder %s32, 0
      %s35 = sadd.s32 %s34, 1
      %s36 = scalar_select %p33, %s34, %s35
      %p39 = pneg %p33
      %p40 = scmp.eq.s32.totalorder %s10, 3
      %p41 = por %p39, %p40
      %p42 = scmp.ne.s32.totalorder %s34, %s37
      %p43 = scmp.eq.s32.totalorder %s10, 0
      %p44 = por %p42, %p43
      %p45 = scmp.ne.s32.totalorder %s34, %s37
      %p46 = scmp.eq.s32.totalorder %s15, 3
      %p47 = por %p45, %p46
      %p48 = scmp.ne.s32.totalorder %s37, %s38
      %p49 = scmp.eq.s32.totalorder %s15, 0
      %p50 = por %p48, %p49
      %p51 = scmp.ne.s32.totalorder %s37, %s38
      %p52 = scmp.eq.s32.totalorder %s16, 3
      %p53 = por %p51, %p52
      %p55 = scmp.ne.s32.totalorder %s38, %s54
      %p56 = scmp.eq.s32.totalorder %s16, 0
      %p57 = por %p55, %p56
      %s59 = sadd.s32 %s58, 1
      %p62 = scmp.eq.s32.totalorder %s10, 3
      %p63 = scmp.ne.s32.totalorder %s58, %s60
      %p64 = scmp.eq.s32.totalorder %s10, 0
      %p65 = por %p63, %p64
      %p66 = scmp.ne.s32.totalorder %s58, %s60
      %p67 = scmp.eq.s32.totalorder %s15, 3
      %p68 = por %p66, %p67
      %p69 = scmp.ne.s32.totalorder %s60, %s61
      %p70 = scmp.eq.s32.totalorder %s15, 0
      %p71 = por %p69, %p70
      %p72 = scmp.ne.s32.totalorder %s60, %s61
      %p73 = scmp.eq.s32.totalorder %s16, 3
      %p74 = por %p72, %p73
      %p76 = scmp.ne.s32.totalorder %s61, %s75
      %p77 = scmp.eq.s32.totalorder %s16, 0
      %p78 = por %p76, %p77
      %s79 = ssub.s32 %s17, %s29
      %p80 = scmp.eq.s32.totalorder %s79, 0
      %s82 = sadd.s32 %s81, 1
      %s83 = scalar_select %p80, %s81, %s82
      %p86 = pneg %p80
      %p87 = scmp.eq.s32.totalorder %s10, 3
      %p88 = por %p86, %p87
      %p89 = scmp.ne.s32.totalorder %s81, %s84
      %p90 = scmp.eq.s32.totalorder %s10, 0
      %p91 = por %p89, %p90
      %p92 = scmp.ne.s32.totalorder %s81, %s84
      %p93 = scmp.eq.s32.totalorder %s15, 3
      %p94 = por %p92, %p93
      %p95 = scmp.ne.s32.totalorder %s84, %s85
      %p96 = scmp.eq.s32.totalorder %s15, 0
      %p97 = por %p95, %p96
      %p98 = scmp.ne.s32.totalorder %s84, %s85
      %p99 = scmp.eq.s32.totalorder %s16, 3
      %p100 = por %p98, %p99
      %p102 = scmp.ne.s32.totalorder %s85, %s101
      %p103 = scmp.eq.s32.totalorder %s16, 0
      %p104 = por %p102, %p103
      %s105 = ssub.s32 %s17, %s29
      %p106 = scmp.eq.s32.totalorder %s105, 0
      %s108 = sadd.s32 %s107, 1
      %s109 = scalar_select %p106, %s107, %s108
      %p112 = pneg %p106
      %p113 = scmp.eq.s32.totalorder %s10, 3
      %p114 = por %p112, %p113
      %p115 = scmp.ne.s32.totalorder %s107, %s110
      %p116 = scmp.eq.s32.totalorder %s10, 0
      %p117 = por %p115, %p116
      %p118 = scmp.ne.s32.totalorder %s107, %s110
      %p119 = scmp.eq.s32.totalorder %s15, 3
      %p120 = por %p118, %p119
      %p121 = scmp.ne.s32.totalorder %s110, %s111
      %p122 = scmp.eq.s32.totalorder %s15, 0
      %p123 = por %p121, %p122
      %p124 = scmp.ne.s32.totalorder %s110, %s111
      %p125 = scmp.eq.s32.totalorder %s16, 3
      %p126 = por %p124, %p125
      %p128 = scmp.ne.s32.totalorder %s111, %s127
      %p129 = scmp.eq.s32.totalorder %s16, 0
      %p130 = por %p128, %p129
      %p131 = scmp.le.s32.totalorder 1, %s10
      %p132 = scmp.lt.s32.totalorder %s10, 5
      %p133 = pnand %p131, %p132
      %p134 = pneg %p133
      // Predicated region
      $region9: #{camera_aware_forward.3} parent=5 // pred_check
        _
      $region10: #{camera_aware_forward.3} parent=5 // pred_check_branch
        %136 = sbr.rel (%p133) target = $region12
      $region11: #{camera_aware_forward.3} parent=5 // pred_region
        %s137 = ssub.s32 %s10, 1
        // Predicated region
        $region13: #{camera_aware_forward.3} parent=11 // pred_check
          %p138 = pneg %p71
        $region14: #{camera_aware_forward.3} parent=11 // pred_check_branch
          %140 = sbr.rel (%p138) target = $region16
        $region15: #{camera_aware_forward.3} parent=11 // pred_region
          _
        $region16: #{camera_aware_forward.3} parent=11 // pred_fallthru
          _
      $region12: #{camera_aware_forward.3} parent=5 // pred_fallthru
        _
      %p141 = scmp.lt.s32.totalorder %s10, 4
      // Predicated region
      $region17: #{camera_aware_forward.3} parent=5 // pred_check
        %p142 = pneg %p141
      $region18: #{camera_aware_forward.3} parent=5 // pred_check_branch
        %144 = sbr.rel (%p142) target = $region20
      $region19: #{camera_aware_forward.3} parent=5 // pred_region
        // Predicated region
        $region21: #{camera_aware_forward.3} parent=19 // pred_check
          %p145 = pneg %p44
        $region22: #{camera_aware_forward.3} parent=19 // pred_check_branch
          %147 = sbr.rel (%p145) target = $region24
        $region23: #{camera_aware_forward.3} parent=19 // pred_region
          %s148 = sand.u32 %s34, 1
          %s149 = sand.u32 %s34, 1
          %s150 = smul.addr %s149, 16
          %s151 = scalar_lea.vmem [#allocation2], %s150
          %s152 = smul.addr %s17, 4
          %s153 = sadd.s32 %s18, %s152
          %s154 = smul.addr %s153, 8
          %s155 = scalar_lea.vmem %s0, %s154
          // Predicated region
          $region25: #{camera_aware_forward.3} parent=23 // pred_check
            _
          $region26: #{camera_aware_forward.3} parent=23 // pred_check_branch
            %157 = sbr.rel (0) target = $region28
          $region27: #{camera_aware_forward.3} parent=23 // pred_region
            // Predicated region
            $region29: #{camera_aware_forward.3} parent=27 // pred_check
              _
            $region30: #{camera_aware_forward.3} parent=27 // pred_check_branch
              %159 = sbr.rel (0) target = $region32
            $region31: #{camera_aware_forward.3} parent=27 // pred_region
              // Predicated region
              $region44: #{camera_aware_forward.3} parent=31 // pred_check
                _
              $region45: #{camera_aware_forward.3} parent=31 // pred_check_branch
                %176 = sbr.rel (0) target = $region47
              $region46: #{camera_aware_forward.3} parent=31 // pred_region
                loop: start=0, step=1, limit=1
                $region48: #{camera_aware_forward.3} parent=46 // loop_pre_header
                  _
                $region49: #{camera_aware_forward.3} parent=46 // loop_header
                  %s178 = sphi 0, %s182
                  %p179 = scmp.ge.s32.totalorder %s178, 1
                  %s183 = sphi %s155, %s155
                  %s184 = sphi %s151, %s151
                $region50: #{camera_aware_forward.3} parent=46 // loop_header_branch
                  %181 = sbr.rel (%p179) target = $region54
                $region51: #{camera_aware_forward.3} parent=46 // loop_body
                  %v185 = vld [vmem:[%s183] sm:$0xff]
                  %186 = vst [vmem:[%s184] sm:$0xff] %v185
                  %v187 = vld [vmem:[%s183 + $0x10] sm:$0xff]
                  %188 = vst [vmem:[%s184 + $0x8] sm:$0xff] %v187
                $region52: #{camera_aware_forward.3} parent=46 // loop_footer
                  %s182 = sadd.s32 1, %s178
                $region53: #{camera_aware_forward.3} parent=46 // loop_footer_branch
                  %177 = sbr.rel target = $region49
                $region54: #{camera_aware_forward.3} parent=46 // loop_exit
                  _
              $region47: #{camera_aware_forward.3} parent=31 // pred_fallthru
                _
              // Predicated region
              $region55: #{camera_aware_forward.3} parent=31 // pred_check
                _
              $region56: #{camera_aware_forward.3} parent=31 // pred_check_branch
                %190 = sbr.rel target = $region58
              $region57: #{camera_aware_forward.3} parent=31 // pred_region
                _
              $region58: #{camera_aware_forward.3} parent=31 // pred_fallthru
                _
            $region32: #{camera_aware_forward.3} parent=27 // pred_fallthru
              _
            // Predicated region
            $region33: #{camera_aware_forward.3} parent=27 // pred_check
              _
            $region34: #{camera_aware_forward.3} parent=27 // pred_check_branch
              %161 = sbr.rel target = $region36
            $region35: #{camera_aware_forward.3} parent=27 // pred_region
              loop: start=0, step=1, limit=1
              $region37: #{camera_aware_forward.3} parent=35 // loop_pre_header
                _
              $region38: #{camera_aware_forward.3} parent=35 // loop_header
                %s164 = sphi 0, %s168
                %p165 = scmp.ge.s32.totalorder %s164, 1
                %s169 = sphi %s155, %s155
                %s170 = sphi %s151, %s151
              $region39: #{camera_aware_forward.3} parent=35 // loop_header_branch
                %167 = sbr.rel (%p165) target = $region43
              $region40: #{camera_aware_forward.3} parent=35 // loop_body
                %v171 = vld [vmem:[%s169] sm:$0xff]
                %172 = vst [vmem:[%s170] sm:$0xff] %v171
                %v173 = vld [vmem:[%s169 + $0x10] sm:$0xff]
                %174 = vst [vmem:[%s170 + $0x8] sm:$0xff] %v173
              $region41: #{camera_aware_forward.3} parent=35 // loop_footer
                %s168 = sadd.s32 1, %s164
              $region42: #{camera_aware_forward.3} parent=35 // loop_footer_branch
                %163 = sbr.rel target = $region38
              $region43: #{camera_aware_forward.3} parent=35 // loop_exit
                _
            $region36: #{camera_aware_forward.3} parent=27 // pred_fallthru
              _
          $region28: #{camera_aware_forward.3} parent=23 // pred_fallthru
            _
          %191 = vnop
        $region24: #{camera_aware_forward.3} parent=19 // pred_fallthru
          _
      $region20: #{camera_aware_forward.3} parent=5 // pred_fallthru
        _
      %p192 = scmp.le.s32.totalorder 1, %s10
      %p193 = scmp.lt.s32.totalorder %s10, 5
      %p194 = pnand %p192, %p193
      %p195 = pneg %p194
      // Predicated region
      $region59: #{camera_aware_forward.3} parent=5 // pred_check
        _
      $region60: #{camera_aware_forward.3} parent=5 // pred_check_branch
        %197 = sbr.rel (%p194) target = $region62
      $region61: #{camera_aware_forward.3} parent=5 // pred_region
        %s198 = ssub.s32 %s10, 1
        %s199 = sand.u32 %s37, 1
        %s200 = sand.u32 %s37, 1
        %s201 = smul.addr %s200, 16
        %s202 = scalar_lea.vmem [#allocation2], %s201
        // Predicated region
        $region63: #{camera_aware_forward.3} parent=61 // pred_check
          %p203 = pneg %p50
        $region64: #{camera_aware_forward.3} parent=61 // pred_check_branch
          %205 = sbr.rel (%p203) target = $region66
        $region65: #{camera_aware_forward.3} parent=61 // pred_region
          _
        $region66: #{camera_aware_forward.3} parent=61 // pred_fallthru
          _
        %s206 = sand.u32 %s37, 1
        %s207 = sand.u32 %s37, 1
        %s208 = smul.addr %s207, 16
        %s209 = scalar_lea.vmem [#allocation2], %s208
        %p210 = pneg %p50
        %p211 = pneg %p47
        %p212 = pneg %p71
        %p213 = pneg %p68
        %p214 = pneg %p97
        %p215 = pneg %p94
        %p216 = scmp.lt.s32.totalorder %s19, 1
        %s217 = scalar_select %p216, %s19, 1
        %s218 = smul.addr %s217, 4
        %s219 = smul.addr %s218, 8
        %s220 = scalar_lea.vmem %s2, %s219
        %p221 = pneg %p123
        %p222 = pneg %p120
        %p223 = scmp.lt.s32.totalorder %s19, 1
        %s224 = scalar_select %p223, %s19, 1
        %s225 = smul.addr %s224, 4
        %s226 = smul.addr %s225, 8
        %s227 = scalar_lea.vmem %s3, %s226
        %p228 = scmp.lt.s32.totalorder %s19, 1
        %s229 = scalar_select %p228, %s19, 1
        %s230 = smul.addr %s229, 4
        %s231 = smul.addr %s230, 8
        %s232 = scalar_lea.vmem %s2, %s231
        %p233 = scmp.lt.s32.totalorder %s19, 1
        %s234 = scalar_select %p233, %s19, 1
        %s235 = smul.addr %s234, 4
        %s236 = smul.addr %s235, 8
        %s237 = scalar_lea.vmem %s3, %s236
        %p239 = scmp.eq.s32.totalorder %s20, 0
        // Predicated region
        $region67: #{camera_aware_forward.3} parent=61 // pred_check
          %p240 = pneg %p239
        $region68: #{camera_aware_forward.3} parent=61 // pred_check_branch
          %242 = sbr.rel (%p240) target = $region70
        $region69: #{camera_aware_forward.3} parent=61 // pred_region
          %vm243 = vcmask 7168
          %244 = vst.msk [vmem:[%s232] sm:$0xff] %vm243, 0.0
          %245 = vst.msk [vmem:[%s232 + $0x8] sm:$0xff] %vm243, 0.0
          %246 = vst.msk [vmem:[%s232 + $0x10] sm:$0xff] %vm243, 0.0
          %247 = vst.msk [vmem:[%s232 + $0x18] sm:$0xff] %vm243, 0.0
          %248 = vst.msk [vmem:[%s237] sm:$0xff] %vm243, 0.0
          %249 = vst.msk [vmem:[%s237 + $0x8] sm:$0xff] %vm243, 0.0
          %250 = vst.msk [vmem:[%s237 + $0x10] sm:$0xff] %vm243, 0.0
          %251 = vst.msk [vmem:[%s237 + $0x18] sm:$0xff] %vm243, 0.0
        $region70: #{camera_aware_forward.3} parent=61 // pred_fallthru
          _
        %v252 = vld [vmem:[%s202] sm:$0xff]
        %v253 = vld [vmem:[%s202 + $0x8] sm:$0xff]
        %v254 = vpack.c.bf16 %v253, %v252
        %v255 = vld [vmem:[%s1] sm:$0xf]
        %v256 = vld [vmem:[%s1 + $0x4] sm:$0xf]
        %v257 = vld [vmem:[%s1 + $0x8] sm:$0xf]
        %v258 = vld [vmem:[%s1 + $0xc] sm:$0xf]
        %v263 = vunpack.c.l.b16 %v255
        %v264 = vunpack.c.l.b16 %v256
        %v265 = vunpack.c.l.b16 %v257
        %v266 = vunpack.c.l.b16 %v258
        %v267 = vpack.c.b16 %v264, %v263
        %v268 = vpack.c.b16 %v266, %v265
        %vm269 = vcmask 130048
        %v271 = vsel %vm269, %v267, 0
        %v274 = vsel %vm269, %v268, 0
        %276 = vmatprep.subr.bf16.mxu0 0
        %277 = vmatpush1.bf16.msra.mxu0 %v254
        %278 = vmatprep.subr.bf16.mxu0 0
        %279 = vmatpush1.bf16.msra.mxu0 0
        %280 = vmatprep.subr.bf16.mxu0 0
        %281 = vmatpush1.bf16.msra.mxu0 0
        %282 = vmatprep.subr.bf16.mxu0 0
        %283 = vmatpush1.bf16.msra.mxu0 0
        %284 = vmatprep.subr.bf16.mxu0 0
        %285 = vmatpush1.bf16.msra.mxu0 0
        %286 = vmatprep.subr.bf16.mxu0 0
        %287 = vmatpush1.bf16.msra.mxu0 0
        %288 = vmatprep.subr.bf16.mxu0 0
        %289 = vmatpush1.bf16.msra.mxu0 0
        %290 = vmatprep.subr.bf16.mxu0 0
        %291 = vmatpush1.bf16.msra.mxu0 0
        %292 = vmatprep.subr.bf16.mxu0 0
        %293 = vmatpush1.bf16.msra.mxu0 0
        %294 = vmatprep.subr.bf16.mxu0 0
        %295 = vmatpush1.bf16.msra.mxu0 0
        %296 = vmatprep.subr.bf16.mxu0 0
        %297 = vmatpush1.bf16.msra.mxu0 0
        %298 = vmatprep.subr.bf16.mxu0 0
        %299 = vmatpush1.bf16.msra.mxu0 0
        %300 = vmatprep.subr.bf16.mxu0 0
        %301 = vmatpush1.bf16.msra.mxu0 0
        %302 = vmatprep.subr.bf16.mxu0 0
        %303 = vmatpush1.bf16.msra.mxu0 0
        %304 = vmatprep.subr.bf16.mxu0 0
        %305 = vmatpush1.bf16.msra.mxu0 0
        %306 = vmatprep.subr.bf16.mxu0 0
        %307 = vmatpush1.bf16.msra.mxu0 0
        %308 = vmatprep.mubr.bf16.mxu0 0
        %309 = vmatmul.mubr.bf16.gmra.mrb[0].mxu0 %v271
        %v310 = vpop.f32.mrb[0].mxu0
        %v311 = vadd.f32 0.0, %v310
        %v312 = vpop.f32.mrb[0].mxu0
        %v313 = vpop.f32.mrb[0].mxu0
        %v314 = vadd.f32 0.0, %v313
        %v315 = vpop.f32.mrb[0].mxu0
        %316 = vmatprep.mubr.bf16.mxu0 0
        %317 = vmatmul.mubr.bf16.gmra.mrb[0].mxu0 %v274
        %v318 = vpop.f32.mrb[0].mxu0
        %v319 = vadd.f32 0.0, %v318
        %v320 = vpop.f32.mrb[0].mxu0
        %v321 = vpop.f32.mrb[0].mxu0
        %v322 = vadd.f32 0.0, %v321
        %v323 = vpop.f32.mrb[0].mxu0
        %324 = vdwg.mxu0
        %v325 = vld [vmem:[%s232] sm:$0xff]
        %v326 = vld [vmem:[%s232 + $0x8] sm:$0xff]
        %v327 = vld [vmem:[%s232 + $0x10] sm:$0xff]
        %v328 = vld [vmem:[%s232 + $0x18] sm:$0xff]
        %329 = vadd.xlane.f32.xlu0 %v311
        %v330 = vpop.xlane.xlu0 %329
        %331 = vadd.xlane.f32.xlu0 %v314
        %v332 = vpop.xlane.xlu0 %331
        %333 = vadd.xlane.f32.xlu0 %v319
        %v334 = vpop.xlane.xlu0 %333
        %335 = vadd.xlane.f32.xlu0 %v322
        %v336 = vpop.xlane.xlu0 %335
        %v337 = vadd.f32 %v325, %v330
        %v338 = vadd.f32 %v326, %v332
        %v339 = vadd.f32 %v327, %v334
        %v340 = vadd.f32 %v328, %v336
        %vm341 = vcmask 7168
        %342 = vst.msk [vmem:[%s232] sm:$0xff] %vm341, %v337
        %343 = vst.msk [vmem:[%s232 + $0x8] sm:$0xff] %vm341, %v338
        %344 = vst.msk [vmem:[%s232 + $0x10] sm:$0xff] %vm341, %v339
        %345 = vst.msk [vmem:[%s232 + $0x18] sm:$0xff] %vm341, %v340
        %v346 = vld [vmem:[%s237] sm:$0xff]
        %v347 = vld [vmem:[%s237 + $0x8] sm:$0xff]
        %v348 = vld [vmem:[%s237 + $0x10] sm:$0xff]
        %v349 = vld [vmem:[%s237 + $0x18] sm:$0xff]
        %v350 = vmul.f32 %v311, %v311
        %v351 = vmul.f32 %v314, %v314
        %v352 = vmul.f32 %v319, %v319
        %v353 = vmul.f32 %v322, %v322
        %354 = vadd.xlane.f32.xlu0 %v350
        %v355 = vpop.xlane.xlu0 %354
        %356 = vadd.xlane.f32.xlu0 %v351
        %v357 = vpop.xlane.xlu0 %356
        %358 = vadd.xlane.f32.xlu0 %v352
        %v359 = vpop.xlane.xlu0 %358
        %360 = vadd.xlane.f32.xlu0 %v353
        %v361 = vpop.xlane.xlu0 %360
        %v362 = vadd.f32 %v346, %v355
        %v363 = vadd.f32 %v347, %v357
        %v364 = vadd.f32 %v348, %v359
        %v365 = vadd.f32 %v349, %v361
        %366 = vst.msk [vmem:[%s237] sm:$0xff] %vm341, %v362
        %367 = vst.msk [vmem:[%s237 + $0x8] sm:$0xff] %vm341, %v363
        %368 = vst.msk [vmem:[%s237 + $0x10] sm:$0xff] %vm341, %v364
        %369 = vst.msk [vmem:[%s237 + $0x18] sm:$0xff] %vm341, %v365
        %p370 = scmp.lt.s32.totalorder %s19, 1
        %s371 = scalar_select %p370, %s19, 1
        %s372 = smul.addr %s371, 4
        %s373 = smul.addr %s372, 8
        %s374 = scalar_lea.vmem %s2, %s373
        %p375 = scmp.lt.s32.totalorder %s19, 1
        %s376 = scalar_select %p375, %s19, 1
        %s377 = smul.addr %s376, 4
        %s378 = smul.addr %s377, 8
        %s379 = scalar_lea.vmem %s3, %s378
        // Predicated region
        $region71: #{camera_aware_forward.3} parent=61 // pred_check
          %p380 = pneg %p94
        $region72: #{camera_aware_forward.3} parent=61 // pred_check_branch
          %382 = sbr.rel (%p380) target = $region74
        $region73: #{camera_aware_forward.3} parent=61 // pred_region
          _
        $region74: #{camera_aware_forward.3} parent=61 // pred_fallthru
          _
        // Predicated region
        $region75: #{camera_aware_forward.3} parent=61 // pred_check
          %p383 = pneg %p120
        $region76: #{camera_aware_forward.3} parent=61 // pred_check_branch
          %385 = sbr.rel (%p383) target = $region78
        $region77: #{camera_aware_forward.3} parent=61 // pred_region
          _
        $region78: #{camera_aware_forward.3} parent=61 // pred_fallthru
          _
      $region62: #{camera_aware_forward.3} parent=5 // pred_fallthru
        _
      %p386 = scmp.le.s32.totalorder 2, %s10
      // Predicated region
      $region79: #{camera_aware_forward.3} parent=5 // pred_check
        %p387 = pneg %p386
      $region80: #{camera_aware_forward.3} parent=5 // pred_check_branch
        %389 = sbr.rel (%p387) target = $region82
      $region81: #{camera_aware_forward.3} parent=5 // pred_region
        %s390 = ssub.s32 %s10, 2
        // Predicated region
        $region83: #{camera_aware_forward.3} parent=81 // pred_check
          %p391 = pneg %p100
        $region84: #{camera_aware_forward.3} parent=81 // pred_check_branch
          %393 = sbr.rel (%p391) target = $region86
        $region85: #{camera_aware_forward.3} parent=81 // pred_region
          %p394 = scmp.lt.s32.totalorder %s21, 1
          %s395 = scalar_select %p394, %s21, 1
          %s396 = smul.addr %s395, 4
          %s397 = smul.addr %s396, 8
          %s398 = scalar_lea.vmem %s2, %s397
        $region86: #{camera_aware_forward.3} parent=81 // pred_fallthru
          _
        // Predicated region
        $region87: #{camera_aware_forward.3} parent=81 // pred_check
          %p399 = pneg %p126
        $region88: #{camera_aware_forward.3} parent=81 // pred_check_branch
          %401 = sbr.rel (%p399) target = $region90
        $region89: #{camera_aware_forward.3} parent=81 // pred_region
          %p402 = scmp.lt.s32.totalorder %s21, 1
          %s403 = scalar_select %p402, %s21, 1
          %s404 = smul.addr %s403, 4
          %s405 = smul.addr %s404, 8
          %s406 = scalar_lea.vmem %s3, %s405
        $region90: #{camera_aware_forward.3} parent=81 // pred_fallthru
          _
      $region82: #{camera_aware_forward.3} parent=5 // pred_fallthru
        _
    $region6: #{camera_aware_forward.3} parent=1 // loop_footer
      %s14 = sadd.s32 1, %s10
    $region7: #{camera_aware_forward.3} parent=1 // loop_footer_branch
      %9 = sbr.rel target = $region3
    $region8: #{camera_aware_forward.3} parent=1 // loop_exit
      _

// kernel: camera_aware_forward.4
$region0: #{camera_aware_forward.4}
  #allocation0 [shape = 'u32[]', space=smem, size = 0x4, offset = 0x4, fixed_abs, tag = 'smem constant byte address 0x4 - core index']
  #allocation1 [shape = 'u32[144,128]{1,0:T(1,128)}', space=vmem, size = 0x12000, scoped, tag = 'internal scratch']
  %s0 = inlined_call_operand.vmem [shape: f32[2,16,256], index: 0, kind: input, shape index: {}]
  %s1 = inlined_call_operand.vmem [shape: bf16[32,16], index: 1, kind: input, shape index: {}]
  %s2 = inlined_call_operand.vmem [shape: f32[32,1], index: 2, kind: input, shape index: {}]
  %s3 = inlined_call_operand.vmem [shape: f32[32,1], index: 3, kind: input, shape index: {}]
  %s4 = inlined_call_operand.vmem [shape: f32[2,32,1], index: 4, kind: input, shape index: {}]
  %s5 = inlined_call_operand.vmem [shape: f32[2,32,1], index: 5, kind: input, shape index: {}]
  %s6 = inlined_call_operand.vmem [shape: bf16[32,32], index: 6, kind: input, shape index: {}]
  %s7 = inlined_call_operand.vmem [shape: f32[2,32,1], index: 7, kind: output, shape index: {0}]
  %s8 = inlined_call_operand.vmem [shape: f32[2,32,1], index: 8, kind: output, shape index: {1}]
  %9 = xla_tuple %s7, %s8
  %s10 = sld [smem:[#allocation0]]
  $region111: #{camera_aware_forward.4} parent=0
    _
  %s12 = ssub.s32 1, %s10
  %s13 = scalar_select 0, %s12, %s10
  $region1: #{camera_aware_forward.4} parent=0
    #allocation2 [shape = 'u8[16384]{0}', space=vmem, size = 0x4000, scoped, tag = 'input window, operand 0']
    loop: start=0, step=1, limit=6
    $region2: #{camera_aware_forward.4} parent=1 // loop_pre_header
      _
    $region3: #{camera_aware_forward.4} parent=1 // loop_header
      %s15 = sphi 0, %s19
      %p16 = scmp.ge.s32.totalorder %s15, 6
      %s22 = sphi 0, %s34
      %s23 = sphi 0, %s30
      %s24 = sphi 0, %s22
      %s25 = sphi 0, %s23
      %s26 = sphi 0, %s24
      %s27 = sphi 0, %s25
      %s39 = sphi 0, %s41
      %s42 = sphi 0, %s39
      %s43 = sphi 0, %s42
      %s59 = sphi 0, %s43
      %s63 = sphi 0, %s63
      %s65 = sphi 0, %s63
      %s66 = sphi 0, %s65
      %s80 = sphi 0, %s66
      %s84 = sphi 0, %s84
      %s86 = sphi 0, %s84
      %s87 = sphi 0, %s86
      %s101 = sphi 0, %s87
      %s105 = sphi 0, %s105
      %s107 = sphi 0, %s105
      %s108 = sphi 0, %s107
      %s122 = sphi 0, %s108
      %s126 = sphi 0, %s126
      %s128 = sphi 0, %s126
      %s129 = sphi 0, %s128
      %s143 = sphi 0, %s129
      %s147 = sphi 0, %s147
      %s149 = sphi 0, %s147
      %s150 = sphi 0, %s149
      %s164 = sphi 0, %s150
      %s168 = sphi 0, %s168
      %s170 = sphi 0, %s168
      %s171 = sphi 0, %s170
      %s185 = sphi 0, %s171
      %s191 = sphi 0, %s193
      %s194 = sphi 0, %s191
      %s195 = sphi 0, %s194
      %s211 = sphi 0, %s195
      %s217 = sphi 0, %s219
      %s220 = sphi 0, %s217
      %s221 = sphi 0, %s220
      %s237 = sphi 0, %s221
    $region4: #{camera_aware_forward.4} parent=1 // loop_header_branch
      %18 = sbr.rel (%p16) target = $region8
    $region5: #{camera_aware_forward.4} parent=1 // loop_body
      %s20 = ssub.s32 %s15, 1
      %s21 = ssub.s32 %s15, 2
      %s28 = sadd.s32 1, %s23
      %p29 = scmp.ge.s32.totalorder %s28, 2
      %s30 = scalar_select %p29, 0, %s28
      %s31 = sadd.s32 1, %s22
      %s32 = scalar_select %p29, %s31, %s22
      %p33 = scmp.ge.s32.totalorder %s32, 2
      %s34 = scalar_select %p33, 0, %s32
      %s35 = ssub.s32 %s22, %s34
      %s36 = ssub.s32 %s23, %s30
      %s37 = sor.u32 %s35, %s36
      %p38 = scmp.eq.s32.totalorder %s37, 0
      %s40 = sadd.s32 %s39, 1
      %s41 = scalar_select %p38, %s39, %s40
      %p44 = pneg %p38
      %p45 = scmp.eq.s32.totalorder %s15, 3
      %p46 = por %p44, %p45
      %p47 = scmp.ne.s32.totalorder %s39, %s42
      %p48 = scmp.eq.s32.totalorder %s15, 0
      %p49 = por %p47, %p48
      %p50 = scmp.ne.s32.totalorder %s39, %s42
      %p51 = scmp.eq.s32.totalorder %s20, 3
      %p52 = por %p50, %p51
      %p53 = scmp.ne.s32.totalorder %s42, %s43
      %p54 = scmp.eq.s32.totalorder %s20, 0
      %p55 = por %p53, %p54
      %p56 = scmp.ne.s32.totalorder %s42, %s43
      %p57 = scmp.eq.s32.totalorder %s21, 3
      %p58 = por %p56, %p57
      %p60 = scmp.ne.s32.totalorder %s43, %s59
      %p61 = scmp.eq.s32.totalorder %s21, 0
      %p62 = por %p60, %p61
      %s64 = sadd.s32 %s63, 1
      %p67 = scmp.eq.s32.totalorder %s15, 3
      %p68 = scmp.ne.s32.totalorder %s63, %s65
      %p69 = scmp.eq.s32.totalorder %s15, 0
      %p70 = por %p68, %p69
      %p71 = scmp.ne.s32.totalorder %s63, %s65
      %p72 = scmp.eq.s32.totalorder %s20, 3
      %p73 = por %p71, %p72
      %p74 = scmp.ne.s32.totalorder %s65, %s66
      %p75 = scmp.eq.s32.totalorder %s20, 0
      %p76 = por %p74, %p75
      %p77 = scmp.ne.s32.totalorder %s65, %s66
      %p78 = scmp.eq.s32.totalorder %s21, 3
      %p79 = por %p77, %p78
      %p81 = scmp.ne.s32.totalorder %s66, %s80
      %p82 = scmp.eq.s32.totalorder %s21, 0
      %p83 = por %p81, %p82
      %s85 = sadd.s32 %s84, 1
      %p88 = scmp.eq.s32.totalorder %s15, 3
      %p89 = scmp.ne.s32.totalorder %s84, %s86
      %p90 = scmp.eq.s32.totalorder %s15, 0
      %p91 = por %p89, %p90
      %p92 = scmp.ne.s32.totalorder %s84, %s86
      %p93 = scmp.eq.s32.totalorder %s20, 3
      %p94 = por %p92, %p93
      %p95 = scmp.ne.s32.totalorder %s86, %s87
      %p96 = scmp.eq.s32.totalorder %s20, 0
      %p97 = por %p95, %p96
      %p98 = scmp.ne.s32.totalorder %s86, %s87
      %p99 = scmp.eq.s32.totalorder %s21, 3
      %p100 = por %p98, %p99
      %p102 = scmp.ne.s32.totalorder %s87, %s101
      %p103 = scmp.eq.s32.totalorder %s21, 0
      %p104 = por %p102, %p103
      %s106 = sadd.s32 %s105, 1
      %p109 = scmp.eq.s32.totalorder %s15, 3
      %p110 = scmp.ne.s32.totalorder %s105, %s107
      %p111 = scmp.eq.s32.totalorder %s15, 0
      %p112 = por %p110, %p111
      %p113 = scmp.ne.s32.totalorder %s105, %s107
      %p114 = scmp.eq.s32.totalorder %s20, 3
      %p115 = por %p113, %p114
      %p116 = scmp.ne.s32.totalorder %s107, %s108
      %p117 = scmp.eq.s32.totalorder %s20, 0
      %p118 = por %p116, %p117
      %p119 = scmp.ne.s32.totalorder %s107, %s108
      %p120 = scmp.eq.s32.totalorder %s21, 3
      %p121 = por %p119, %p120
      %p123 = scmp.ne.s32.totalorder %s108, %s122
      %p124 = scmp.eq.s32.totalorder %s21, 0
      %p125 = por %p123, %p124
      %s127 = sadd.s32 %s126, 1
      %p130 = scmp.eq.s32.totalorder %s15, 3
      %p131 = scmp.ne.s32.totalorder %s126, %s128
      %p132 = scmp.eq.s32.totalorder %s15, 0
      %p133 = por %p131, %p132
      %p134 = scmp.ne.s32.totalorder %s126, %s128
      %p135 = scmp.eq.s32.totalorder %s20, 3
      %p136 = por %p134, %p135
      %p137 = scmp.ne.s32.totalorder %s128, %s129
      %p138 = scmp.eq.s32.totalorder %s20, 0
      %p139 = por %p137, %p138
      %p140 = scmp.ne.s32.totalorder %s128, %s129
      %p141 = scmp.eq.s32.totalorder %s21, 3
      %p142 = por %p140, %p141
      %p144 = scmp.ne.s32.totalorder %s129, %s143
      %p145 = scmp.eq.s32.totalorder %s21, 0
      %p146 = por %p144, %p145
      %s148 = sadd.s32 %s147, 1
      %p151 = scmp.eq.s32.totalorder %s15, 3
      %p152 = scmp.ne.s32.totalorder %s147, %s149
      %p153 = scmp.eq.s32.totalorder %s15, 0
      %p154 = por %p152, %p153
      %p155 = scmp.ne.s32.totalorder %s147, %s149
      %p156 = scmp.eq.s32.totalorder %s20, 3
      %p157 = por %p155, %p156
      %p158 = scmp.ne.s32.totalorder %s149, %s150
      %p159 = scmp.eq.s32.totalorder %s20, 0
      %p160 = por %p158, %p159
      %p161 = scmp.ne.s32.totalorder %s149, %s150
      %p162 = scmp.eq.s32.totalorder %s21, 3
      %p163 = por %p161, %p162
      %p165 = scmp.ne.s32.totalorder %s150, %s164
      %p166 = scmp.eq.s32.totalorder %s21, 0
      %p167 = por %p165, %p166
      %s169 = sadd.s32 %s168, 1
      %p172 = scmp.eq.s32.totalorder %s15, 3
      %p173 = scmp.ne.s32.totalorder %s168, %s170
      %p174 = scmp.eq.s32.totalorder %s15, 0
      %p175 = por %p173, %p174
      %p176 = scmp.ne.s32.totalorder %s168, %s170
      %p177 = scmp.eq.s32.totalorder %s20, 3
      %p178 = por %p176, %p177
      %p179 = scmp.ne.s32.totalorder %s170, %s171
      %p180 = scmp.eq.s32.totalorder %s20, 0
      %p181 = por %p179, %p180
      %p182 = scmp.ne.s32.totalorder %s170, %s171
      %p183 = scmp.eq.s32.totalorder %s21, 3
      %p184 = por %p182, %p183
      %p186 = scmp.ne.s32.totalorder %s171, %s185
      %p187 = scmp.eq.s32.totalorder %s21, 0
      %p188 = por %p186, %p187
      %s189 = ssub.s32 %s22, %s34
      %p190 = scmp.eq.s32.totalorder %s189, 0
      %s192 = sadd.s32 %s191, 1
      %s193 = scalar_select %p190, %s191, %s192
      %p196 = pneg %p190
      %p197 = scmp.eq.s32.totalorder %s15, 3
      %p198 = por %p196, %p197
      %p199 = scmp.ne.s32.totalorder %s191, %s194
      %p200 = scmp.eq.s32.totalorder %s15, 0
      %p201 = por %p199, %p200
      %p202 = scmp.ne.s32.totalorder %s191, %s194
      %p203 = scmp.eq.s32.totalorder %s20, 3
      %p204 = por %p202, %p203
      %p205 = scmp.ne.s32.totalorder %s194, %s195
      %p206 = scmp.eq.s32.totalorder %s20, 0
      %p207 = por %p205, %p206
      %p208 = scmp.ne.s32.totalorder %s194, %s195
      %p209 = scmp.eq.s32.totalorder %s21, 3
      %p210 = por %p208, %p209
      %p212 = scmp.ne.s32.totalorder %s195, %s211
      %p213 = scmp.eq.s32.totalorder %s21, 0
      %p214 = por %p212, %p213
      %s215 = ssub.s32 %s22, %s34
      %p216 = scmp.eq.s32.totalorder %s215, 0
      %s218 = sadd.s32 %s217, 1
      %s219 = scalar_select %p216, %s217, %s218
      %p222 = pneg %p216
      %p223 = scmp.eq.s32.totalorder %s15, 3
      %p224 = por %p222, %p223
      %p225 = scmp.ne.s32.totalorder %s217, %s220
      %p226 = scmp.eq.s32.totalorder %s15, 0
      %p227 = por %p225, %p226
      %p228 = scmp.ne.s32.totalorder %s217, %s220
      %p229 = scmp.eq.s32.totalorder %s20, 3
      %p230 = por %p228, %p229
      %p231 = scmp.ne.s32.totalorder %s220, %s221
      %p232 = scmp.eq.s32.totalorder %s20, 0
      %p233 = por %p231, %p232
      %p234 = scmp.ne.s32.totalorder %s220, %s221
      %p235 = scmp.eq.s32.totalorder %s21, 3
      %p236 = por %p234, %p235
      %p238 = scmp.ne.s32.totalorder %s221, %s237
      %p239 = scmp.eq.s32.totalorder %s21, 0
      %p240 = por %p238, %p239
      %p241 = scmp.le.s32.totalorder 1, %s15
      %p242 = scmp.lt.s32.totalorder %s15, 5
      %p243 = pnand %p241, %p242
      %p244 = pneg %p243
      // Predicated region
      $region9: #{camera_aware_forward.4} parent=5 // pred_check
        _
      $region10: #{camera_aware_forward.4} parent=5 // pred_check_branch
        %246 = sbr.rel (%p243) target = $region12
      $region11: #{camera_aware_forward.4} parent=5 // pred_region
        %s247 = ssub.s32 %s15, 1
        // Predicated region
        $region13: #{camera_aware_forward.4} parent=11 // pred_check
          %p248 = pneg %p76
        $region14: #{camera_aware_forward.4} parent=11 // pred_check_branch
          %250 = sbr.rel (%p248) target = $region16
        $region15: #{camera_aware_forward.4} parent=11 // pred_region
          _
        $region16: #{camera_aware_forward.4} parent=11 // pred_fallthru
          _
        // Predicated region
        $region17: #{camera_aware_forward.4} parent=11 // pred_check
          %p251 = pneg %p97
        $region18: #{camera_aware_forward.4} parent=11 // pred_check_branch
          %253 = sbr.rel (%p251) target = $region20
        $region19: #{camera_aware_forward.4} parent=11 // pred_region
          _
        $region20: #{camera_aware_forward.4} parent=11 // pred_fallthru
          _
        // Predicated region
        $region21: #{camera_aware_forward.4} parent=11 // pred_check
          %p254 = pneg %p118
        $region22: #{camera_aware_forward.4} parent=11 // pred_check_branch
          %256 = sbr.rel (%p254) target = $region24
        $region23: #{camera_aware_forward.4} parent=11 // pred_region
          _
        $region24: #{camera_aware_forward.4} parent=11 // pred_fallthru
          _
        // Predicated region
        $region25: #{camera_aware_forward.4} parent=11 // pred_check
          %p257 = pneg %p139
        $region26: #{camera_aware_forward.4} parent=11 // pred_check_branch
          %259 = sbr.rel (%p257) target = $region28
        $region27: #{camera_aware_forward.4} parent=11 // pred_region
          _
        $region28: #{camera_aware_forward.4} parent=11 // pred_fallthru
          _
        // Predicated region
        $region29: #{camera_aware_forward.4} parent=11 // pred_check
          %p260 = pneg %p160
        $region30: #{camera_aware_forward.4} parent=11 // pred_check_branch
          %262 = sbr.rel (%p260) target = $region32
        $region31: #{camera_aware_forward.4} parent=11 // pred_region
          _
        $region32: #{camera_aware_forward.4} parent=11 // pred_fallthru
          _
        // Predicated region
        $region33: #{camera_aware_forward.4} parent=11 // pred_check
          %p263 = pneg %p181
        $region34: #{camera_aware_forward.4} parent=11 // pred_check_branch
          %265 = sbr.rel (%p263) target = $region36
        $region35: #{camera_aware_forward.4} parent=11 // pred_region
          _
        $region36: #{camera_aware_forward.4} parent=11 // pred_fallthru
          _
      $region12: #{camera_aware_forward.4} parent=5 // pred_fallthru
        _
      %p266 = scmp.lt.s32.totalorder %s15, 4
      // Predicated region
      $region37: #{camera_aware_forward.4} parent=5 // pred_check
        %p267 = pneg %p266
      $region38: #{camera_aware_forward.4} parent=5 // pred_check_branch
        %269 = sbr.rel (%p267) target = $region40
      $region39: #{camera_aware_forward.4} parent=5 // pred_region
        // Predicated region
        $region41: #{camera_aware_forward.4} parent=39 // pred_check
          %p270 = pneg %p49
        $region42: #{camera_aware_forward.4} parent=39 // pred_check_branch
          %272 = sbr.rel (%p270) target = $region44
        $region43: #{camera_aware_forward.4} parent=39 // pred_region
          %s273 = sand.u32 %s39, 1
          %s274 = sand.u32 %s39, 1
          %s275 = smul.addr %s274, 16
          %s276 = scalar_lea.vmem [#allocation2], %s275
          %s277 = smul.addr %s22, 4
          %s278 = sadd.s32 %s23, %s277
          %s279 = smul.addr %s278, 8
          %s280 = scalar_lea.vmem %s0, %s279
          // Predicated region
          $region45: #{camera_aware_forward.4} parent=43 // pred_check
            _
          $region46: #{camera_aware_forward.4} parent=43 // pred_check_branch
            %282 = sbr.rel (0) target = $region48
          $region47: #{camera_aware_forward.4} parent=43 // pred_region
            // Predicated region
            $region49: #{camera_aware_forward.4} parent=47 // pred_check
              _
            $region50: #{camera_aware_forward.4} parent=47 // pred_check_branch
              %284 = sbr.rel (0) target = $region52
            $region51: #{camera_aware_forward.4} parent=47 // pred_region
              // Predicated region
              $region64: #{camera_aware_forward.4} parent=51 // pred_check
                _
              $region65: #{camera_aware_forward.4} parent=51 // pred_check_branch
                %301 = sbr.rel (0) target = $region67
              $region66: #{camera_aware_forward.4} parent=51 // pred_region
                loop: start=0, step=1, limit=1
                $region68: #{camera_aware_forward.4} parent=66 // loop_pre_header
                  _
                $region69: #{camera_aware_forward.4} parent=66 // loop_header
                  %s303 = sphi 0, %s307
                  %p304 = scmp.ge.s32.totalorder %s303, 1
                  %s308 = sphi %s280, %s280
                  %s309 = sphi %s276, %s276
                $region70: #{camera_aware_forward.4} parent=66 // loop_header_branch
                  %306 = sbr.rel (%p304) target = $region74
                $region71: #{camera_aware_forward.4} parent=66 // loop_body
                  %v310 = vld [vmem:[%s308] sm:$0xff]
                  %311 = vst [vmem:[%s309] sm:$0xff] %v310
                  %v312 = vld [vmem:[%s308 + $0x10] sm:$0xff]
                  %313 = vst [vmem:[%s309 + $0x8] sm:$0xff] %v312
                $region72: #{camera_aware_forward.4} parent=66 // loop_footer
                  %s307 = sadd.s32 1, %s303
                $region73: #{camera_aware_forward.4} parent=66 // loop_footer_branch
                  %302 = sbr.rel target = $region69
                $region74: #{camera_aware_forward.4} parent=66 // loop_exit
                  _
              $region67: #{camera_aware_forward.4} parent=51 // pred_fallthru
                _
              // Predicated region
              $region75: #{camera_aware_forward.4} parent=51 // pred_check
                _
              $region76: #{camera_aware_forward.4} parent=51 // pred_check_branch
                %315 = sbr.rel target = $region78
              $region77: #{camera_aware_forward.4} parent=51 // pred_region
                _
              $region78: #{camera_aware_forward.4} parent=51 // pred_fallthru
                _
            $region52: #{camera_aware_forward.4} parent=47 // pred_fallthru
              _
            // Predicated region
            $region53: #{camera_aware_forward.4} parent=47 // pred_check
              _
            $region54: #{camera_aware_forward.4} parent=47 // pred_check_branch
              %286 = sbr.rel target = $region56
            $region55: #{camera_aware_forward.4} parent=47 // pred_region
              loop: start=0, step=1, limit=1
              $region57: #{camera_aware_forward.4} parent=55 // loop_pre_header
                _
              $region58: #{camera_aware_forward.4} parent=55 // loop_header
                %s289 = sphi 0, %s293
                %p290 = scmp.ge.s32.totalorder %s289, 1
                %s294 = sphi %s280, %s280
                %s295 = sphi %s276, %s276
              $region59: #{camera_aware_forward.4} parent=55 // loop_header_branch
                %292 = sbr.rel (%p290) target = $region63
              $region60: #{camera_aware_forward.4} parent=55 // loop_body
                %v296 = vld [vmem:[%s294] sm:$0xff]
                %297 = vst [vmem:[%s295] sm:$0xff] %v296
                %v298 = vld [vmem:[%s294 + $0x10] sm:$0xff]
                %299 = vst [vmem:[%s295 + $0x8] sm:$0xff] %v298
              $region61: #{camera_aware_forward.4} parent=55 // loop_footer
                %s293 = sadd.s32 1, %s289
              $region62: #{camera_aware_forward.4} parent=55 // loop_footer_branch
                %288 = sbr.rel target = $region58
              $region63: #{camera_aware_forward.4} parent=55 // loop_exit
                _
            $region56: #{camera_aware_forward.4} parent=47 // pred_fallthru
              _
          $region48: #{camera_aware_forward.4} parent=43 // pred_fallthru
            _
          %316 = vnop
        $region44: #{camera_aware_forward.4} parent=39 // pred_fallthru
          _
      $region40: #{camera_aware_forward.4} parent=5 // pred_fallthru
        _
      %p317 = scmp.le.s32.totalorder 1, %s15
      %p318 = scmp.lt.s32.totalorder %s15, 5
      %p319 = pnand %p317, %p318
      %p320 = pneg %p319
      // Predicated region
      $region79: #{camera_aware_forward.4} parent=5 // pred_check
        _
      $region80: #{camera_aware_forward.4} parent=5 // pred_check_branch
        %322 = sbr.rel (%p319) target = $region82
      $region81: #{camera_aware_forward.4} parent=5 // pred_region
        %s323 = ssub.s32 %s15, 1
        %s324 = sand.u32 %s42, 1
        %s325 = sand.u32 %s42, 1
        %s326 = smul.addr %s325, 16
        %s327 = scalar_lea.vmem [#allocation2], %s326
        // Predicated region
        $region83: #{camera_aware_forward.4} parent=81 // pred_check
          %p328 = pneg %p55
        $region84: #{camera_aware_forward.4} parent=81 // pred_check_branch
          %330 = sbr.rel (%p328) target = $region86
        $region85: #{camera_aware_forward.4} parent=81 // pred_region
          _
        $region86: #{camera_aware_forward.4} parent=81 // pred_fallthru
          _
        %s331 = sand.u32 %s42, 1
        %s332 = sand.u32 %s42, 1
        %s333 = smul.addr %s332, 16
        %s334 = scalar_lea.vmem [#allocation2], %s333
        %p335 = pneg %p55
        %p336 = pneg %p52
        %p337 = pneg %p76
        %p338 = pneg %p73
        %p339 = pneg %p97
        %p340 = pneg %p94
        %p341 = pneg %p118
        %p342 = pneg %p115
        %p343 = pneg %p139
        %p344 = pneg %p136
        %p345 = pneg %p160
        %p346 = pneg %p157
        %p347 = pneg %p181
        %p348 = pneg %p178
        %p349 = pneg %p207
        %p350 = pneg %p204
        %p351 = scmp.lt.s32.totalorder %s24, 1
        %s352 = scalar_select %p351, %s24, 1
        %s353 = smul.addr %s352, 4
        %s354 = smul.addr %s353, 8
        %s355 = scalar_lea.vmem %s7, %s354
        %p356 = pneg %p233
        %p357 = pneg %p230
        %p358 = scmp.lt.s32.totalorder %s24, 1
        %s359 = scalar_select %p358, %s24, 1
        %s360 = smul.addr %s359, 4
        %s361 = smul.addr %s360, 8
        %s362 = scalar_lea.vmem %s8, %s361
        %p363 = scmp.lt.s32.totalorder %s24, 1
        %s364 = scalar_select %p363, %s24, 1
        %s365 = smul.addr %s364, 4
        %s366 = smul.addr %s365, 8
        %s367 = scalar_lea.vmem %s7, %s366
        %p368 = scmp.lt.s32.totalorder %s24, 1
        %s369 = scalar_select %p368, %s24, 1
        %s370 = smul.addr %s369, 4
        %s371 = smul.addr %s370, 8
        %s372 = scalar_lea.vmem %s8, %s371
        %p374 = scmp.eq.s32.totalorder %s25, 0
        // Predicated region
        $region87: #{camera_aware_forward.4} parent=81 // pred_check
          %p375 = pneg %p374
        $region88: #{camera_aware_forward.4} parent=81 // pred_check_branch
          %377 = sbr.rel (%p375) target = $region90
        $region89: #{camera_aware_forward.4} parent=81 // pred_region
          %vm378 = vcmask 7168
          %379 = vst.msk [vmem:[%s367] sm:$0xff] %vm378, 0.0
          %380 = vst.msk [vmem:[%s367 + $0x8] sm:$0xff] %vm378, 0.0
          %381 = vst.msk [vmem:[%s367 + $0x10] sm:$0xff] %vm378, 0.0
          %382 = vst.msk [vmem:[%s367 + $0x18] sm:$0xff] %vm378, 0.0
          %383 = vst.msk [vmem:[%s372] sm:$0xff] %vm378, 0.0
          %384 = vst.msk [vmem:[%s372 + $0x8] sm:$0xff] %vm378, 0.0
          %385 = vst.msk [vmem:[%s372 + $0x10] sm:$0xff] %vm378, 0.0
          %386 = vst.msk [vmem:[%s372 + $0x18] sm:$0xff] %vm378, 0.0
        $region90: #{camera_aware_forward.4} parent=81 // pred_fallthru
          _
        %v387 = vld [vmem:[%s4] sm:$0xff]
        %v388 = vld [vmem:[%s4 + $0x8] sm:$0xff]
        %v389 = vld [vmem:[%s4 + $0x10] sm:$0xff]
        %v390 = vld [vmem:[%s4 + $0x18] sm:$0xff]
        %v391 = vld [vmem:[%s4 + $0x20] sm:$0xff]
        %v392 = vld [vmem:[%s4 + $0x28] sm:$0xff]
        %v393 = vld [vmem:[%s4 + $0x30] sm:$0xff]
        %v394 = vld [vmem:[%s4 + $0x38] sm:$0xff]
        %vm395 = vcmask 7168
        %v396 = vsel %vm395, %v387, 0.0
        %v397 = vsel %vm395, %v391, 0.0
        %v398 = vadd.f32 %v396, %v397
        %v399 = vsel %vm395, %v388, 0.0
        %v400 = vsel %vm395, %v392, 0.0
        %v401 = vadd.f32 %v399, %v400
        %v402 = vsel %vm395, %v389, 0.0
        %v403 = vsel %vm395, %v393, 0.0
        %v404 = vadd.f32 %v402, %v403
        %v405 = vsel %vm395, %v390, 0.0
        %v406 = vsel %vm395, %v394, 0.0
        %v407 = vadd.f32 %v405, %v406
        %v408 = vld [vmem:[%s5] sm:$0xff]
        %v409 = vld [vmem:[%s5 + $0x8] sm:$0xff]
        %v410 = vld [vmem:[%s5 + $0x10] sm:$0xff]
        %v411 = vld [vmem:[%s5 + $0x18] sm:$0xff]
        %v412 = vld [vmem:[%s5 + $0x20] sm:$0xff]
        %v413 = vld [vmem:[%s5 + $0x28] sm:$0xff]
        %v414 = vld [vmem:[%s5 + $0x30] sm:$0xff]
        %v415 = vld [vmem:[%s5 + $0x38] sm:$0xff]
        %v416 = vsel %vm395, %v408, 0.0
        %v417 = vsel %vm395, %v412, 0.0
        %v418 = vadd.f32 %v416, %v417
        %v419 = vsel %vm395, %v409, 0.0
        %v420 = vsel %vm395, %v413, 0.0
        %v421 = vadd.f32 %v419, %v420
        %v422 = vsel %vm395, %v410, 0.0
        %v423 = vsel %vm395, %v414, 0.0
        %v424 = vadd.f32 %v422, %v423
        %v425 = vsel %vm395, %v411, 0.0
        %v426 = vsel %vm395, %v415, 0.0
        %v427 = vadd.f32 %v425, %v426
        %v428 = vmul.f32 %v398, 0.001953125
        %v429 = vmul.f32 %v401, 0.001953125
        %v430 = vmul.f32 %v404, 0.001953125
        %v431 = vmul.f32 %v407, 0.001953125
        %v432 = vmul.f32 %v418, 0.001953125
        %v433 = vmul.f32 %v421, 0.001953125
        %v434 = vmul.f32 %v424, 0.001953125
        %v435 = vmul.f32 %v427, 0.001953125
        %v436 = vmul.f32 %v428, %v428
        %v437 = vmul.f32 %v429, %v429
        %v438 = vmul.f32 %v430, %v430
        %v439 = vmul.f32 %v431, %v431
        %v440 = vsub.f32 %v432, %v436
        %v441 = vsub.f32 %v433, %v437
        %v442 = vsub.f32 %v434, %v438
        %v443 = vsub.f32 %v435, %v439
        %v444 = vmax.f32 %v440, 0.0
        %v445 = vmax.f32 %v441, 0.0
        %v446 = vmax.f32 %v442, 0.0
        %v447 = vmax.f32 %v443, 0.0
        %v448 = vld [vmem:[%s2] sm:$0xff]
        %v449 = vld [vmem:[%s2 + $0x8] sm:$0xff]
        %v450 = vld [vmem:[%s2 + $0x10] sm:$0xff]
        %v451 = vld [vmem:[%s2 + $0x18] sm:$0xff]
        %v452 = vadd.f32 %v444, 1e-05
        %v453 = vadd.f32 %v445, 1e-05
        %v454 = vadd.f32 %v446, 1e-05
        %v455 = vadd.f32 %v447, 1e-05
        %v456 = vrsqrt.pop %v452
        %v457 = vrsqrt.pop %v453
        %v458 = vrsqrt.pop %v454
        %v459 = vrsqrt.pop %v455
        %v460 = vmul.f32 %v448, %v456
        %v461 = vmul.f32 %v449, %v457
        %v462 = vmul.f32 %v450, %v458
        %v463 = vmul.f32 %v451, %v459
        %v464 = vld [vmem:[%s3] sm:$0xff]
        %v465 = vld [vmem:[%s3 + $0x8] sm:$0xff]
        %v466 = vld [vmem:[%s3 + $0x10] sm:$0xff]
        %v467 = vld [vmem:[%s3 + $0x18] sm:$0xff]
        %v468 = vmul.f32 %v428, %v460
        %v469 = vmul.f32 %v429, %v461
        %v470 = vmul.f32 %v430, %v462
        %v471 = vmul.f32 %v431, %v463
        %v472 = vsub.f32 %v464, %v468
        %v473 = vsub.f32 %v465, %v469
        %v474 = vsub.f32 %v466, %v470
        %v475 = vsub.f32 %v467, %v471
        %v476 = vld [vmem:[%s327] sm:$0xff]
        %v477 = vld [vmem:[%s327 + $0x8] sm:$0xff]
        %v478 = vpack.c.bf16 %v477, %v476
        %v479 = vld [vmem:[%s1] sm:$0xf]
        %v480 = vld [vmem:[%s1 + $0x4] sm:$0xf]
        %v481 = vld [vmem:[%s1 + $0x8] sm:$0xf]
        %v482 = vld [vmem:[%s1 + $0xc] sm:$0xf]
        %v487 = vunpack.c.l.b16 %v479
        %v488 = vunpack.c.l.b16 %v480
        %v489 = vunpack.c.l.b16 %v481
        %v490 = vunpack.c.l.b16 %v482
        %v491 = vpack.c.b16 %v488, %v487
        %v492 = vpack.c.b16 %v490, %v489
        %vm493 = vcmask 130048
        %v495 = vsel %vm493, %v491, 0
        %v498 = vsel %vm493, %v492, 0
        %500 = vmatprep.subr.bf16.mxu0 0
        %501 = vmatpush1.bf16.msra.mxu0 %v478
        %502 = vmatprep.subr.bf16.mxu0 0
        %503 = vmatpush1.bf16.msra.mxu0 0
        %504 = vmatprep.subr.bf16.mxu0 0
        %505 = vmatpush1.bf16.msra.mxu0 0
        %506 = vmatprep.subr.bf16.mxu0 0
        %507 = vmatpush1.bf16.msra.mxu0 0
        %508 = vmatprep.subr.bf16.mxu0 0
        %509 = vmatpush1.bf16.msra.mxu0 0
        %510 = vmatprep.subr.bf16.mxu0 0
        %511 = vmatpush1.bf16.msra.mxu0 0
        %512 = vmatprep.subr.bf16.mxu0 0
        %513 = vmatpush1.bf16.msra.mxu0 0
        %514 = vmatprep.subr.bf16.mxu0 0
        %515 = vmatpush1.bf16.msra.mxu0 0
        %516 = vmatprep.subr.bf16.mxu0 0
        %517 = vmatpush1.bf16.msra.mxu0 0
        %518 = vmatprep.subr.bf16.mxu0 0
        %519 = vmatpush1.bf16.msra.mxu0 0
        %520 = vmatprep.subr.bf16.mxu0 0
        %521 = vmatpush1.bf16.msra.mxu0 0
        %522 = vmatprep.subr.bf16.mxu0 0
        %523 = vmatpush1.bf16.msra.mxu0 0
        %524 = vmatprep.subr.bf16.mxu0 0
        %525 = vmatpush1.bf16.msra.mxu0 0
        %526 = vmatprep.subr.bf16.mxu0 0
        %527 = vmatpush1.bf16.msra.mxu0 0
        %528 = vmatprep.subr.bf16.mxu0 0
        %529 = vmatpush1.bf16.msra.mxu0 0
        %530 = vmatprep.subr.bf16.mxu0 0
        %531 = vmatpush1.bf16.msra.mxu0 0
        %532 = vmatprep.mubr.bf16.mxu0 0
        %533 = vmatmul.mubr.bf16.gmra.mrb[0].mxu0 %v495
        %v534 = vpop.f32.mrb[0].mxu0
        %v535 = vadd.f32 0.0, %v534
        %v536 = vpop.f32.mrb[0].mxu0
        %v537 = vpop.f32.mrb[0].mxu0
        %v538 = vadd.f32 0.0, %v537
        %v539 = vpop.f32.mrb[0].mxu0
        %540 = vmatprep.mubr.bf16.mxu0 0
        %541 = vmatmul.mubr.bf16.gmra.mrb[0].mxu0 %v498
        %v542 = vpop.f32.mrb[0].mxu0
        %v543 = vadd.f32 0.0, %v542
        %v544 = vpop.f32.mrb[0].mxu0
        %v545 = vpop.f32.mrb[0].mxu0
        %v546 = vadd.f32 0.0, %v545
        %v547 = vpop.f32.mrb[0].mxu0
        %548 = vdwg.mxu0
        %550 = vset.pattern.permute.xlu0 0
        %551 = vperm.xlu0 %550, %v460
        %v552 = vpop.permute.xlu0 %551
        %555 = vset.pattern.permute.xlu0 0
        %556 = vperm.xlu0 %555, %v461
        %v557 = vpop.permute.xlu0 %556
        %560 = vset.pattern.permute.xlu0 0
        %561 = vperm.xlu0 %560, %v462
        %v562 = vpop.permute.xlu0 %561
        %565 = vset.pattern.permute.xlu0 0
        %566 = vperm.xlu0 %565, %v463
        %v567 = vpop.permute.xlu0 %566
        %v569 = vmul.f32 %v535, %v552
        %v570 = vmul.f32 %v538, %v557
        %v571 = vmul.f32 %v543, %v562
        %v572 = vmul.f32 %v546, %v567
        %574 = vset.pattern.permute.xlu0 0
        %575 = vperm.xlu0 %574, %v472
        %v576 = vpop.permute.xlu0 %575
        %579 = vset.pattern.permute.xlu0 0
        %580 = vperm.xlu0 %579, %v473
        %v581 = vpop.permute.xlu0 %580
        %584 = vset.pattern.permute.xlu0 0
        %585 = vperm.xlu0 %584, %v474
        %v586 = vpop.permute.xlu0 %585
        %589 = vset.pattern.permute.xlu0 0
        %590 = vperm.xlu0 %589, %v475
        %v591 = vpop.permute.xlu0 %590
        %v593 = vadd.f32 %v569, %v576
        %v594 = vadd.f32 %v570, %v581
        %v595 = vadd.f32 %v571, %v586
        %v596 = vadd.f32 %v572, %v591
        %v597 = vmax.f32 %v593, 0.0
        %v598 = vmax.f32 %v594, 0.0
        %v599 = vmax.f32 %v595, 0.0
        %v600 = vmax.f32 %v596, 0.0
        %v601 = vld [vmem:[%s6] sm:$0xf]
        %v602 = vld [vmem:[%s6 + $0x4] sm:$0xf]
        %v603 = vld [vmem:[%s6 + $0x8] sm:$0xf]
        %v604 = vld [vmem:[%s6 + $0xc] sm:$0xf]
        %v605 = vpack.c.bf16 %v598, %v597
        %v606 = vpack.c.bf16 %v600, %v599
        %v611 = vunpack.c.l.b16 %v601
        %v612 = vunpack.c.l.b16 %v602
        %v613 = vunpack.c.l.b16 %v603
        %v614 = vunpack.c.l.b16 %v604
        %v615 = vpack.c.b16 %v612, %v611
        %v616 = vpack.c.b16 %v614, %v613
        %vm617 = vcmask 261120
        %v619 = vsel %vm617, %v615, 0
        %v622 = vsel %vm617, %v616, 0
        %624 = vmatprep.subr.bf16.mxu0 0
        %625 = vmatpush1.bf16.msra.mxu0 %v605
        %626 = vmatprep.subr.bf16.mxu0 0
        %627 = vmatpush1.bf16.msra.mxu0 %v606
        %628 = vmatprep.subr.bf16.mxu0 0
        %629 = vmatpush1.bf16.msra.mxu0 0
        %630 = vmatprep.subr.bf16.mxu0 0
        %631 = vmatpush1.bf16.msra.mxu0 0
        %632 = vmatprep.subr.bf16.mxu0 0
        %633 = vmatpush1.bf16.msra.mxu0 0
        %634 = vmatprep.subr.bf16.mxu0 0
        %635 = vmatpush1.bf16.msra.mxu0 0
        %636 = vmatprep.subr.bf16.mxu0 0
        %637 = vmatpush1.bf16.msra.mxu0 0
        %638 = vmatprep.subr.bf16.mxu0 0
        %639 = vmatpush1.bf16.msra.mxu0 0
        %640 = vmatprep.subr.bf16.mxu0 0
        %641 = vmatpush1.bf16.msra.mxu0 0
        %642 = vmatprep.subr.bf16.mxu0 0
        %643 = vmatpush1.bf16.msra.mxu0 0
        %644 = vmatprep.subr.bf16.mxu0 0
        %645 = vmatpush1.bf16.msra.mxu0 0
        %646 = vmatprep.subr.bf16.mxu0 0
        %647 = vmatpush1.bf16.msra.mxu0 0
        %648 = vmatprep.subr.bf16.mxu0 0
        %649 = vmatpush1.bf16.msra.mxu0 0
        %650 = vmatprep.subr.bf16.mxu0 0
        %651 = vmatpush1.bf16.msra.mxu0 0
        %652 = vmatprep.subr.bf16.mxu0 0
        %653 = vmatpush1.bf16.msra.mxu0 0
        %654 = vmatprep.subr.bf16.mxu0 0
        %655 = vmatpush1.bf16.msra.mxu0 0
        %656 = vmatprep.mubr.bf16.mxu0 0
        %657 = vmatmul.mubr.bf16.gmra.mrb[0].mxu0 %v619
        %v658 = vpop.f32.mrb[0].mxu0
        %v659 = vadd.f32 0.0, %v658
        %v660 = vpop.f32.mrb[0].mxu0
        %v661 = vpop.f32.mrb[0].mxu0
        %v662 = vadd.f32 0.0, %v661
        %v663 = vpop.f32.mrb[0].mxu0
        %664 = vmatprep.mubr.bf16.mxu0 0
        %665 = vmatmul.mubr.bf16.gmra.mrb[0].mxu0 %v622
        %v666 = vpop.f32.mrb[0].mxu0
        %v667 = vadd.f32 0.0, %v666
        %v668 = vpop.f32.mrb[0].mxu0
        %v669 = vpop.f32.mrb[0].mxu0
        %v670 = vadd.f32 0.0, %v669
        %v671 = vpop.f32.mrb[0].mxu0
        %672 = vdwg.mxu0
        %v673 = vld [vmem:[%s367] sm:$0xff]
        %v674 = vld [vmem:[%s367 + $0x8] sm:$0xff]
        %v675 = vld [vmem:[%s367 + $0x10] sm:$0xff]
        %v676 = vld [vmem:[%s367 + $0x18] sm:$0xff]
        %677 = vadd.xlane.f32.xlu0 %v659
        %v678 = vpop.xlane.xlu0 %677
        %679 = vadd.xlane.f32.xlu0 %v662
        %v680 = vpop.xlane.xlu0 %679
        %681 = vadd.xlane.f32.xlu0 %v667
        %v682 = vpop.xlane.xlu0 %681
        %683 = vadd.xlane.f32.xlu0 %v670
        %v684 = vpop.xlane.xlu0 %683
        %v685 = vadd.f32 %v673, %v678
        %v686 = vadd.f32 %v674, %v680
        %v687 = vadd.f32 %v675, %v682
        %v688 = vadd.f32 %v676, %v684
        %689 = vst.msk [vmem:[%s367] sm:$0xff] %vm395, %v685
        %690 = vst.msk [vmem:[%s367 + $0x8] sm:$0xff] %vm395, %v686
        %691 = vst.msk [vmem:[%s367 + $0x10] sm:$0xff] %vm395, %v687
        %692 = vst.msk [vmem:[%s367 + $0x18] sm:$0xff] %vm395, %v688
        %v693 = vld [vmem:[%s372] sm:$0xff]
        %v694 = vld [vmem:[%s372 + $0x8] sm:$0xff]
        %v695 = vld [vmem:[%s372 + $0x10] sm:$0xff]
        %v696 = vld [vmem:[%s372 + $0x18] sm:$0xff]
        %v697 = vmul.f32 %v659, %v659
        %v698 = vmul.f32 %v662, %v662
        %v699 = vmul.f32 %v667, %v667
        %v700 = vmul.f32 %v670, %v670
        %701 = vadd.xlane.f32.xlu0 %v697
        %v702 = vpop.xlane.xlu0 %701
        %703 = vadd.xlane.f32.xlu0 %v698
        %v704 = vpop.xlane.xlu0 %703
        %705 = vadd.xlane.f32.xlu0 %v699
        %v706 = vpop.xlane.xlu0 %705
        %707 = vadd.xlane.f32.xlu0 %v700
        %v708 = vpop.xlane.xlu0 %707
        %v709 = vadd.f32 %v693, %v702
        %v710 = vadd.f32 %v694, %v704
        %v711 = vadd.f32 %v695, %v706
        %v712 = vadd.f32 %v696, %v708
        %713 = vst.msk [vmem:[%s372] sm:$0xff] %vm395, %v709
        %714 = vst.msk [vmem:[%s372 + $0x8] sm:$0xff] %vm395, %v710
        %715 = vst.msk [vmem:[%s372 + $0x10] sm:$0xff] %vm395, %v711
        %716 = vst.msk [vmem:[%s372 + $0x18] sm:$0xff] %vm395, %v712
        %p717 = scmp.lt.s32.totalorder %s24, 1
        %s718 = scalar_select %p717, %s24, 1
        %s719 = smul.addr %s718, 4
        %s720 = smul.addr %s719, 8
        %s721 = scalar_lea.vmem %s7, %s720
        %p722 = scmp.lt.s32.totalorder %s24, 1
        %s723 = scalar_select %p722, %s24, 1
        %s724 = smul.addr %s723, 4
        %s725 = smul.addr %s724, 8
        %s726 = scalar_lea.vmem %s8, %s725
        // Predicated region
        $region91: #{camera_aware_forward.4} parent=81 // pred_check
          %p727 = pneg %p204
        $region92: #{camera_aware_forward.4} parent=81 // pred_check_branch
          %729 = sbr.rel (%p727) target = $region94
        $region93: #{camera_aware_forward.4} parent=81 // pred_region
          _
        $region94: #{camera_aware_forward.4} parent=81 // pred_fallthru
          _
        // Predicated region
        $region95: #{camera_aware_forward.4} parent=81 // pred_check
          %p730 = pneg %p230
        $region96: #{camera_aware_forward.4} parent=81 // pred_check_branch
          %732 = sbr.rel (%p730) target = $region98
        $region97: #{camera_aware_forward.4} parent=81 // pred_region
          _
        $region98: #{camera_aware_forward.4} parent=81 // pred_fallthru
          _
      $region82: #{camera_aware_forward.4} parent=5 // pred_fallthru
        _
      %p733 = scmp.le.s32.totalorder 2, %s15
      // Predicated region
      $region99: #{camera_aware_forward.4} parent=5 // pred_check
        %p734 = pneg %p733
      $region100: #{camera_aware_forward.4} parent=5 // pred_check_branch
        %736 = sbr.rel (%p734) target = $region102
      $region101: #{camera_aware_forward.4} parent=5 // pred_region
        %s737 = ssub.s32 %s15, 2
        // Predicated region
        $region103: #{camera_aware_forward.4} parent=101 // pred_check
          %p738 = pneg %p210
        $region104: #{camera_aware_forward.4} parent=101 // pred_check_branch
          %740 = sbr.rel (%p738) target = $region106
        $region105: #{camera_aware_forward.4} parent=101 // pred_region
          %p741 = scmp.lt.s32.totalorder %s26, 1
          %s742 = scalar_select %p741, %s26, 1
          %s743 = smul.addr %s742, 4
          %s744 = smul.addr %s743, 8
          %s745 = scalar_lea.vmem %s7, %s744
        $region106: #{camera_aware_forward.4} parent=101 // pred_fallthru
          _
        // Predicated region
        $region107: #{camera_aware_forward.4} parent=101 // pred_check
          %p746 = pneg %p236
        $region108: #{camera_aware_forward.4} parent=101 // pred_check_branch
          %748 = sbr.rel (%p746) target = $region110
        $region109: #{camera_aware_forward.4} parent=101 // pred_region
          %p749 = scmp.lt.s32.totalorder %s26, 1
          %s750 = scalar_select %p749, %s26, 1
          %s751 = smul.addr %s750, 4
          %s752 = smul.addr %s751, 8
          %s753 = scalar_lea.vmem %s8, %s752
        $region110: #{camera_aware_forward.4} parent=101 // pred_fallthru
          _
      $region102: #{camera_aware_forward.4} parent=5 // pred_fallthru
        _
    $region6: #{camera_aware_forward.4} parent=1 // loop_footer
      %s19 = sadd.s32 1, %s15
    $region7: #{camera_aware_forward.4} parent=1 // loop_footer_branch
      %14 = sbr.rel target = $region3
    $region8: #{camera_aware_forward.4} parent=1 // loop_exit
      _

// kernel: camera_aware_forward.5
$region0: #{camera_aware_forward.5}
  #allocation0 [shape = 'u32[]', space=smem, size = 0x4, offset = 0x4, fixed_abs, tag = 'smem constant byte address 0x4 - core index']
  #allocation1 [shape = 'u32[144,128]{1,0:T(1,128)}', space=vmem, size = 0x12000, scoped, tag = 'internal scratch']
  %s0 = inlined_call_operand.vmem [shape: f32[2,16,256], index: 0, kind: input, shape index: {}]
  %s1 = inlined_call_operand.vmem [shape: f32[2,32,256], index: 1, kind: input, shape index: {}, may-alias: {1,16}]
  %s2 = inlined_call_operand.vmem [shape: bf16[32,16], index: 2, kind: input, shape index: {}]
  %s3 = inlined_call_operand.vmem [shape: f32[32,1], index: 3, kind: input, shape index: {}]
  %s4 = inlined_call_operand.vmem [shape: f32[32,1], index: 4, kind: input, shape index: {}]
  %s5 = inlined_call_operand.vmem [shape: f32[2,32,1], index: 5, kind: input, shape index: {}]
  %s6 = inlined_call_operand.vmem [shape: f32[2,32,1], index: 6, kind: input, shape index: {}]
  %s7 = inlined_call_operand.vmem [shape: bf16[32,32], index: 7, kind: input, shape index: {}]
  %s8 = inlined_call_operand.vmem [shape: f32[32,1], index: 8, kind: input, shape index: {}]
  %s9 = inlined_call_operand.vmem [shape: f32[32,1], index: 9, kind: input, shape index: {}]
  %s10 = inlined_call_operand.vmem [shape: f32[2,32,1], index: 10, kind: input, shape index: {}]
  %s11 = inlined_call_operand.vmem [shape: f32[2,32,1], index: 11, kind: input, shape index: {}]
  %s12 = inlined_call_operand.vmem [shape: bf16[32,32], index: 12, kind: input, shape index: {}]
  %s13 = inlined_call_operand.vmem [shape: f32[32,1], index: 13, kind: input, shape index: {}]
  %s14 = inlined_call_operand.vmem [shape: bf16[32,32], index: 14, kind: input, shape index: {}]
  %s15 = inlined_call_operand.vmem [shape: f32[32,1], index: 15, kind: input, shape index: {}]
  %s16 = inlined_call_operand.vmem [shape: f32[2,32,256], index: 16, kind: output, shape index: {}, may-alias: {1,16}]
  %s17 = sld [smem:[#allocation0]]
  $region207: #{camera_aware_forward.5} parent=0
    _
  %s19 = ssub.s32 1, %s17
  %s20 = scalar_select 0, %s19, %s17
  $region1: #{camera_aware_forward.5} parent=0
    #allocation2 [shape = 'u8[16384]{0}', space=vmem, size = 0x4000, scoped, tag = 'input window, operand 0']
    #allocation3 [shape = 'u8[32768]{0}', space=vmem, size = 0x8000, scoped, tag = 'input window, operand 1']
    #allocation4 [shape = 'u8[32768]{0}', space=vmem, size = 0x8000, scoped, tag = 'output window, operand 0']
    loop: start=0, step=1, limit=6
    $region2: #{camera_aware_forward.5} parent=1 // loop_pre_header
      _
    $region3: #{camera_aware_forward.5} parent=1 // loop_header
      %s22 = sphi 0, %s26
      %p23 = scmp.ge.s32.totalorder %s22, 6
      %s29 = sphi 0, %s41
      %s30 = sphi 0, %s37
      %s31 = sphi 0, %s29
      %s32 = sphi 0, %s30
      %s33 = sphi 0, %s31
      %s34 = sphi 0, %s32
      %s46 = sphi 0, %s48
      %s49 = sphi 0, %s46
      %s50 = sphi 0, %s49
      %s66 = sphi 0, %s50
      %s74 = sphi 0, %s76
      %s77 = sphi 0, %s74
      %s78 = sphi 0, %s77
      %s94 = sphi 0, %s78
      %s98 = sphi 0, %s98
      %s100 = sphi 0, %s98
      %s101 = sphi 0, %s100
      %s115 = sphi 0, %s101
      %s119 = sphi 0, %s119
      %s121 = sphi 0, %s119
      %s122 = sphi 0, %s121
      %s136 = sphi 0, %s122
      %s140 = sphi 0, %s140
      %s142 = sphi 0, %s140
      %s143 = sphi 0, %s142
      %s157 = sphi 0, %s143
      %s161 = sphi 0, %s161
      %s163 = sphi 0, %s161
      %s164 = sphi 0, %s163
      %s178 = sphi 0, %s164
      %s182 = sphi 0, %s182
      %s184 = sphi 0, %s182
      %s185 = sphi 0, %s184
      %s199 = sphi 0, %s185
      %s203 = sphi 0, %s203
      %s205 = sphi 0, %s203
      %s206 = sphi 0, %s205
      %s220 = sphi 0, %s206
      %s224 = sphi 0, %s224
      %s226 = sphi 0, %s224
      %s227 = sphi 0, %s226
      %s241 = sphi 0, %s227
      %s245 = sphi 0, %s245
      %s247 = sphi 0, %s245
      %s248 = sphi 0, %s247
      %s262 = sphi 0, %s248
      %s266 = sphi 0, %s266
      %s268 = sphi 0, %s266
      %s269 = sphi 0, %s268
      %s283 = sphi 0, %s269
      %s287 = sphi 0, %s287
      %s289 = sphi 0, %s287
      %s290 = sphi 0, %s289
      %s304 = sphi 0, %s290
      %s308 = sphi 0, %s308
      %s310 = sphi 0, %s308
      %s311 = sphi 0, %s310
      %s325 = sphi 0, %s311
      %s329 = sphi 0, %s329
      %s331 = sphi 0, %s329
      %s332 = sphi 0, %s331
      %s346 = sphi 0, %s332
      %s350 = sphi 0, %s350
      %s352 = sphi 0, %s350
      %s353 = sphi 0, %s352
      %s367 = sphi 0, %s353
      %s371 = sphi 0, %s371
      %s373 = sphi 0, %s371
      %s374 = sphi 0, %s373
      %s388 = sphi 0, %s374
      %s396 = sphi 0, %s398
      %s399 = sphi 0, %s396
      %s400 = sphi 0, %s399
      %s416 = sphi 0, %s400
    $region4: #{camera_aware_forward.5} parent=1 // loop_header_branch
      %25 = sbr.rel (%p23) target = $region8
    $region5: #{camera_aware_forward.5} parent=1 // loop_body
      %s27 = ssub.s32 %s22, 1
      %s28 = ssub.s32 %s22, 2
      %s35 = sadd.s32 1, %s30
      %p36 = scmp.ge.s32.totalorder %s35, 2
      %s37 = scalar_select %p36, 0, %s35
      %s38 = sadd.s32 1, %s29
      %s39 = scalar_select %p36, %s38, %s29
      %p40 = scmp.ge.s32.totalorder %s39, 2
      %s41 = scalar_select %p40, 0, %s39
      %s42 = ssub.s32 %s29, %s41
      %s43 = ssub.s32 %s30, %s37
      %s44 = sor.u32 %s42, %s43
      %p45 = scmp.eq.s32.totalorder %s44, 0
      %s47 = sadd.s32 %s46, 1
      %s48 = scalar_select %p45, %s46, %s47
      %p51 = pneg %p45
      %p52 = scmp.eq.s32.totalorder %s22, 3
      %p53 = por %p51, %p52
      %p54 = scmp.ne.s32.totalorder %s46, %s49
      %p55 = scmp.eq.s32.totalorder %s22, 0
      %p56 = por %p54, %p55
      %p57 = scmp.ne.s32.totalorder %s46, %s49
      %p58 = scmp.eq.s32.totalorder %s27, 3
      %p59 = por %p57, %p58
      %p60 = scmp.ne.s32.totalorder %s49, %s50
      %p61 = scmp.eq.s32.totalorder %s27, 0
      %p62 = por %p60, %p61
      %p63 = scmp.ne.s32.totalorder %s49, %s50
      %p64 = scmp.eq.s32.totalorder %s28, 3
      %p65 = por %p63, %p64
      %p67 = scmp.ne.s32.totalorder %s50, %s66
      %p68 = scmp.eq.s32.totalorder %s28, 0
      %p69 = por %p67, %p68
      %s70 = ssub.s32 %s29, %s41
      %s71 = ssub.s32 %s30, %s37
      %s72 = sor.u32 %s70, %s71
      %p73 = scmp.eq.s32.totalorder %s72, 0
      %s75 = sadd.s32 %s74, 1
      %s76 = scalar_select %p73, %s74, %s75
      %p79 = pneg %p73
      %p80 = scmp.eq.s32.totalorder %s22, 3
      %p81 = por %p79, %p80
      %p82 = scmp.ne.s32.totalorder %s74, %s77
      %p83 = scmp.eq.s32.totalorder %s22, 0
      %p84 = por %p82, %p83
      %p85 = scmp.ne.s32.totalorder %s74, %s77
      %p86 = scmp.eq.s32.totalorder %s27, 3
      %p87 = por %p85, %p86
      %p88 = scmp.ne.s32.totalorder %s77, %s78
      %p89 = scmp.eq.s32.totalorder %s27, 0
      %p90 = por %p88, %p89
      %p91 = scmp.ne.s32.totalorder %s77, %s78
      %p92 = scmp.eq.s32.totalorder %s28, 3
      %p93 = por %p91, %p92
      %p95 = scmp.ne.s32.totalorder %s78, %s94
      %p96 = scmp.eq.s32.totalorder %s28, 0
      %p97 = por %p95, %p96
      %s99 = sadd.s32 %s98, 1
      %p102 = scmp.eq.s32.totalorder %s22, 3
      %p103 = scmp.ne.s32.totalorder %s98, %s100
      %p104 = scmp.eq.s32.totalorder %s22, 0
      %p105 = por %p103, %p104
      %p106 = scmp.ne.s32.totalorder %s98, %s100
      %p107 = scmp.eq.s32.totalorder %s27, 3
      %p108 = por %p106, %p107
      %p109 = scmp.ne.s32.totalorder %s100, %s101
      %p110 = scmp.eq.s32.totalorder %s27, 0
      %p111 = por %p109, %p110
      %p112 = scmp.ne.s32.totalorder %s100, %s101
      %p113 = scmp.eq.s32.totalorder %s28, 3
      %p114 = por %p112, %p113
      %p116 = scmp.ne.s32.totalorder %s101, %s115
      %p117 = scmp.eq.s32.totalorder %s28, 0
      %p118 = por %p116, %p117
      %s120 = sadd.s32 %s119, 1
      %p123 = scmp.eq.s32.totalorder %s22, 3
      %p124 = scmp.ne.s32.totalorder %s119, %s121
      %p125 = scmp.eq.s32.totalorder %s22, 0
      %p126 = por %p124, %p125
      %p127 = scmp.ne.s32.totalorder %s119, %s121
      %p128 = scmp.eq.s32.totalorder %s27, 3
      %p129 = por %p127, %p128
      %p130 = scmp.ne.s32.totalorder %s121, %s122
      %p131 = scmp.eq.s32.totalorder %s27, 0
      %p132 = por %p130, %p131
      %p133 = scmp.ne.s32.totalorder %s121, %s122
      %p134 = scmp.eq.s32.totalorder %s28, 3
      %p135 = por %p133, %p134
      %p137 = scmp.ne.s32.totalorder %s122, %s136
      %p138 = scmp.eq.s32.totalorder %s28, 0
      %p139 = por %p137, %p138
      %s141 = sadd.s32 %s140, 1
      %p144 = scmp.eq.s32.totalorder %s22, 3
      %p145 = scmp.ne.s32.totalorder %s140, %s142
      %p146 = scmp.eq.s32.totalorder %s22, 0
      %p147 = por %p145, %p146
      %p148 = scmp.ne.s32.totalorder %s140, %s142
      %p149 = scmp.eq.s32.totalorder %s27, 3
      %p150 = por %p148, %p149
      %p151 = scmp.ne.s32.totalorder %s142, %s143
      %p152 = scmp.eq.s32.totalorder %s27, 0
      %p153 = por %p151, %p152
      %p154 = scmp.ne.s32.totalorder %s142, %s143
      %p155 = scmp.eq.s32.totalorder %s28, 3
      %p156 = por %p154, %p155
      %p158 = scmp.ne.s32.totalorder %s143, %s157
      %p159 = scmp.eq.s32.totalorder %s28, 0
      %p160 = por %p158, %p159
      %s162 = sadd.s32 %s161, 1
      %p165 = scmp.eq.s32.totalorder %s22, 3
      %p166 = scmp.ne.s32.totalorder %s161, %s163
      %p167 = scmp.eq.s32.totalorder %s22, 0
      %p168 = por %p166, %p167
      %p169 = scmp.ne.s32.totalorder %s161, %s163
      %p170 = scmp.eq.s32.totalorder %s27, 3
      %p171 = por %p169, %p170
      %p172 = scmp.ne.s32.totalorder %s163, %s164
      %p173 = scmp.eq.s32.totalorder %s27, 0
      %p174 = por %p172, %p173
      %p175 = scmp.ne.s32.totalorder %s163, %s164
      %p176 = scmp.eq.s32.totalorder %s28, 3
      %p177 = por %p175, %p176
      %p179 = scmp.ne.s32.totalorder %s164, %s178
      %p180 = scmp.eq.s32.totalorder %s28, 0
      %p181 = por %p179, %p180
      %s183 = sadd.s32 %s182, 1
      %p186 = scmp.eq.s32.totalorder %s22, 3
      %p187 = scmp.ne.s32.totalorder %s182, %s184
      %p188 = scmp.eq.s32.totalorder %s22, 0
      %p189 = por %p187, %p188
      %p190 = scmp.ne.s32.totalorder %s182, %s184
      %p191 = scmp.eq.s32.totalorder %s27, 3
      %p192 = por %p190, %p191
      %p193 = scmp.ne.s32.totalorder %s184, %s185
      %p194 = scmp.eq.s32.totalorder %s27, 0
      %p195 = por %p193, %p194
      %p196 = scmp.ne.s32.totalorder %s184, %s185
      %p197 = scmp.eq.s32.totalorder %s28, 3
      %p198 = por %p196, %p197
      %p200 = scmp.ne.s32.totalorder %s185, %s199
      %p201 = scmp.eq.s32.totalorder %s28, 0
      %p202 = por %p200, %p201
      %s204 = sadd.s32 %s203, 1
      %p207 = scmp.eq.s32.totalorder %s22, 3
      %p208 = scmp.ne.s32.totalorder %s203, %s205
      %p209 = scmp.eq.s32.totalorder %s22, 0
      %p210 = por %p208, %p209
      %p211 = scmp.ne.s32.totalorder %s203, %s205
      %p212 = scmp.eq.s32.totalorder %s27, 3
      %p213 = por %p211, %p212
      %p214 = scmp.ne.s32.totalorder %s205, %s206
      %p215 = scmp.eq.s32.totalorder %s27, 0
      %p216 = por %p214, %p215
      %p217 = scmp.ne.s32.totalorder %s205, %s206
      %p218 = scmp.eq.s32.totalorder %s28, 3
      %p219 = por %p217, %p218
      %p221 = scmp.ne.s32.totalorder %s206, %s220
      %p222 = scmp.eq.s32.totalorder %s28, 0
      %p223 = por %p221, %p222
      %s225 = sadd.s32 %s224, 1
      %p228 = scmp.eq.s32.totalorder %s22, 3
      %p229 = scmp.ne.s32.totalorder %s224, %s226
      %p230 = scmp.eq.s32.totalorder %s22, 0
      %p231 = por %p229, %p230
      %p232 = scmp.ne.s32.totalorder %s224, %s226
      %p233 = scmp.eq.s32.totalorder %s27, 3
      %p234 = por %p232, %p233
      %p235 = scmp.ne.s32.totalorder %s226, %s227
      %p236 = scmp.eq.s32.totalorder %s27, 0
      %p237 = por %p235, %p236
      %p238 = scmp.ne.s32.totalorder %s226, %s227
      %p239 = scmp.eq.s32.totalorder %s28, 3
      %p240 = por %p238, %p239
      %p242 = scmp.ne.s32.totalorder %s227, %s241
      %p243 = scmp.eq.s32.totalorder %s28, 0
      %p244 = por %p242, %p243
      %s246 = sadd.s32 %s245, 1
      %p249 = scmp.eq.s32.totalorder %s22, 3
      %p250 = scmp.ne.s32.totalorder %s245, %s247
      %p251 = scmp.eq.s32.totalorder %s22, 0
      %p252 = por %p250, %p251
      %p253 = scmp.ne.s32.totalorder %s245, %s247
      %p254 = scmp.eq.s32.totalorder %s27, 3
      %p255 = por %p253, %p254
      %p256 = scmp.ne.s32.totalorder %s247, %s248
      %p257 = scmp.eq.s32.totalorder %s27, 0
      %p258 = por %p256, %p257
      %p259 = scmp.ne.s32.totalorder %s247, %s248
      %p260 = scmp.eq.s32.totalorder %s28, 3
      %p261 = por %p259, %p260
      %p263 = scmp.ne.s32.totalorder %s248, %s262
      %p264 = scmp.eq.s32.totalorder %s28, 0
      %p265 = por %p263, %p264
      %s267 = sadd.s32 %s266, 1
      %p270 = scmp.eq.s32.totalorder %s22, 3
      %p271 = scmp.ne.s32.totalorder %s266, %s268
      %p272 = scmp.eq.s32.totalorder %s22, 0
      %p273 = por %p271, %p272
      %p274 = scmp.ne.s32.totalorder %s266, %s268
      %p275 = scmp.eq.s32.totalorder %s27, 3
      %p276 = por %p274, %p275
      %p277 = scmp.ne.s32.totalorder %s268, %s269
      %p278 = scmp.eq.s32.totalorder %s27, 0
      %p279 = por %p277, %p278
      %p280 = scmp.ne.s32.totalorder %s268, %s269
      %p281 = scmp.eq.s32.totalorder %s28, 3
      %p282 = por %p280, %p281
      %p284 = scmp.ne.s32.totalorder %s269, %s283
      %p285 = scmp.eq.s32.totalorder %s28, 0
      %p286 = por %p284, %p285
      %s288 = sadd.s32 %s287, 1
      %p291 = scmp.eq.s32.totalorder %s22, 3
      %p292 = scmp.ne.s32.totalorder %s287, %s289
      %p293 = scmp.eq.s32.totalorder %s22, 0
      %p294 = por %p292, %p293
      %p295 = scmp.ne.s32.totalorder %s287, %s289
      %p296 = scmp.eq.s32.totalorder %s27, 3
      %p297 = por %p295, %p296
      %p298 = scmp.ne.s32.totalorder %s289, %s290
      %p299 = scmp.eq.s32.totalorder %s27, 0
      %p300 = por %p298, %p299
      %p301 = scmp.ne.s32.totalorder %s289, %s290
      %p302 = scmp.eq.s32.totalorder %s28, 3
      %p303 = por %p301, %p302
      %p305 = scmp.ne.s32.totalorder %s290, %s304
      %p306 = scmp.eq.s32.totalorder %s28, 0
      %p307 = por %p305, %p306
      %s309 = sadd.s32 %s308, 1
      %p312 = scmp.eq.s32.totalorder %s22, 3
      %p313 = scmp.ne.s32.totalorder %s308, %s310
      %p314 = scmp.eq.s32.totalorder %s22, 0
      %p315 = por %p313, %p314
      %p316 = scmp.ne.s32.totalorder %s308, %s310
      %p317 = scmp.eq.s32.totalorder %s27, 3
      %p318 = por %p316, %p317
      %p319 = scmp.ne.s32.totalorder %s310, %s311
      %p320 = scmp.eq.s32.totalorder %s27, 0
      %p321 = por %p319, %p320
      %p322 = scmp.ne.s32.totalorder %s310, %s311
      %p323 = scmp.eq.s32.totalorder %s28, 3
      %p324 = por %p322, %p323
      %p326 = scmp.ne.s32.totalorder %s311, %s325
      %p327 = scmp.eq.s32.totalorder %s28, 0
      %p328 = por %p326, %p327
      %s330 = sadd.s32 %s329, 1
      %p333 = scmp.eq.s32.totalorder %s22, 3
      %p334 = scmp.ne.s32.totalorder %s329, %s331
      %p335 = scmp.eq.s32.totalorder %s22, 0
      %p336 = por %p334, %p335
      %p337 = scmp.ne.s32.totalorder %s329, %s331
      %p338 = scmp.eq.s32.totalorder %s27, 3
      %p339 = por %p337, %p338
      %p340 = scmp.ne.s32.totalorder %s331, %s332
      %p341 = scmp.eq.s32.totalorder %s27, 0
      %p342 = por %p340, %p341
      %p343 = scmp.ne.s32.totalorder %s331, %s332
      %p344 = scmp.eq.s32.totalorder %s28, 3
      %p345 = por %p343, %p344
      %p347 = scmp.ne.s32.totalorder %s332, %s346
      %p348 = scmp.eq.s32.totalorder %s28, 0
      %p349 = por %p347, %p348
      %s351 = sadd.s32 %s350, 1
      %p354 = scmp.eq.s32.totalorder %s22, 3
      %p355 = scmp.ne.s32.totalorder %s350, %s352
      %p356 = scmp.eq.s32.totalorder %s22, 0
      %p357 = por %p355, %p356
      %p358 = scmp.ne.s32.totalorder %s350, %s352
      %p359 = scmp.eq.s32.totalorder %s27, 3
      %p360 = por %p358, %p359
      %p361 = scmp.ne.s32.totalorder %s352, %s353
      %p362 = scmp.eq.s32.totalorder %s27, 0
      %p363 = por %p361, %p362
      %p364 = scmp.ne.s32.totalorder %s352, %s353
      %p365 = scmp.eq.s32.totalorder %s28, 3
      %p366 = por %p364, %p365
      %p368 = scmp.ne.s32.totalorder %s353, %s367
      %p369 = scmp.eq.s32.totalorder %s28, 0
      %p370 = por %p368, %p369
      %s372 = sadd.s32 %s371, 1
      %p375 = scmp.eq.s32.totalorder %s22, 3
      %p376 = scmp.ne.s32.totalorder %s371, %s373
      %p377 = scmp.eq.s32.totalorder %s22, 0
      %p378 = por %p376, %p377
      %p379 = scmp.ne.s32.totalorder %s371, %s373
      %p380 = scmp.eq.s32.totalorder %s27, 3
      %p381 = por %p379, %p380
      %p382 = scmp.ne.s32.totalorder %s373, %s374
      %p383 = scmp.eq.s32.totalorder %s27, 0
      %p384 = por %p382, %p383
      %p385 = scmp.ne.s32.totalorder %s373, %s374
      %p386 = scmp.eq.s32.totalorder %s28, 3
      %p387 = por %p385, %p386
      %p389 = scmp.ne.s32.totalorder %s374, %s388
      %p390 = scmp.eq.s32.totalorder %s28, 0
      %p391 = por %p389, %p390
      %s392 = ssub.s32 %s29, %s41
      %s393 = ssub.s32 %s30, %s37
      %s394 = sor.u32 %s392, %s393
      %p395 = scmp.eq.s32.totalorder %s394, 0
      %s397 = sadd.s32 %s396, 1
      %s398 = scalar_select %p395, %s396, %s397
      %p401 = pneg %p395
      %p402 = scmp.eq.s32.totalorder %s22, 3
      %p403 = por %p401, %p402
      %p404 = scmp.ne.s32.totalorder %s396, %s399
      %p405 = scmp.eq.s32.totalorder %s22, 0
      %p406 = por %p404, %p405
      %p407 = scmp.ne.s32.totalorder %s396, %s399
      %p408 = scmp.eq.s32.totalorder %s27, 3
      %p409 = por %p407, %p408
      %p410 = scmp.ne.s32.totalorder %s399, %s400
      %p411 = scmp.eq.s32.totalorder %s27, 0
      %p412 = por %p410, %p411
      %p413 = scmp.ne.s32.totalorder %s399, %s400
      %p414 = scmp.eq.s32.totalorder %s28, 3
      %p415 = por %p413, %p414
      %p417 = scmp.ne.s32.totalorder %s400, %s416
      %p418 = scmp.eq.s32.totalorder %s28, 0
      %p419 = por %p417, %p418
      %p420 = scmp.le.s32.totalorder 1, %s22
      %p421 = scmp.lt.s32.totalorder %s22, 5
      %p422 = pnand %p420, %p421
      %p423 = pneg %p422
      // Predicated region
      $region9: #{camera_aware_forward.5} parent=5 // pred_check
        _
      $region10: #{camera_aware_forward.5} parent=5 // pred_check_branch
        %425 = sbr.rel (%p422) target = $region12
      $region11: #{camera_aware_forward.5} parent=5 // pred_region
        %s426 = ssub.s32 %s22, 1
        // Predicated region
        $region13: #{camera_aware_forward.5} parent=11 // pred_check
          %p427 = pneg %p111
        $region14: #{camera_aware_forward.5} parent=11 // pred_check_branch
          %429 = sbr.rel (%p427) target = $region16
        $region15: #{camera_aware_forward.5} parent=11 // pred_region
          _
        $region16: #{camera_aware_forward.5} parent=11 // pred_fallthru
          _
        // Predicated region
        $region17: #{camera_aware_forward.5} parent=11 // pred_check
          %p430 = pneg %p132
        $region18: #{camera_aware_forward.5} parent=11 // pred_check_branch
          %432 = sbr.rel (%p430) target = $region20
        $region19: #{camera_aware_forward.5} parent=11 // pred_region
          _
        $region20: #{camera_aware_forward.5} parent=11 // pred_fallthru
          _
        // Predicated region
        $region21: #{camera_aware_forward.5} parent=11 // pred_check
          %p433 = pneg %p153
        $region22: #{camera_aware_forward.5} parent=11 // pred_check_branch
          %435 = sbr.rel (%p433) target = $region24
        $region23: #{camera_aware_forward.5} parent=11 // pred_region
          _
        $region24: #{camera_aware_forward.5} parent=11 // pred_fallthru
          _
        // Predicated region
        $region25: #{camera_aware_forward.5} parent=11 // pred_check
          %p436 = pneg %p174
        $region26: #{camera_aware_forward.5} parent=11 // pred_check_branch
          %438 = sbr.rel (%p436) target = $region28
        $region27: #{camera_aware_forward.5} parent=11 // pred_region
          _
        $region28: #{camera_aware_forward.5} parent=11 // pred_fallthru
          _
        // Predicated region
        $region29: #{camera_aware_forward.5} parent=11 // pred_check
          %p439 = pneg %p195
        $region30: #{camera_aware_forward.5} parent=11 // pred_check_branch
          %441 = sbr.rel (%p439) target = $region32
        $region31: #{camera_aware_forward.5} parent=11 // pred_region
          _
        $region32: #{camera_aware_forward.5} parent=11 // pred_fallthru
          _
        // Predicated region
        $region33: #{camera_aware_forward.5} parent=11 // pred_check
          %p442 = pneg %p216
        $region34: #{camera_aware_forward.5} parent=11 // pred_check_branch
          %444 = sbr.rel (%p442) target = $region36
        $region35: #{camera_aware_forward.5} parent=11 // pred_region
          _
        $region36: #{camera_aware_forward.5} parent=11 // pred_fallthru
          _
        // Predicated region
        $region37: #{camera_aware_forward.5} parent=11 // pred_check
          %p445 = pneg %p237
        $region38: #{camera_aware_forward.5} parent=11 // pred_check_branch
          %447 = sbr.rel (%p445) target = $region40
        $region39: #{camera_aware_forward.5} parent=11 // pred_region
          _
        $region40: #{camera_aware_forward.5} parent=11 // pred_fallthru
          _
        // Predicated region
        $region41: #{camera_aware_forward.5} parent=11 // pred_check
          %p448 = pneg %p258
        $region42: #{camera_aware_forward.5} parent=11 // pred_check_branch
          %450 = sbr.rel (%p448) target = $region44
        $region43: #{camera_aware_forward.5} parent=11 // pred_region
          _
        $region44: #{camera_aware_forward.5} parent=11 // pred_fallthru
          _
        // Predicated region
        $region45: #{camera_aware_forward.5} parent=11 // pred_check
          %p451 = pneg %p279
        $region46: #{camera_aware_forward.5} parent=11 // pred_check_branch
          %453 = sbr.rel (%p451) target = $region48
        $region47: #{camera_aware_forward.5} parent=11 // pred_region
          _
        $region48: #{camera_aware_forward.5} parent=11 // pred_fallthru
          _
        // Predicated region
        $region49: #{camera_aware_forward.5} parent=11 // pred_check
          %p454 = pneg %p300
        $region50: #{camera_aware_forward.5} parent=11 // pred_check_branch
          %456 = sbr.rel (%p454) target = $region52
        $region51: #{camera_aware_forward.5} parent=11 // pred_region
          _
        $region52: #{camera_aware_forward.5} parent=11 // pred_fallthru
          _
        // Predicated region
        $region53: #{camera_aware_forward.5} parent=11 // pred_check
          %p457 = pneg %p321
        $region54: #{camera_aware_forward.5} parent=11 // pred_check_branch
          %459 = sbr.rel (%p457) target = $region56
        $region55: #{camera_aware_forward.5} parent=11 // pred_region
          _
        $region56: #{camera_aware_forward.5} parent=11 // pred_fallthru
          _
        // Predicated region
        $region57: #{camera_aware_forward.5} parent=11 // pred_check
          %p460 = pneg %p342
        $region58: #{camera_aware_forward.5} parent=11 // pred_check_branch
          %462 = sbr.rel (%p460) target = $region60
        $region59: #{camera_aware_forward.5} parent=11 // pred_region
          _
        $region60: #{camera_aware_forward.5} parent=11 // pred_fallthru
          _
        // Predicated region
        $region61: #{camera_aware_forward.5} parent=11 // pred_check
          %p463 = pneg %p363
        $region62: #{camera_aware_forward.5} parent=11 // pred_check_branch
          %465 = sbr.rel (%p463) target = $region64
        $region63: #{camera_aware_forward.5} parent=11 // pred_region
          _
        $region64: #{camera_aware_forward.5} parent=11 // pred_fallthru
          _
        // Predicated region
        $region65: #{camera_aware_forward.5} parent=11 // pred_check
          %p466 = pneg %p384
        $region66: #{camera_aware_forward.5} parent=11 // pred_check_branch
          %468 = sbr.rel (%p466) target = $region68
        $region67: #{camera_aware_forward.5} parent=11 // pred_region
          _
        $region68: #{camera_aware_forward.5} parent=11 // pred_fallthru
          _
      $region12: #{camera_aware_forward.5} parent=5 // pred_fallthru
        _
      %p469 = scmp.lt.s32.totalorder %s22, 4
      // Predicated region
      $region69: #{camera_aware_forward.5} parent=5 // pred_check
        %p470 = pneg %p469
      $region70: #{camera_aware_forward.5} parent=5 // pred_check_branch
        %472 = sbr.rel (%p470) target = $region72
      $region71: #{camera_aware_forward.5} parent=5 // pred_region
        // Predicated region
        $region73: #{camera_aware_forward.5} parent=71 // pred_check
          %p473 = pneg %p56
        $region74: #{camera_aware_forward.5} parent=71 // pred_check_branch
          %475 = sbr.rel (%p473) target = $region76
        $region75: #{camera_aware_forward.5} parent=71 // pred_region
          %s476 = sand.u32 %s46, 1
          %s477 = sand.u32 %s46, 1
          %s478 = smul.addr %s477, 16
          %s479 = scalar_lea.vmem [#allocation2], %s478
          %s480 = smul.addr %s29, 4
          %s481 = sadd.s32 %s30, %s480
          %s482 = smul.addr %s481, 8
          %s483 = scalar_lea.vmem %s0, %s482
          // Predicated region
          $region77: #{camera_aware_forward.5} parent=75 // pred_check
            _
          $region78: #{camera_aware_forward.5} parent=75 // pred_check_branch
            %485 = sbr.rel (0) target = $region80
          $region79: #{camera_aware_forward.5} parent=75 // pred_region
            // Predicated region
            $region81: #{camera_aware_forward.5} parent=79 // pred_check
              _
            $region82: #{camera_aware_forward.5} parent=79 // pred_check_branch
              %487 = sbr.rel (0) target = $region84
            $region83: #{camera_aware_forward.5} parent=79 // pred_region
              // Predicated region
              $region96: #{camera_aware_forward.5} parent=83 // pred_check
                _
              $region97: #{camera_aware_forward.5} parent=83 // pred_check_branch
                %504 = sbr.rel (0) target = $region99
              $region98: #{camera_aware_forward.5} parent=83 // pred_region
                loop: start=0, step=1, limit=1
                $region100: #{camera_aware_forward.5} parent=98 // loop_pre_header
                  _
                $region101: #{camera_aware_forward.5} parent=98 // loop_header
                  %s506 = sphi 0, %s510
                  %p507 = scmp.ge.s32.totalorder %s506, 1
                  %s511 = sphi %s483, %s483
                  %s512 = sphi %s479, %s479
                $region102: #{camera_aware_forward.5} parent=98 // loop_header_branch
                  %509 = sbr.rel (%p507) target = $region106
                $region103: #{camera_aware_forward.5} parent=98 // loop_body
                  %v513 = vld [vmem:[%s511] sm:$0xff]
                  %514 = vst [vmem:[%s512] sm:$0xff] %v513
                  %v515 = vld [vmem:[%s511 + $0x10] sm:$0xff]
                  %516 = vst [vmem:[%s512 + $0x8] sm:$0xff] %v515
                $region104: #{camera_aware_forward.5} parent=98 // loop_footer
                  %s510 = sadd.s32 1, %s506
                $region105: #{camera_aware_forward.5} parent=98 // loop_footer_branch
                  %505 = sbr.rel target = $region101
                $region106: #{camera_aware_forward.5} parent=98 // loop_exit
                  _
              $region99: #{camera_aware_forward.5} parent=83 // pred_fallthru
                _
              // Predicated region
              $region107: #{camera_aware_forward.5} parent=83 // pred_check
                _
              $region108: #{camera_aware_forward.5} parent=83 // pred_check_branch
                %518 = sbr.rel target = $region110
              $region109: #{camera_aware_forward.5} parent=83 // pred_region
                _
              $region110: #{camera_aware_forward.5} parent=83 // pred_fallthru
                _
            $region84: #{camera_aware_forward.5} parent=79 // pred_fallthru
              _
            // Predicated region
            $region85: #{camera_aware_forward.5} parent=79 // pred_check
              _
            $region86: #{camera_aware_forward.5} parent=79 // pred_check_branch
              %489 = sbr.rel target = $region88
            $region87: #{camera_aware_forward.5} parent=79 // pred_region
              loop: start=0, step=1, limit=1
              $region89: #{camera_aware_forward.5} parent=87 // loop_pre_header
                _
              $region90: #{camera_aware_forward.5} parent=87 // loop_header
                %s492 = sphi 0, %s496
                %p493 = scmp.ge.s32.totalorder %s492, 1
                %s497 = sphi %s483, %s483
                %s498 = sphi %s479, %s479
              $region91: #{camera_aware_forward.5} parent=87 // loop_header_branch
                %495 = sbr.rel (%p493) target = $region95
              $region92: #{camera_aware_forward.5} parent=87 // loop_body
                %v499 = vld [vmem:[%s497] sm:$0xff]
                %500 = vst [vmem:[%s498] sm:$0xff] %v499
                %v501 = vld [vmem:[%s497 + $0x10] sm:$0xff]
                %502 = vst [vmem:[%s498 + $0x8] sm:$0xff] %v501
              $region93: #{camera_aware_forward.5} parent=87 // loop_footer
                %s496 = sadd.s32 1, %s492
              $region94: #{camera_aware_forward.5} parent=87 // loop_footer_branch
                %491 = sbr.rel target = $region90
              $region95: #{camera_aware_forward.5} parent=87 // loop_exit
                _
            $region88: #{camera_aware_forward.5} parent=79 // pred_fallthru
              _
          $region80: #{camera_aware_forward.5} parent=75 // pred_fallthru
            _
          %519 = vnop
        $region76: #{camera_aware_forward.5} parent=71 // pred_fallthru
          _
        // Predicated region
        $region111: #{camera_aware_forward.5} parent=71 // pred_check
          %p520 = pneg %p84
        $region112: #{camera_aware_forward.5} parent=71 // pred_check_branch
          %522 = sbr.rel (%p520) target = $region114
        $region113: #{camera_aware_forward.5} parent=71 // pred_region
          %s523 = sand.u32 %s74, 1
          %s524 = sand.u32 %s74, 1
          %s525 = smul.addr %s524, 32
          %s526 = scalar_lea.vmem [#allocation3], %s525
          %s527 = smul.addr %s29, 8
          %s528 = sadd.s32 %s30, %s527
          %s529 = smul.addr %s528, 8
          %s530 = scalar_lea.vmem %s1, %s529
          // Predicated region
          $region115: #{camera_aware_forward.5} parent=113 // pred_check
            _
          $region116: #{camera_aware_forward.5} parent=113 // pred_check_branch
            %532 = sbr.rel (0) target = $region118
          $region117: #{camera_aware_forward.5} parent=113 // pred_region
            // Predicated region
            $region119: #{camera_aware_forward.5} parent=117 // pred_check
              _
            $region120: #{camera_aware_forward.5} parent=117 // pred_check_branch
              %534 = sbr.rel (0) target = $region122
            $region121: #{camera_aware_forward.5} parent=117 // pred_region
              // Predicated region
              $region134: #{camera_aware_forward.5} parent=121 // pred_check
                _
              $region135: #{camera_aware_forward.5} parent=121 // pred_check_branch
                %555 = sbr.rel (0) target = $region137
              $region136: #{camera_aware_forward.5} parent=121 // pred_region
                loop: start=0, step=1, limit=1
                $region138: #{camera_aware_forward.5} parent=136 // loop_pre_header
                  _
                $region139: #{camera_aware_forward.5} parent=136 // loop_header
                  %s557 = sphi 0, %s561
                  %p558 = scmp.ge.s32.totalorder %s557, 1
                  %s562 = sphi %s530, %s530
                  %s563 = sphi %s526, %s526
                $region140: #{camera_aware_forward.5} parent=136 // loop_header_branch
                  %560 = sbr.rel (%p558) target = $region144
                $region141: #{camera_aware_forward.5} parent=136 // loop_body
                  %v564 = vld [vmem:[%s562] sm:$0xff]
                  %565 = vst [vmem:[%s563] sm:$0xff] %v564
                  %v566 = vld [vmem:[%s562 + $0x10] sm:$0xff]
                  %567 = vst [vmem:[%s563 + $0x8] sm:$0xff] %v566
                  %v568 = vld [vmem:[%s562 + $0x20] sm:$0xff]
                  %569 = vst [vmem:[%s563 + $0x10] sm:$0xff] %v568
                  %v570 = vld [vmem:[%s562 + $0x30] sm:$0xff]
                  %571 = vst [vmem:[%s563 + $0x18] sm:$0xff] %v570
                $region142: #{camera_aware_forward.5} parent=136 // loop_footer
                  %s561 = sadd.s32 1, %s557
                $region143: #{camera_aware_forward.5} parent=136 // loop_footer_branch
                  %556 = sbr.rel target = $region139
                $region144: #{camera_aware_forward.5} parent=136 // loop_exit
                  _
              $region137: #{camera_aware_forward.5} parent=121 // pred_fallthru
                _
              // Predicated region
              $region145: #{camera_aware_forward.5} parent=121 // pred_check
                _
              $region146: #{camera_aware_forward.5} parent=121 // pred_check_branch
                %573 = sbr.rel target = $region148
              $region147: #{camera_aware_forward.5} parent=121 // pred_region
                _
              $region148: #{camera_aware_forward.5} parent=121 // pred_fallthru
                _
            $region122: #{camera_aware_forward.5} parent=117 // pred_fallthru
              _
            // Predicated region
            $region123: #{camera_aware_forward.5} parent=117 // pred_check
              _
            $region124: #{camera_aware_forward.5} parent=117 // pred_check_branch
              %536 = sbr.rel target = $region126
            $region125: #{camera_aware_forward.5} parent=117 // pred_region
              loop: start=0, step=1, limit=1
              $region127: #{camera_aware_forward.5} parent=125 // loop_pre_header
                _
              $region128: #{camera_aware_forward.5} parent=125 // loop_header
                %s539 = sphi 0, %s543
                %p540 = scmp.ge.s32.totalorder %s539, 1
                %s544 = sphi %s530, %s530
                %s545 = sphi %s526, %s526
              $region129: #{camera_aware_forward.5} parent=125 // loop_header_branch
                %542 = sbr.rel (%p540) target = $region133
              $region130: #{camera_aware_forward.5} parent=125 // loop_body
                %v546 = vld [vmem:[%s544] sm:$0xff]
                %547 = vst [vmem:[%s545] sm:$0xff] %v546
                %v548 = vld [vmem:[%s544 + $0x10] sm:$0xff]
                %549 = vst [vmem:[%s545 + $0x8] sm:$0xff] %v548
                %v550 = vld [vmem:[%s544 + $0x20] sm:$0xff]
                %551 = vst [vmem:[%s545 + $0x10] sm:$0xff] %v550
                %v552 = vld [vmem:[%s544 + $0x30] sm:$0xff]
                %553 = vst [vmem:[%s545 + $0x18] sm:$0xff] %v552
              $region131: #{camera_aware_forward.5} parent=125 // loop_footer
                %s543 = sadd.s32 1, %s539
              $region132: #{camera_aware_forward.5} parent=125 // loop_footer_branch
                %538 = sbr.rel target = $region128
              $region133: #{camera_aware_forward.5} parent=125 // loop_exit
                _
            $region126: #{camera_aware_forward.5} parent=117 // pred_fallthru
              _
          $region118: #{camera_aware_forward.5} parent=113 // pred_fallthru
            _
          %574 = vnop
        $region114: #{camera_aware_forward.5} parent=71 // pred_fallthru
          _
      $region72: #{camera_aware_forward.5} parent=5 // pred_fallthru
        _
      %p575 = scmp.le.s32.totalorder 1, %s22
      %p576 = scmp.lt.s32.totalorder %s22, 5
      %p577 = pnand %p575, %p576
      %p578 = pneg %p577
      // Predicated region
      $region149: #{camera_aware_forward.5} parent=5 // pred_check
        _
      $region150: #{camera_aware_forward.5} parent=5 // pred_check_branch
        %580 = sbr.rel (%p577) target = $region152
      $region151: #{camera_aware_forward.5} parent=5 // pred_region
        %s581 = ssub.s32 %s22, 1
        %s582 = sand.u32 %s49, 1
        %s583 = sand.u32 %s49, 1
        %s584 = smul.addr %s583, 16
        %s585 = scalar_lea.vmem [#allocation2], %s584
        // Predicated region
        $region153: #{camera_aware_forward.5} parent=151 // pred_check
          %p586 = pneg %p62
        $region154: #{camera_aware_forward.5} parent=151 // pred_check_branch
          %588 = sbr.rel (%p586) target = $region156
        $region155: #{camera_aware_forward.5} parent=151 // pred_region
          _
        $region156: #{camera_aware_forward.5} parent=151 // pred_fallthru
          _
        %s589 = sand.u32 %s77, 1
        %s590 = sand.u32 %s77, 1
        %s591 = smul.addr %s590, 32
        %s592 = scalar_lea.vmem [#allocation3], %s591
        // Predicated region
        $region157: #{camera_aware_forward.5} parent=151 // pred_check
          %p593 = pneg %p90
        $region158: #{camera_aware_forward.5} parent=151 // pred_check_branch
          %595 = sbr.rel (%p593) target = $region160
        $region159: #{camera_aware_forward.5} parent=151 // pred_region
          _
        $region160: #{camera_aware_forward.5} parent=151 // pred_fallthru
          _
        %s596 = sand.u32 %s49, 1
        %s597 = sand.u32 %s49, 1
        %s598 = smul.addr %s597, 16
        %s599 = scalar_lea.vmem [#allocation2], %s598
        %p600 = pneg %p62
        %p601 = pneg %p59
        %s602 = sand.u32 %s77, 1
        %s603 = sand.u32 %s77, 1
        %s604 = smul.addr %s603, 32
        %s605 = scalar_lea.vmem [#allocation3], %s604
        %p606 = pneg %p90
        %p607 = pneg %p87
        %p608 = pneg %p111
        %p609 = pneg %p108
        %p610 = pneg %p132
        %p611 = pneg %p129
        %p612 = pneg %p153
        %p613 = pneg %p150
        %p614 = pneg %p174
        %p615 = pneg %p171
        %p616 = pneg %p195
        %p617 = pneg %p192
        %p618 = pneg %p216
        %p619 = pneg %p213
        %p620 = pneg %p237
        %p621 = pneg %p234
        %p622 = pneg %p258
        %p623 = pneg %p255
        %p624 = pneg %p279
        %p625 = pneg %p276
        %p626 = pneg %p300
        %p627 = pneg %p297
        %p628 = pneg %p321
        %p629 = pneg %p318
        %p630 = pneg %p342
        %p631 = pneg %p339
        %p632 = pneg %p363
        %p633 = pneg %p360
        %p634 = pneg %p384
        %p635 = pneg %p381
        %p636 = pneg %p412
        %p637 = pneg %p409
        %s638 = sand.u32 %s399, 1
        %s639 = sand.u32 %s399, 1
        %s640 = smul.addr %s639, 32
        %s641 = scalar_lea.vmem [#allocation4], %s640
        %v643 = vld [vmem:[%s5] sm:$0xff]
        %v644 = vld [vmem:[%s5 + $0x8] sm:$0xff]
        %v645 = vld [vmem:[%s5 + $0x10] sm:$0xff]
        %v646 = vld [vmem:[%s5 + $0x18] sm:$0xff]
        %v647 = vld [vmem:[%s5 + $0x20] sm:$0xff]
        %v648 = vld [vmem:[%s5 + $0x28] sm:$0xff]
        %v649 = vld [vmem:[%s5 + $0x30] sm:$0xff]
        %v650 = vld [vmem:[%s5 + $0x38] sm:$0xff]
        %vm651 = vcmask 7168
        %v652 = vsel %vm651, %v643, 0.0
        %v653 = vsel %vm651, %v647, 0.0
        %v654 = vadd.f32 %v652, %v653
        %v655 = vsel %vm651, %v644, 0.0
        %v656 = vsel %vm651, %v648, 0.0
        %v657 = vadd.f32 %v655, %v656
        %v658 = vsel %vm651, %v645, 0.0
        %v659 = vsel %vm651, %v649, 0.0
        %v660 = vadd.f32 %v658, %v659
        %v661 = vsel %vm651, %v646, 0.0
        %v662 = vsel %vm651, %v650, 0.0
        %v663 = vadd.f32 %v661, %v662
        %v664 = vld [vmem:[%s6] sm:$0xff]
        %v665 = vld [vmem:[%s6 + $0x8] sm:$0xff]
        %v666 = vld [vmem:[%s6 + $0x10] sm:$0xff]
        %v667 = vld [vmem:[%s6 + $0x18] sm:$0xff]
        %v668 = vld [vmem:[%s6 + $0x20] sm:$0xff]
        %v669 = vld [vmem:[%s6 + $0x28] sm:$0xff]
        %v670 = vld [vmem:[%s6 + $0x30] sm:$0xff]
        %v671 = vld [vmem:[%s6 + $0x38] sm:$0xff]
        %v672 = vsel %vm651, %v664, 0.0
        %v673 = vsel %vm651, %v668, 0.0
        %v674 = vadd.f32 %v672, %v673
        %v675 = vsel %vm651, %v665, 0.0
        %v676 = vsel %vm651, %v669, 0.0
        %v677 = vadd.f32 %v675, %v676
        %v678 = vsel %vm651, %v666, 0.0
        %v679 = vsel %vm651, %v670, 0.0
        %v680 = vadd.f32 %v678, %v679
        %v681 = vsel %vm651, %v667, 0.0
        %v682 = vsel %vm651, %v671, 0.0
        %v683 = vadd.f32 %v681, %v682
        %v684 = vmul.f32 %v654, 0.001953125
        %v685 = vmul.f32 %v657, 0.001953125
        %v686 = vmul.f32 %v660, 0.001953125
        %v687 = vmul.f32 %v663, 0.001953125
        %v688 = vmul.f32 %v674, 0.001953125
        %v689 = vmul.f32 %v677, 0.001953125
        %v690 = vmul.f32 %v680, 0.001953125
        %v691 = vmul.f32 %v683, 0.001953125
        %v692 = vmul.f32 %v684, %v684
        %v693 = vmul.f32 %v685, %v685
        %v694 = vmul.f32 %v686, %v686
        %v695 = vmul.f32 %v687, %v687
        %v696 = vsub.f32 %v688, %v692
        %v697 = vsub.f32 %v689, %v693
        %v698 = vsub.f32 %v690, %v694
        %v699 = vsub.f32 %v691, %v695
        %v700 = vmax.f32 %v696, 0.0
        %v701 = vmax.f32 %v697, 0.0
        %v702 = vmax.f32 %v698, 0.0
        %v703 = vmax.f32 %v699, 0.0
        %v704 = vld [vmem:[%s3] sm:$0xff]
        %v705 = vld [vmem:[%s3 + $0x8] sm:$0xff]
        %v706 = vld [vmem:[%s3 + $0x10] sm:$0xff]
        %v707 = vld [vmem:[%s3 + $0x18] sm:$0xff]
        %v708 = vadd.f32 %v700, 1e-05
        %v709 = vadd.f32 %v701, 1e-05
        %v710 = vadd.f32 %v702, 1e-05
        %v711 = vadd.f32 %v703, 1e-05
        %v712 = vrsqrt.pop %v708
        %v713 = vrsqrt.pop %v709
        %v714 = vrsqrt.pop %v710
        %v715 = vrsqrt.pop %v711
        %v716 = vmul.f32 %v704, %v712
        %v717 = vmul.f32 %v705, %v713
        %v718 = vmul.f32 %v706, %v714
        %v719 = vmul.f32 %v707, %v715
        %v720 = vld [vmem:[%s4] sm:$0xff]
        %v721 = vld [vmem:[%s4 + $0x8] sm:$0xff]
        %v722 = vld [vmem:[%s4 + $0x10] sm:$0xff]
        %v723 = vld [vmem:[%s4 + $0x18] sm:$0xff]
        %v724 = vmul.f32 %v684, %v716
        %v725 = vmul.f32 %v685, %v717
        %v726 = vmul.f32 %v686, %v718
        %v727 = vmul.f32 %v687, %v719
        %v728 = vsub.f32 %v720, %v724
        %v729 = vsub.f32 %v721, %v725
        %v730 = vsub.f32 %v722, %v726
        %v731 = vsub.f32 %v723, %v727
        %v732 = vld [vmem:[%s10] sm:$0xff]
        %v733 = vld [vmem:[%s10 + $0x8] sm:$0xff]
        %v734 = vld [vmem:[%s10 + $0x10] sm:$0xff]
        %v735 = vld [vmem:[%s10 + $0x18] sm:$0xff]
        %v736 = vld [vmem:[%s10 + $0x20] sm:$0xff]
        %v737 = vld [vmem:[%s10 + $0x28] sm:$0xff]
        %v738 = vld [vmem:[%s10 + $0x30] sm:$0xff]
        %v739 = vld [vmem:[%s10 + $0x38] sm:$0xff]
        %v740 = vsel %vm651, %v732, 0.0
        %v741 = vsel %vm651, %v736, 0.0
        %v742 = vadd.f32 %v740, %v741
        %v743 = vsel %vm651, %v733, 0.0
        %v744 = vsel %vm651, %v737, 0.0
        %v745 = vadd.f32 %v743, %v744
        %v746 = vsel %vm651, %v734, 0.0
        %v747 = vsel %vm651, %v738, 0.0
        %v748 = vadd.f32 %v746, %v747
        %v749 = vsel %vm651, %v735, 0.0
        %v750 = vsel %vm651, %v739, 0.0
        %v751 = vadd.f32 %v749, %v750
        %v752 = vld [vmem:[%s11] sm:$0xff]
        %v753 = vld [vmem:[%s11 + $0x8] sm:$0xff]
        %v754 = vld [vmem:[%s11 + $0x10] sm:$0xff]
        %v755 = vld [vmem:[%s11 + $0x18] sm:$0xff]
        %v756 = vld [vmem:[%s11 + $0x20] sm:$0xff]
        %v757 = vld [vmem:[%s11 + $0x28] sm:$0xff]
        %v758 = vld [vmem:[%s11 + $0x30] sm:$0xff]
        %v759 = vld [vmem:[%s11 + $0x38] sm:$0xff]
        %v760 = vsel %vm651, %v752, 0.0
        %v761 = vsel %vm651, %v756, 0.0
        %v762 = vadd.f32 %v760, %v761
        %v763 = vsel %vm651, %v753, 0.0
        %v764 = vsel %vm651, %v757, 0.0
        %v765 = vadd.f32 %v763, %v764
        %v766 = vsel %vm651, %v754, 0.0
        %v767 = vsel %vm651, %v758, 0.0
        %v768 = vadd.f32 %v766, %v767
        %v769 = vsel %vm651, %v755, 0.0
        %v770 = vsel %vm651, %v759, 0.0
        %v771 = vadd.f32 %v769, %v770
        %v772 = vmul.f32 %v742, 0.001953125
        %v773 = vmul.f32 %v745, 0.001953125
        %v774 = vmul.f32 %v748, 0.001953125
        %v775 = vmul.f32 %v751, 0.001953125
        %v776 = vmul.f32 %v762, 0.001953125
        %v777 = vmul.f32 %v765, 0.001953125
        %v778 = vmul.f32 %v768, 0.001953125
        %v779 = vmul.f32 %v771, 0.001953125
        %v780 = vmul.f32 %v772, %v772
        %v781 = vmul.f32 %v773, %v773
        %v782 = vmul.f32 %v774, %v774
        %v783 = vmul.f32 %v775, %v775
        %v784 = vsub.f32 %v776, %v780
        %v785 = vsub.f32 %v777, %v781
        %v786 = vsub.f32 %v778, %v782
        %v787 = vsub.f32 %v779, %v783
        %v788 = vmax.f32 %v784, 0.0
        %v789 = vmax.f32 %v785, 0.0
        %v790 = vmax.f32 %v786, 0.0
        %v791 = vmax.f32 %v787, 0.0
        %v792 = vld [vmem:[%s8] sm:$0xff]
        %v793 = vld [vmem:[%s8 + $0x8] sm:$0xff]
        %v794 = vld [vmem:[%s8 + $0x10] sm:$0xff]
        %v795 = vld [vmem:[%s8 + $0x18] sm:$0xff]
        %v796 = vadd.f32 %v788, 1e-05
        %v797 = vadd.f32 %v789, 1e-05
        %v798 = vadd.f32 %v790, 1e-05
        %v799 = vadd.f32 %v791, 1e-05
        %v800 = vrsqrt.pop %v796
        %v801 = vrsqrt.pop %v797
        %v802 = vrsqrt.pop %v798
        %v803 = vrsqrt.pop %v799
        %v804 = vmul.f32 %v792, %v800
        %v805 = vmul.f32 %v793, %v801
        %v806 = vmul.f32 %v794, %v802
        %v807 = vmul.f32 %v795, %v803
        %v808 = vld [vmem:[%s9] sm:$0xff]
        %v809 = vld [vmem:[%s9 + $0x8] sm:$0xff]
        %v810 = vld [vmem:[%s9 + $0x10] sm:$0xff]
        %v811 = vld [vmem:[%s9 + $0x18] sm:$0xff]
        %v812 = vmul.f32 %v772, %v804
        %v813 = vmul.f32 %v773, %v805
        %v814 = vmul.f32 %v774, %v806
        %v815 = vmul.f32 %v775, %v807
        %v816 = vsub.f32 %v808, %v812
        %v817 = vsub.f32 %v809, %v813
        %v818 = vsub.f32 %v810, %v814
        %v819 = vsub.f32 %v811, %v815
        %v820 = vld [vmem:[%s585] sm:$0xff]
        %v821 = vld [vmem:[%s585 + $0x8] sm:$0xff]
        %v822 = vpack.c.bf16 %v821, %v820
        %v823 = vld [vmem:[%s2] sm:$0xf]
        %v824 = vld [vmem:[%s2 + $0x4] sm:$0xf]
        %v825 = vld [vmem:[%s2 + $0x8] sm:$0xf]
        %v826 = vld [vmem:[%s2 + $0xc] sm:$0xf]
        %v831 = vunpack.c.l.b16 %v823
        %v832 = vunpack.c.l.b16 %v824
        %v833 = vunpack.c.l.b16 %v825
        %v834 = vunpack.c.l.b16 %v826
        %v835 = vpack.c.b16 %v832, %v831
        %v836 = vpack.c.b16 %v834, %v833
        %vm837 = vcmask 130048
        %v839 = vsel %vm837, %v835, 0
        %v842 = vsel %vm837, %v836, 0
        %844 = vmatprep.subr.bf16.mxu0 0
        %845 = vmatpush1.bf16.msra.mxu0 %v822
        %846 = vmatprep.subr.bf16.mxu0 0
        %847 = vmatpush1.bf16.msra.mxu0 0
        %848 = vmatprep.subr.bf16.mxu0 0
        %849 = vmatpush1.bf16.msra.mxu0 0
        %850 = vmatprep.subr.bf16.mxu0 0
        %851 = vmatpush1.bf16.msra.mxu0 0
        %852 = vmatprep.subr.bf16.mxu0 0
        %853 = vmatpush1.bf16.msra.mxu0 0
        %854 = vmatprep.subr.bf16.mxu0 0
        %855 = vmatpush1.bf16.msra.mxu0 0
        %856 = vmatprep.subr.bf16.mxu0 0
        %857 = vmatpush1.bf16.msra.mxu0 0
        %858 = vmatprep.subr.bf16.mxu0 0
        %859 = vmatpush1.bf16.msra.mxu0 0
        %860 = vmatprep.subr.bf16.mxu0 0
        %861 = vmatpush1.bf16.msra.mxu0 0
        %862 = vmatprep.subr.bf16.mxu0 0
        %863 = vmatpush1.bf16.msra.mxu0 0
        %864 = vmatprep.subr.bf16.mxu0 0
        %865 = vmatpush1.bf16.msra.mxu0 0
        %866 = vmatprep.subr.bf16.mxu0 0
        %867 = vmatpush1.bf16.msra.mxu0 0
        %868 = vmatprep.subr.bf16.mxu0 0
        %869 = vmatpush1.bf16.msra.mxu0 0
        %870 = vmatprep.subr.bf16.mxu0 0
        %871 = vmatpush1.bf16.msra.mxu0 0
        %872 = vmatprep.subr.bf16.mxu0 0
        %873 = vmatpush1.bf16.msra.mxu0 0
        %874 = vmatprep.subr.bf16.mxu0 0
        %875 = vmatpush1.bf16.msra.mxu0 0
        %876 = vmatprep.mubr.bf16.mxu0 0
        %877 = vmatmul.mubr.bf16.gmra.mrb[0].mxu0 %v839
        %v878 = vpop.f32.mrb[0].mxu0
        %v879 = vadd.f32 0.0, %v878
        %v880 = vpop.f32.mrb[0].mxu0
        %v881 = vpop.f32.mrb[0].mxu0
        %v882 = vadd.f32 0.0, %v881
        %v883 = vpop.f32.mrb[0].mxu0
        %884 = vmatprep.mubr.bf16.mxu0 0
        %885 = vmatmul.mubr.bf16.gmra.mrb[0].mxu0 %v842
        %v886 = vpop.f32.mrb[0].mxu0
        %v887 = vadd.f32 0.0, %v886
        %v888 = vpop.f32.mrb[0].mxu0
        %v889 = vpop.f32.mrb[0].mxu0
        %v890 = vadd.f32 0.0, %v889
        %v891 = vpop.f32.mrb[0].mxu0
        %892 = vdwg.mxu0
        %894 = vset.pattern.permute.xlu0 0
        %895 = vperm.xlu0 %894, %v716
        %v896 = vpop.permute.xlu0 %895
        %899 = vset.pattern.permute.xlu0 0
        %900 = vperm.xlu0 %899, %v717
        %v901 = vpop.permute.xlu0 %900
        %904 = vset.pattern.permute.xlu0 0
        %905 = vperm.xlu0 %904, %v718
        %v906 = vpop.permute.xlu0 %905
        %909 = vset.pattern.permute.xlu0 0
        %910 = vperm.xlu0 %909, %v719
        %v911 = vpop.permute.xlu0 %910
        %v913 = vmul.f32 %v879, %v896
        %v914 = vmul.f32 %v882, %v901
        %v915 = vmul.f32 %v887, %v906
        %v916 = vmul.f32 %v890, %v911
        %918 = vset.pattern.permute.xlu0 0
        %919 = vperm.xlu0 %918, %v728
        %v920 = vpop.permute.xlu0 %919
        %923 = vset.pattern.permute.xlu0 0
        %924 = vperm.xlu0 %923, %v729
        %v925 = vpop.permute.xlu0 %924
        %928 = vset.pattern.permute.xlu0 0
        %929 = vperm.xlu0 %928, %v730
        %v930 = vpop.permute.xlu0 %929
        %933 = vset.pattern.permute.xlu0 0
        %934 = vperm.xlu0 %933, %v731
        %v935 = vpop.permute.xlu0 %934
        %v937 = vadd.f32 %v913, %v920
        %v938 = vadd.f32 %v914, %v925
        %v939 = vadd.f32 %v915, %v930
        %v940 = vadd.f32 %v916, %v935
        %v941 = vmax.f32 %v937, 0.0
        %v942 = vmax.f32 %v938, 0.0
        %v943 = vmax.f32 %v939, 0.0
        %v944 = vmax.f32 %v940, 0.0
        %v945 = vld [vmem:[%s7] sm:$0xf]
        %v946 = vld [vmem:[%s7 + $0x4] sm:$0xf]
        %v947 = vld [vmem:[%s7 + $0x8] sm:$0xf]
        %v948 = vld [vmem:[%s7 + $0xc] sm:$0xf]
        %v949 = vpack.c.bf16 %v942, %v941
        %v950 = vpack.c.bf16 %v944, %v943
        %v955 = vunpack.c.l.b16 %v945
        %v956 = vunpack.c.l.b16 %v946
        %v957 = vunpack.c.l.b16 %v947
        %v958 = vunpack.c.l.b16 %v948
        %v959 = vpack.c.b16 %v956, %v955
        %v960 = vpack.c.b16 %v958, %v957
        %vm961 = vcmask 261120
        %v963 = vsel %vm961, %v959, 0
        %v966 = vsel %vm961, %v960, 0
        %968 = vmatprep.subr.bf16.mxu0 0
        %969 = vmatpush1.bf16.msra.mxu0 %v949
        %970 = vmatprep.subr.bf16.mxu0 0
        %971 = vmatpush1.bf16.msra.mxu0 %v950
        %972 = vmatprep.subr.bf16.mxu0 0
        %973 = vmatpush1.bf16.msra.mxu0 0
        %974 = vmatprep.subr.bf16.mxu0 0
        %975 = vmatpush1.bf16.msra.mxu0 0
        %976 = vmatprep.subr.bf16.mxu0 0
        %977 = vmatpush1.bf16.msra.mxu0 0
        %978 = vmatprep.subr.bf16.mxu0 0
        %979 = vmatpush1.bf16.msra.mxu0 0
        %980 = vmatprep.subr.bf16.mxu0 0
        %981 = vmatpush1.bf16.msra.mxu0 0
        %982 = vmatprep.subr.bf16.mxu0 0
        %983 = vmatpush1.bf16.msra.mxu0 0
        %984 = vmatprep.subr.bf16.mxu0 0
        %985 = vmatpush1.bf16.msra.mxu0 0
        %986 = vmatprep.subr.bf16.mxu0 0
        %987 = vmatpush1.bf16.msra.mxu0 0
        %988 = vmatprep.subr.bf16.mxu0 0
        %989 = vmatpush1.bf16.msra.mxu0 0
        %990 = vmatprep.subr.bf16.mxu0 0
        %991 = vmatpush1.bf16.msra.mxu0 0
        %992 = vmatprep.subr.bf16.mxu0 0
        %993 = vmatpush1.bf16.msra.mxu0 0
        %994 = vmatprep.subr.bf16.mxu0 0
        %995 = vmatpush1.bf16.msra.mxu0 0
        %996 = vmatprep.subr.bf16.mxu0 0
        %997 = vmatpush1.bf16.msra.mxu0 0
        %998 = vmatprep.subr.bf16.mxu0 0
        %999 = vmatpush1.bf16.msra.mxu0 0
        %1000 = vmatprep.mubr.bf16.mxu0 0
        %1001 = vmatmul.mubr.bf16.gmra.mrb[0].mxu0 %v963
        %v1002 = vpop.f32.mrb[0].mxu0
        %v1003 = vadd.f32 0.0, %v1002
        %v1004 = vpop.f32.mrb[0].mxu0
        %v1005 = vpop.f32.mrb[0].mxu0
        %v1006 = vadd.f32 0.0, %v1005
        %v1007 = vpop.f32.mrb[0].mxu0
        %1008 = vmatprep.mubr.bf16.mxu0 0
        %1009 = vmatmul.mubr.bf16.gmra.mrb[0].mxu0 %v966
        %v1010 = vpop.f32.mrb[0].mxu0
        %v1011 = vadd.f32 0.0, %v1010
        %v1012 = vpop.f32.mrb[0].mxu0
        %v1013 = vpop.f32.mrb[0].mxu0
        %v1014 = vadd.f32 0.0, %v1013
        %v1015 = vpop.f32.mrb[0].mxu0
        %1016 = vdwg.mxu0
        %1018 = vset.pattern.permute.xlu0 0
        %1019 = vperm.xlu0 %1018, %v804
        %v1020 = vpop.permute.xlu0 %1019
        %1023 = vset.pattern.permute.xlu0 0
        %1024 = vperm.xlu0 %1023, %v805
        %v1025 = vpop.permute.xlu0 %1024
        %1028 = vset.pattern.permute.xlu0 0
        %1029 = vperm.xlu0 %1028, %v806
        %v1030 = vpop.permute.xlu0 %1029
        %1033 = vset.pattern.permute.xlu0 0
        %1034 = vperm.xlu0 %1033, %v807
        %v1035 = vpop.permute.xlu0 %1034
        %v1037 = vmul.f32 %v1003, %v1020
        %v1038 = vmul.f32 %v1006, %v1025
        %v1039 = vmul.f32 %v1011, %v1030
        %v1040 = vmul.f32 %v1014, %v1035
        %1042 = vset.pattern.permute.xlu0 0
        %1043 = vperm.xlu0 %1042, %v816
        %v1044 = vpop.permute.xlu0 %1043
        %1047 = vset.pattern.permute.xlu0 0
        %1048 = vperm.xlu0 %1047, %v817
        %v1049 = vpop.permute.xlu0 %1048
        %1052 = vset.pattern.permute.xlu0 0
        %1053 = vperm.xlu0 %1052, %v818
        %v1054 = vpop.permute.xlu0 %1053
        %1057 = vset.pattern.permute.xlu0 0
        %1058 = vperm.xlu0 %1057, %v819
        %v1059 = vpop.permute.xlu0 %1058
        %v1061 = vadd.f32 %v1037, %v1044
        %v1062 = vadd.f32 %v1038, %v1049
        %v1063 = vadd.f32 %v1039, %v1054
        %v1064 = vadd.f32 %v1040, %v1059
        %v1065 = vmax.f32 %v1061, 0.0
        %v1066 = vmax.f32 %v1062, 0.0
        %v1067 = vmax.f32 %v1063, 0.0
        %v1068 = vmax.f32 %v1064, 0.0
        %v1069 = vld [vmem:[%s12] sm:$0xf]
        %v1070 = vld [vmem:[%s12 + $0x4] sm:$0xf]
        %v1071 = vld [vmem:[%s12 + $0x8] sm:$0xf]
        %v1072 = vld [vmem:[%s12 + $0xc] sm:$0xf]
        %v1073 = vpack.c.bf16 %v1066, %v1065
        %v1074 = vpack.c.bf16 %v1068, %v1067
        %v1075 = vld [vmem:[%s13] sm:$0xff]
        %v1076 = vld [vmem:[%s13 + $0x8] sm:$0xff]
        %v1077 = vld [vmem:[%s13 + $0x10] sm:$0xff]
        %v1078 = vld [vmem:[%s13 + $0x18] sm:$0xff]
        %1080 = vset.pattern.permute.xlu0 0
        %1081 = vperm.xlu0 %1080, %v1075
        %v1082 = vpop.permute.xlu0 %1081
        %1085 = vset.pattern.permute.xlu0 0
        %1086 = vperm.xlu0 %1085, %v1076
        %v1087 = vpop.permute.xlu0 %1086
        %1090 = vset.pattern.permute.xlu0 0
        %1091 = vperm.xlu0 %1090, %v1077
        %v1092 = vpop.permute.xlu0 %1091
        %1095 = vset.pattern.permute.xlu0 0
        %1096 = vperm.xlu0 %1095, %v1078
        %v1097 = vpop.permute.xlu0 %1096
        %v1103 = vunpack.c.l.b16 %v1069
        %v1104 = vunpack.c.l.b16 %v1070
        %v1105 = vunpack.c.l.b16 %v1071
        %v1106 = vunpack.c.l.b16 %v1072
        %v1107 = vpack.c.b16 %v1104, %v1103
        %v1108 = vpack.c.b16 %v1106, %v1105
        %v1110 = vsel %vm961, %v1107, 0
        %v1113 = vsel %vm961, %v1108, 0
        %1115 = vmatprep.subr.bf16.mxu0 0
        %1116 = vmatpush1.bf16.msra.mxu0 %v1073
        %1117 = vmatprep.subr.bf16.mxu0 0
        %1118 = vmatpush1.bf16.msra.mxu0 %v1074
        %1119 = vmatprep.subr.bf16.mxu0 0
        %1120 = vmatpush1.bf16.msra.mxu0 0
        %1121 = vmatprep.subr.bf16.mxu0 0
        %1122 = vmatpush1.bf16.msra.mxu0 0
        %1123 = vmatprep.subr.bf16.mxu0 0
        %1124 = vmatpush1.bf16.msra.mxu0 0
        %1125 = vmatprep.subr.bf16.mxu0 0
        %1126 = vmatpush1.bf16.msra.mxu0 0
        %1127 = vmatprep.subr.bf16.mxu0 0
        %1128 = vmatpush1.bf16.msra.mxu0 0
        %1129 = vmatprep.subr.bf16.mxu0 0
        %1130 = vmatpush1.bf16.msra.mxu0 0
        %1131 = vmatprep.subr.bf16.mxu0 0
        %1132 = vmatpush1.bf16.msra.mxu0 0
        %1133 = vmatprep.subr.bf16.mxu0 0
        %1134 = vmatpush1.bf16.msra.mxu0 0
        %1135 = vmatprep.subr.bf16.mxu0 0
        %1136 = vmatpush1.bf16.msra.mxu0 0
        %1137 = vmatprep.subr.bf16.mxu0 0
        %1138 = vmatpush1.bf16.msra.mxu0 0
        %1139 = vmatprep.subr.bf16.mxu0 0
        %1140 = vmatpush1.bf16.msra.mxu0 0
        %1141 = vmatprep.subr.bf16.mxu0 0
        %1142 = vmatpush1.bf16.msra.mxu0 0
        %1143 = vmatprep.subr.bf16.mxu0 0
        %1144 = vmatpush1.bf16.msra.mxu0 0
        %1145 = vmatprep.subr.bf16.mxu0 0
        %1146 = vmatpush1.bf16.msra.mxu0 0
        %1147 = vmatprep.mubr.bf16.mxu0 0
        %1148 = vmatmul.mubr.bf16.gmra.mrb[0].mxu0 %v1110
        %v1149 = vpop.f32.mrb[0].mxu0
        %v1150 = vadd.f32 %v1082, %v1149
        %v1151 = vpop.f32.mrb[0].mxu0
        %v1152 = vpop.f32.mrb[0].mxu0
        %v1153 = vadd.f32 %v1087, %v1152
        %v1154 = vpop.f32.mrb[0].mxu0
        %1155 = vmatprep.mubr.bf16.mxu0 0
        %1156 = vmatmul.mubr.bf16.gmra.mrb[0].mxu0 %v1113
        %v1157 = vpop.f32.mrb[0].mxu0
        %v1158 = vadd.f32 %v1092, %v1157
        %v1159 = vpop.f32.mrb[0].mxu0
        %v1160 = vpop.f32.mrb[0].mxu0
        %v1161 = vadd.f32 %v1097, %v1160
        %v1162 = vpop.f32.mrb[0].mxu0
        %1163 = vdwg.mxu0
        %v1164 = vmax.f32 %v1150, 0.0
        %v1165 = vmax.f32 %v1153, 0.0
        %v1166 = vmax.f32 %v1158, 0.0
        %v1167 = vmax.f32 %v1161, 0.0
        %v1168 = vld [vmem:[%s14] sm:$0xf]
        %v1169 = vld [vmem:[%s14 + $0x4] sm:$0xf]
        %v1170 = vld [vmem:[%s14 + $0x8] sm:$0xf]
        %v1171 = vld [vmem:[%s14 + $0xc] sm:$0xf]
        %v1172 = vpack.c.bf16 %v1165, %v1164
        %v1173 = vpack.c.bf16 %v1167, %v1166
        %v1174 = vld [vmem:[%s15] sm:$0xff]
        %v1175 = vld [vmem:[%s15 + $0x8] sm:$0xff]
        %v1176 = vld [vmem:[%s15 + $0x10] sm:$0xff]
        %v1177 = vld [vmem:[%s15 + $0x18] sm:$0xff]
        %1179 = vset.pattern.permute.xlu0 0
        %1180 = vperm.xlu0 %1179, %v1174
        %v1181 = vpop.permute.xlu0 %1180
        %1184 = vset.pattern.permute.xlu0 0
        %1185 = vperm.xlu0 %1184, %v1175
        %v1186 = vpop.permute.xlu0 %1185
        %1189 = vset.pattern.permute.xlu0 0
        %1190 = vperm.xlu0 %1189, %v1176
        %v1191 = vpop.permute.xlu0 %1190
        %1194 = vset.pattern.permute.xlu0 0
        %1195 = vperm.xlu0 %1194, %v1177
        %v1196 = vpop.permute.xlu0 %1195
        %v1202 = vunpack.c.l.b16 %v1168
        %v1203 = vunpack.c.l.b16 %v1169
        %v1204 = vunpack.c.l.b16 %v1170
        %v1205 = vunpack.c.l.b16 %v1171
        %v1206 = vpack.c.b16 %v1203, %v1202
        %v1207 = vpack.c.b16 %v1205, %v1204
        %v1209 = vsel %vm961, %v1206, 0
        %v1212 = vsel %vm961, %v1207, 0
        %1214 = vmatprep.subr.bf16.mxu0 0
        %1215 = vmatpush1.bf16.msra.mxu0 %v1172
        %1216 = vmatprep.subr.bf16.mxu0 0
        %1217 = vmatpush1.bf16.msra.mxu0 %v1173
        %1218 = vmatprep.subr.bf16.mxu0 0
        %1219 = vmatpush1.bf16.msra.mxu0 0
        %1220 = vmatprep.subr.bf16.mxu0 0
        %1221 = vmatpush1.bf16.msra.mxu0 0
        %1222 = vmatprep.subr.bf16.mxu0 0
        %1223 = vmatpush1.bf16.msra.mxu0 0
        %1224 = vmatprep.subr.bf16.mxu0 0
        %1225 = vmatpush1.bf16.msra.mxu0 0
        %1226 = vmatprep.subr.bf16.mxu0 0
        %1227 = vmatpush1.bf16.msra.mxu0 0
        %1228 = vmatprep.subr.bf16.mxu0 0
        %1229 = vmatpush1.bf16.msra.mxu0 0
        %1230 = vmatprep.subr.bf16.mxu0 0
        %1231 = vmatpush1.bf16.msra.mxu0 0
        %1232 = vmatprep.subr.bf16.mxu0 0
        %1233 = vmatpush1.bf16.msra.mxu0 0
        %1234 = vmatprep.subr.bf16.mxu0 0
        %1235 = vmatpush1.bf16.msra.mxu0 0
        %1236 = vmatprep.subr.bf16.mxu0 0
        %1237 = vmatpush1.bf16.msra.mxu0 0
        %1238 = vmatprep.subr.bf16.mxu0 0
        %1239 = vmatpush1.bf16.msra.mxu0 0
        %1240 = vmatprep.subr.bf16.mxu0 0
        %1241 = vmatpush1.bf16.msra.mxu0 0
        %1242 = vmatprep.subr.bf16.mxu0 0
        %1243 = vmatpush1.bf16.msra.mxu0 0
        %1244 = vmatprep.subr.bf16.mxu0 0
        %1245 = vmatpush1.bf16.msra.mxu0 0
        %1246 = vmatprep.mubr.bf16.mxu0 0
        %1247 = vmatmul.mubr.bf16.gmra.mrb[0].mxu0 %v1209
        %v1248 = vpop.f32.mrb[0].mxu0
        %v1249 = vadd.f32 %v1181, %v1248
        %v1250 = vpop.f32.mrb[0].mxu0
        %v1251 = vpop.f32.mrb[0].mxu0
        %v1252 = vadd.f32 %v1186, %v1251
        %v1253 = vpop.f32.mrb[0].mxu0
        %1254 = vmatprep.mubr.bf16.mxu0 0
        %1255 = vmatmul.mubr.bf16.gmra.mrb[0].mxu0 %v1212
        %v1256 = vpop.f32.mrb[0].mxu0
        %v1257 = vadd.f32 %v1191, %v1256
        %v1258 = vpop.f32.mrb[0].mxu0
        %v1259 = vpop.f32.mrb[0].mxu0
        %v1260 = vadd.f32 %v1196, %v1259
        %v1261 = vpop.f32.mrb[0].mxu0
        %1262 = vdwg.mxu0
        %v1263 = vsub.f32 0.0, %v1249
        %v1264 = vsub.f32 0.0, %v1252
        %v1265 = vsub.f32 0.0, %v1257
        %v1266 = vsub.f32 0.0, %v1260
        %v1267 = vmul.f32 %v1263, 1.442695
        %v1268 = vpow.pop %v1267
        %v1269 = vmul.f32 %v1264, 1.442695
        %v1270 = vpow.pop %v1269
        %v1271 = vmul.f32 %v1265, 1.442695
        %v1272 = vpow.pop %v1271
        %v1273 = vmul.f32 %v1266, 1.442695
        %v1274 = vpow.pop %v1273
        %v1275 = vadd.f32 %v1268, 1.0
        %v1276 = vadd.f32 %v1270, 1.0
        %v1277 = vadd.f32 %v1272, 1.0
        %v1278 = vadd.f32 %v1274, 1.0
        %v1279 = vrcp.pop %v1275
        %v1280 = vrcp.pop %v1276
        %v1281 = vrcp.pop %v1277
        %v1282 = vrcp.pop %v1278
        %v1283 = vld [vmem:[%s592] sm:$0xff]
        %v1284 = vld [vmem:[%s592 + $0x8] sm:$0xff]
        %v1285 = vld [vmem:[%s592 + $0x10] sm:$0xff]
        %v1286 = vld [vmem:[%s592 + $0x18] sm:$0xff]
        %v1287 = vmul.f32 %v1283, %v1279
        %v1288 = vmul.f32 %v1284, %v1280
        %v1289 = vmul.f32 %v1285, %v1281
        %v1290 = vmul.f32 %v1286, %v1282
        %1291 = vst [vmem:[%s641] sm:$0xff] %v1287
        %1292 = vst [vmem:[%s641 + $0x8] sm:$0xff] %v1288
        %1293 = vst [vmem:[%s641 + $0x10] sm:$0xff] %v1289
        %1294 = vst [vmem:[%s641 + $0x18] sm:$0xff] %v1290
        %s1295 = sand.u32 %s399, 1
        %s1296 = sand.u32 %s399, 1
        %s1297 = smul.addr %s1296, 32
        %s1298 = scalar_lea.vmem [#allocation4], %s1297
        // Predicated region
        $region161: #{camera_aware_forward.5} parent=151 // pred_check
          %p1299 = pneg %p409
        $region162: #{camera_aware_forward.5} parent=151 // pred_check_branch
          %1301 = sbr.rel (%p1299) target = $region164
        $region163: #{camera_aware_forward.5} parent=151 // pred_region
          %s1302 = smul.addr %s31, 8
          %s1303 = sadd.s32 %s32, %s1302
          %s1304 = smul.addr %s1303, 8
          %s1305 = scalar_lea.vmem %s16, %s1304
          // Predicated region
          $region165: #{camera_aware_forward.5} parent=163 // pred_check
            _
          $region166: #{camera_aware_forward.5} parent=163 // pred_check_branch
            %1307 = sbr.rel (0) target = $region168
          $region167: #{camera_aware_forward.5} parent=163 // pred_region
            // Predicated region
            $region169: #{camera_aware_forward.5} parent=167 // pred_check
              _
            $region170: #{camera_aware_forward.5} parent=167 // pred_check_branch
              %1309 = sbr.rel (0) target = $region172
            $region171: #{camera_aware_forward.5} parent=167 // pred_region
              // Predicated region
              $region184: #{camera_aware_forward.5} parent=171 // pred_check
                _
              $region185: #{camera_aware_forward.5} parent=171 // pred_check_branch
                %1330 = sbr.rel (0) target = $region187
              $region186: #{camera_aware_forward.5} parent=171 // pred_region
                loop: start=0, step=1, limit=1
                $region188: #{camera_aware_forward.5} parent=186 // loop_pre_header
                  _
                $region189: #{camera_aware_forward.5} parent=186 // loop_header
                  %s1332 = sphi 0, %s1336
                  %p1333 = scmp.ge.s32.totalorder %s1332, 1
                  %s1337 = sphi %s1298, %s1298
                  %s1338 = sphi %s1305, %s1305
                $region190: #{camera_aware_forward.5} parent=186 // loop_header_branch
                  %1335 = sbr.rel (%p1333) target = $region194
                $region191: #{camera_aware_forward.5} parent=186 // loop_body
                  %v1339 = vld [vmem:[%s1337] sm:$0xff]
                  %1340 = vst [vmem:[%s1338] sm:$0xff] %v1339
                  %v1341 = vld [vmem:[%s1337 + $0x8] sm:$0xff]
                  %1342 = vst [vmem:[%s1338 + $0x10] sm:$0xff] %v1341
                  %v1343 = vld [vmem:[%s1337 + $0x10] sm:$0xff]
                  %1344 = vst [vmem:[%s1338 + $0x20] sm:$0xff] %v1343
                  %v1345 = vld [vmem:[%s1337 + $0x18] sm:$0xff]
                  %1346 = vst [vmem:[%s1338 + $0x30] sm:$0xff] %v1345
                $region192: #{camera_aware_forward.5} parent=186 // loop_footer
                  %s1336 = sadd.s32 1, %s1332
                $region193: #{camera_aware_forward.5} parent=186 // loop_footer_branch
                  %1331 = sbr.rel target = $region189
                $region194: #{camera_aware_forward.5} parent=186 // loop_exit
                  _
              $region187: #{camera_aware_forward.5} parent=171 // pred_fallthru
                _
              // Predicated region
              $region195: #{camera_aware_forward.5} parent=171 // pred_check
                _
              $region196: #{camera_aware_forward.5} parent=171 // pred_check_branch
                %1348 = sbr.rel target = $region198
              $region197: #{camera_aware_forward.5} parent=171 // pred_region
                _
              $region198: #{camera_aware_forward.5} parent=171 // pred_fallthru
                _
            $region172: #{camera_aware_forward.5} parent=167 // pred_fallthru
              _
            // Predicated region
            $region173: #{camera_aware_forward.5} parent=167 // pred_check
              _
            $region174: #{camera_aware_forward.5} parent=167 // pred_check_branch
              %1311 = sbr.rel target = $region176
            $region175: #{camera_aware_forward.5} parent=167 // pred_region
              loop: start=0, step=1, limit=1
              $region177: #{camera_aware_forward.5} parent=175 // loop_pre_header
                _
              $region178: #{camera_aware_forward.5} parent=175 // loop_header
                %s1314 = sphi 0, %s1318
                %p1315 = scmp.ge.s32.totalorder %s1314, 1
                %s1319 = sphi %s1298, %s1298
                %s1320 = sphi %s1305, %s1305
              $region179: #{camera_aware_forward.5} parent=175 // loop_header_branch
                %1317 = sbr.rel (%p1315) target = $region183
              $region180: #{camera_aware_forward.5} parent=175 // loop_body
                %v1321 = vld [vmem:[%s1319] sm:$0xff]
                %1322 = vst [vmem:[%s1320] sm:$0xff] %v1321
                %v1323 = vld [vmem:[%s1319 + $0x8] sm:$0xff]
                %1324 = vst [vmem:[%s1320 + $0x10] sm:$0xff] %v1323
                %v1325 = vld [vmem:[%s1319 + $0x10] sm:$0xff]
                %1326 = vst [vmem:[%s1320 + $0x20] sm:$0xff] %v1325
                %v1327 = vld [vmem:[%s1319 + $0x18] sm:$0xff]
                %1328 = vst [vmem:[%s1320 + $0x30] sm:$0xff] %v1327
              $region181: #{camera_aware_forward.5} parent=175 // loop_footer
                %s1318 = sadd.s32 1, %s1314
              $region182: #{camera_aware_forward.5} parent=175 // loop_footer_branch
                %1313 = sbr.rel target = $region178
              $region183: #{camera_aware_forward.5} parent=175 // loop_exit
                _
            $region176: #{camera_aware_forward.5} parent=167 // pred_fallthru
              _
          $region168: #{camera_aware_forward.5} parent=163 // pred_fallthru
            _
          %1349 = vnop
        $region164: #{camera_aware_forward.5} parent=151 // pred_fallthru
          _
      $region152: #{camera_aware_forward.5} parent=5 // pred_fallthru
        _
      %p1350 = scmp.le.s32.totalorder 2, %s22
      // Predicated region
      $region199: #{camera_aware_forward.5} parent=5 // pred_check
        %p1351 = pneg %p1350
      $region200: #{camera_aware_forward.5} parent=5 // pred_check_branch
        %1353 = sbr.rel (%p1351) target = $region202
      $region201: #{camera_aware_forward.5} parent=5 // pred_region
        %s1354 = ssub.s32 %s22, 2
        // Predicated region
        $region203: #{camera_aware_forward.5} parent=201 // pred_check
          %p1355 = pneg %p415
        $region204: #{camera_aware_forward.5} parent=201 // pred_check_branch
          %1357 = sbr.rel (%p1355) target = $region206
        $region205: #{camera_aware_forward.5} parent=201 // pred_region
          %s1358 = sand.u32 %s400, 1
          %s1359 = sand.u32 %s400, 1
          %s1360 = smul.addr %s1359, 32
          %s1361 = scalar_lea.vmem [#allocation4], %s1360
        $region206: #{camera_aware_forward.5} parent=201 // pred_fallthru
          _
      $region202: #{camera_aware_forward.5} parent=5 // pred_fallthru
        _
    $region6: #{camera_aware_forward.5} parent=1 // loop_footer
      %s26 = sadd.s32 1, %s22
    $region7: #{camera_aware_forward.5} parent=1 // loop_footer_branch
      %21 = sbr.rel target = $region3
    $region8: #{camera_aware_forward.5} parent=1 // loop_exit
      _

</llo_original>
